<compile_context>
chip_gen: v7x
topology: tpu7x:2x2x1
jax: 0.10.0
libtpu: 0.0.40
codegen_flags: <defaults>
</compile_context>

<pallas_src>
import functools

import jax
import jax.numpy as jnp
from jax.experimental import pallas as pl
from jax.experimental.pallas import tpu as pltpu


# ----------------------------------------------------------------------------
# Kernel helpers
# ----------------------------------------------------------------------------
def _layernorm(x, g, b, eps):
    # x: (M, C) f32, g/b: (1, C) f32
    mean = jnp.mean(x, axis=-1, keepdims=True)
    var = jnp.mean((x - mean) * (x - mean), axis=-1, keepdims=True)
    return (x - mean) * jax.lax.rsqrt(var + eps) * g + b


# ----------------------------------------------------------------------------
# Embed kernel: patch projection + cls token + pos embed, per batch element.
# Output is a sublane-padded (T_pad, dim) token slab (rows >= T_real are zero).
# ----------------------------------------------------------------------------
def _embed_kernel(p_ref, w_ref, b_ref, cls_ref, pos_ref, o_ref, *, G, T_pad):
    patches = p_ref[0].astype(jnp.bfloat16)                      # (G, Cpp)
    emb = jnp.dot(patches, w_ref[...],
                  preferred_element_type=jnp.float32)            # (G, dim) f32
    emb = emb + b_ref[...] + pos_ref[...]
    dim = o_ref.shape[-1]
    o_ref[0:1, :] = cls_ref[...]                                 # cls + cls_pos
    o_ref[1:G + 1, :] = emb
    if T_pad > G + 1:
        o_ref[G + 1:T_pad, :] = jnp.zeros((T_pad - G - 1, dim), o_ref.dtype)


# ----------------------------------------------------------------------------
# Whole-stack kernel: grid=(depth,).  x stays in VMEM scratch; per-block
# weights are streamed in via the BlockSpec depth axis.  The final LayerNorm
# is applied and written out on the last grid step.
# ----------------------------------------------------------------------------
def _vit_stack_kernel(x0_ref,
                      ln1g_ref, ln1b_ref, qkvw_ref, qkvb_ref,
                      projw_ref, projb_ref,
                      ln2g_ref, ln2b_ref,
                      fc1w_ref, fc1b_ref, fc2w_ref, fc2b_ref,
                      ng_ref, nb_ref,
                      out_ref,
                      x_sc, qkv_sc, att_sc,
                      *, B, T_pad, T_real, dim, heads, eps):
    d = pl.program_id(0)

    @pl.when(d == 0)
    def _():
        x_sc[...] = x0_ref[...]

    x = x_sc[...]                                                # (B*T_pad, dim) f32

    # ----- attention half: fused LN1 + QKV + per-head softmax + proj -----
    h = _layernorm(x, ln1g_ref[0], ln1b_ref[0], eps)
    qkv_sc[...] = jnp.dot(h.astype(jnp.bfloat16), qkvw_ref[0],
                          preferred_element_type=jnp.float32) + qkvb_ref[0]

    dh = dim // heads
    col = jax.lax.broadcasted_iota(jnp.int32, (1, T_pad), 1)
    key_bias = jnp.where(col < T_real, 0.0, -1e30).astype(jnp.float32)  # (1, T_pad)

    for b in range(B):                          # static, unrolled
        r0, r1 = b * T_pad, (b + 1) * T_pad
        for hh in range(heads):                 # static, unrolled
            c0 = hh * dh
            q = qkv_sc[r0:r1, c0:c0 + dh].astype(jnp.bfloat16)
            k = qkv_sc[r0:r1, dim + c0:dim + c0 + dh].astype(jnp.bfloat16)
            v = qkv_sc[r0:r1, 2 * dim + c0:2 * dim + c0 + dh].astype(jnp.bfloat16)
            # q @ k^T without materializing a transpose; softmax scale is
            # already folded into the Q columns of qkv_w / qkv_b.
            s = jax.lax.dot_general(q, k, (((1,), (1,)), ((), ())),
                                    preferred_element_type=jnp.float32)
            s = s + key_bias                    # mask padded key columns
            s = s - jnp.max(s, axis=-1, keepdims=True)
            pexp = jnp.exp(s)
            pexp = pexp * pl.reciprocal(jnp.sum(pexp, axis=-1, keepdims=True),
                                        approx=True)
            att_sc[r0:r1, c0:c0 + dh] = jnp.dot(
                pexp.astype(jnp.bfloat16), v, preferred_element_type=jnp.float32)

    proj = jnp.dot(att_sc[...].astype(jnp.bfloat16), projw_ref[0],
                   preferred_element_type=jnp.float32) + projb_ref[0]
    x = x + proj                                # residual (in-kernel)

    # ----- MLP half: fused LN2 + fc1/gelu + fc2 -----
    h2 = _layernorm(x, ln2g_ref[0], ln2b_ref[0], eps)
    m = jnp.dot(h2.astype(jnp.bfloat16), fc1w_ref[0],
                preferred_element_type=jnp.float32) + fc1b_ref[0]
    # TODO(synk): torch nn.GELU() is the exact erf form; tanh approximation
    # (EUP-friendly) used here -> tiny numerical difference.
    m = jax.nn.gelu(m, approximate=True)
    m = jnp.dot(m.astype(jnp.bfloat16), fc2w_ref[0],
                preferred_element_type=jnp.float32) + fc2b_ref[0]
    x = x + m                                   # residual (in-kernel)

    x_sc[...] = x

    @pl.when(d == pl.num_programs(0) - 1)
    def _():
        out_ref[...] = _layernorm(x, ng_ref[...], nb_ref[...], eps).astype(out_ref.dtype)


# ----------------------------------------------------------------------------
# ViT backbone (forward_rgb_features) built from the two Pallas kernels
# ----------------------------------------------------------------------------
class ViTConfig:
    img_size = 32
    patch = 8
    in_chans = 3
    dim = 128          # stand-in for 768
    depth = 12
    heads = 4          # stand-in for 12 (head_dim = 32)
    mlp_ratio = 4


def init_params(cfg, key):
    D = cfg.dim
    hid = cfg.dim * cfg.mlp_ratio
    depth = cfg.depth
    dh = D // cfg.heads
    scale = dh ** -0.5
    cpp = cfg.in_chans * cfg.patch * cfg.patch
    G = (cfg.img_size // cfg.patch) ** 2
    T = G + 1
    s = 0.02

    keys = jax.random.split(key, 4 + depth)
    p = {}
    p["patch_w"] = (s * jax.random.normal(keys[0], (cpp, D), jnp.float32)).astype(jnp.bfloat16)
    p["patch_b"] = jnp.zeros((1, D), jnp.float32)
    cls_token = s * jax.random.normal(keys[1], (1, D), jnp.float32)
    pos_embed = s * jax.random.normal(keys[2], (T, D), jnp.float32)
    p["cls_row"] = cls_token + pos_embed[:1]          # cls token + its pos embed
    p["pos_patch"] = pos_embed[1:]                    # (G, D)
    p["norm_g"] = jnp.ones((1, D), jnp.float32)
    p["norm_b"] = jnp.zeros((1, D), jnp.float32)

    ln1_g, ln1_b, qkv_w, qkv_b = [], [], [], []
    proj_w, proj_b, ln2_g, ln2_b = [], [], [], []
    fc1_w, fc1_b, fc2_w, fc2_b = [], [], [], []
    for i in range(depth):
        kk = jax.random.split(keys[4 + i], 4)
        w_qkv = s * jax.random.normal(kk[0], (D, 3 * D), jnp.float32)
        b_qkv = jnp.zeros((3 * D,), jnp.float32)
        # Fold the attention softmax scale (head_dim**-0.5) into Q projection.
        w_qkv = w_qkv.at[:, :D].multiply(scale)
        b_qkv = b_qkv.at[:D].multiply(scale)
        ln1_g.append(jnp.ones((1, D), jnp.float32))
        ln1_b.append(jnp.zeros((1, D), jnp.float32))
        qkv_w.append(w_qkv.astype(jnp.bfloat16))
        qkv_b.append(b_qkv.reshape(1, 3 * D))
        proj_w.append((s * jax.random.normal(kk[1], (D, D), jnp.float32)).astype(jnp.bfloat16))
        proj_b.append(jnp.zeros((1, D), jnp.float32))
        ln2_g.append(jnp.ones((1, D), jnp.float32))
        ln2_b.append(jnp.zeros((1, D), jnp.float32))
        fc1_w.append((s * jax.random.normal(kk[2], (D, hid), jnp.float32)).astype(jnp.bfloat16))
        fc1_b.append(jnp.zeros((1, hid), jnp.float32))
        fc2_w.append((s * jax.random.normal(kk[3], (hid, D), jnp.float32)).astype(jnp.bfloat16))
        fc2_b.append(jnp.zeros((1, D), jnp.float32))

    p["ln1_g"] = jnp.stack(ln1_g); p["ln1_b"] = jnp.stack(ln1_b)
    p["qkv_w"] = jnp.stack(qkv_w); p["qkv_b"] = jnp.stack(qkv_b)
    p["proj_w"] = jnp.stack(proj_w); p["proj_b"] = jnp.stack(proj_b)
    p["ln2_g"] = jnp.stack(ln2_g); p["ln2_b"] = jnp.stack(ln2_b)
    p["fc1_w"] = jnp.stack(fc1_w); p["fc1_b"] = jnp.stack(fc1_b)
    p["fc2_w"] = jnp.stack(fc2_w); p["fc2_b"] = jnp.stack(fc2_b)
    return p


def forward_rgb_features(params, rgb, cfg):
    """rgb: NCHW (B, 3, H, W) -> (B, dim, H/p, W/p)  [analog of (-1,768,28,28)]"""
    B, C, H, W = rgb.shape
    ps = cfg.patch
    gh, gw = H // ps, W // ps
    G = gh * gw
    T_real = G + 1
    T_pad = ((T_real + 7) // 8) * 8            # pad tokens to 8-sublane multiple
    dim = cfg.dim
    hid = cfg.dim * cfg.mlp_ratio
    cpp = C * ps * ps

    # patch extraction (glue): (B, C, gh, p, gw, p) -> (B, G, C*p*p)
    patches = rgb.reshape(B, C, gh, ps, gw, ps).transpose(0, 2, 4, 1, 3, 5)
    patches = patches.reshape(B, G, cpp)

    # ---- kernel 1: patch embed + cls token + pos embed (per-batch grid) ----
    x0 = pl.pallas_call(
        functools.partial(_embed_kernel, G=G, T_pad=T_pad),
        out_shape=jax.ShapeDtypeStruct((B * T_pad, dim), jnp.float32),
        grid=(B,),
        in_specs=[
            pl.BlockSpec((1, G, cpp), lambda b: (b, 0, 0)),
            pl.BlockSpec((cpp, dim), lambda b: (0, 0)),
            pl.BlockSpec((1, dim), lambda b: (0, 0)),
            pl.BlockSpec((1, dim), lambda b: (0, 0)),
            pl.BlockSpec((G, dim), lambda b: (0, 0)),
        ],
        out_specs=pl.BlockSpec((T_pad, dim), lambda b: (b, 0)),
        compiler_params=pltpu.CompilerParams(dimension_semantics=("parallel",)),
    )(patches, params["patch_w"], params["patch_b"],
      params["cls_row"], params["pos_patch"])

    # ---- kernel 2: whole depth-12 transformer stack + final LayerNorm ----
    per_d = lambda d: (d, 0, 0)
    res2 = lambda d: (0, 0)
    out = pl.pallas_call(
        functools.partial(_vit_stack_kernel, B=B, T_pad=T_pad, T_real=T_real,
                          dim=dim, heads=cfg.heads, eps=1e-6),
        out_shape=jax.ShapeDtypeStruct((B * T_pad, dim), jnp.float32),
        grid_spec=pltpu.PrefetchScalarGridSpec(
            num_scalar_prefetch=0,
            grid=(cfg.depth,),
            in_specs=[
                pl.BlockSpec((B * T_pad, dim), res2),        # x0 (resident)
                pl.BlockSpec((1, 1, dim), per_d),            # ln1_g
                pl.BlockSpec((1, 1, dim), per_d),            # ln1_b
                pl.BlockSpec((1, dim, 3 * dim), per_d),      # qkv_w (bf16)
                pl.BlockSpec((1, 1, 3 * dim), per_d),        # qkv_b
                pl.BlockSpec((1, dim, dim), per_d),          # proj_w (bf16)
                pl.BlockSpec((1, 1, dim), per_d),            # proj_b
                pl.BlockSpec((1, 1, dim), per_d),            # ln2_g
                pl.BlockSpec((1, 1, dim), per_d),            # ln2_b
                pl.BlockSpec((1, dim, hid), per_d),          # fc1_w (bf16)
                pl.BlockSpec((1, 1, hid), per_d),            # fc1_b
                pl.BlockSpec((1, hid, dim), per_d),          # fc2_w (bf16)
                pl.BlockSpec((1, 1, dim), per_d),            # fc2_b
                pl.BlockSpec((1, dim), res2),                # norm_g
                pl.BlockSpec((1, dim), res2),                # norm_b
            ],
            out_specs=pl.BlockSpec((B * T_pad, dim), res2),
            scratch_shapes=[
                pltpu.VMEM((B * T_pad, dim), jnp.float32),      # x (resident)
                pltpu.VMEM((B * T_pad, 3 * dim), jnp.float32),  # qkv slab
                pltpu.VMEM((B * T_pad, dim), jnp.float32),      # attention out
            ]),
        compiler_params=pltpu.CompilerParams(dimension_semantics=("arbitrary",)),
    )(x0,
      params["ln1_g"], params["ln1_b"], params["qkv_w"], params["qkv_b"],
      params["proj_w"], params["proj_b"],
      params["ln2_g"], params["ln2_b"],
      params["fc1_w"], params["fc1_b"], params["fc2_w"], params["fc2_b"],
      params["norm_g"], params["norm_b"])

    # drop cls token + padded rows, permute, reshape to feature map (glue)
    x = out.reshape(B, T_pad, dim)[:, 1:T_real]          # (B, G, dim)
    feat = x.transpose(0, 2, 1).reshape(B, dim, gh, gw)
    return feat


# ----------------------------------------------------------------------------
if __name__ == "__main__":
    cfg = ViTConfig()
    key = jax.random.PRNGKey(0)
    pkey, xkey = jax.random.split(key)
    params = init_params(cfg, pkey)
    rgb = jax.random.normal(xkey, (2, cfg.in_chans, cfg.img_size, cfg.img_size),
                            jnp.float32)

    fwd = jax.jit(functools.partial(forward_rgb_features, cfg=cfg))
    feat = fwd(params, rgb)
    feat = jax.block_until_ready(feat)

    expected = (2, cfg.dim, cfg.img_size // cfg.patch, cfg.img_size // cfg.patch)
    assert feat.shape == expected, (feat.shape, expected)
    assert bool(jnp.all(jnp.isfinite(feat)))
    print("KERNEL_OK")
</pallas_src>

<mosaic_0001>
module attributes {stable_mosaic.version = 11 : i64} {
  func.func @_embed_kernel(%arg0: i32, %arg1: memref<1x16x192xf32, #tpu.memory_space<vmem>>, %arg2: memref<192x128xbf16, #tpu.memory_space<vmem>>, %arg3: memref<1x128xf32, #tpu.memory_space<vmem>>, %arg4: memref<1x128xf32, #tpu.memory_space<vmem>>, %arg5: memref<16x128xf32, #tpu.memory_space<vmem>>, %arg6: memref<24x128xf32, #tpu.memory_space<vmem>>) attributes {dimension_semantics = [#tpu.dimension_semantics<parallel>], iteration_bounds = array<i64: 2>, scalar_prefetch = 0 : i64, scratch_operands = 0 : i64, tpu.core_type = #tpu.core_type<tc>, window_params = [{transform_indices = @transform_0, window_bounds = array<i64: 1, 16, 192>}, {pipeline_mode = #tpu.pipeline_mode<synchronous>, transform_indices = @transform_1, window_bounds = array<i64: 192, 128>}, {pipeline_mode = #tpu.pipeline_mode<synchronous>, transform_indices = @transform_2, window_bounds = array<i64: 1, 128>}, {pipeline_mode = #tpu.pipeline_mode<synchronous>, transform_indices = @transform_3, window_bounds = array<i64: 1, 128>}, {pipeline_mode = #tpu.pipeline_mode<synchronous>, transform_indices = @transform_4, window_bounds = array<i64: 16, 128>}, {transform_indices = @transform_5, window_bounds = array<i64: 24, 128>}]} {
    %c0 = arith.constant 0 : index
    %c0_0 = arith.constant 0 : index
    %c0_1 = arith.constant 0 : index
    %0 = vector.load %arg1[%c0, %c0_0, %c0_1] : memref<1x16x192xf32, #tpu.memory_space<vmem>>, vector<1x16x192xf32>
    %1 = vector.shape_cast %0 : vector<1x16x192xf32> to vector<16x192xf32>
    %2 = arith.truncf %1 : vector<16x192xf32> to vector<16x192xbf16>
    %c0_2 = arith.constant 0 : index
    %c0_3 = arith.constant 0 : index
    %3 = vector.load %arg2[%c0_2, %c0_3] : memref<192x128xbf16, #tpu.memory_space<vmem>>, vector<192x128xbf16>
    %cst = arith.constant dense<0.000000e+00> : vector<16x128xf32>
    %4 = tpu.matmul %2, %3, %cst {dimension_numbers = #tpu.dot_dimension_numbers<[1], [0], [0], [1], [0, 0, 1, 1], [], []>} : vector<16x192xbf16>, vector<192x128xbf16>, vector<16x128xf32> -> vector<16x128xf32>
    %c0_4 = arith.constant 0 : index
    %c0_5 = arith.constant 0 : index
    %5 = vector.load %arg3[%c0_4, %c0_5] : memref<1x128xf32, #tpu.memory_space<vmem>>, vector<1x128xf32>
    %6 = vector.broadcast %5 : vector<1x128xf32> to vector<16x128xf32>
    %7 = arith.addf %4, %6 : vector<16x128xf32>
    %c0_6 = arith.constant 0 : index
    %c0_7 = arith.constant 0 : index
    %8 = vector.load %arg5[%c0_6, %c0_7] : memref<16x128xf32, #tpu.memory_space<vmem>>, vector<16x128xf32>
    %9 = arith.addf %7, %8 : vector<16x128xf32>
    %c0_8 = arith.constant 0 : index
    %c0_9 = arith.constant 0 : index
    %10 = vector.load %arg4[%c0_8, %c0_9] : memref<1x128xf32, #tpu.memory_space<vmem>>, vector<1x128xf32>
    %c0_10 = arith.constant 0 : index
    %c0_11 = arith.constant 0 : index
    %11 = vector.load %arg6[%c0_10, %c0_11] : memref<24x128xf32, #tpu.memory_space<vmem>>, vector<1x128xf32>
    tpu.vector_store %arg6[%c0_10, %c0_11], %10 {strides = array<i32>} : memref<24x128xf32, #tpu.memory_space<vmem>>, vector<1x128xf32>,
    %c1 = arith.constant 1 : index
    %c0_12 = arith.constant 0 : index
    %12 = vector.load %arg6[%c1, %c0_12] : memref<24x128xf32, #tpu.memory_space<vmem>>, vector<16x128xf32>
    tpu.vector_store %arg6[%c1, %c0_12], %9 {strides = array<i32>} : memref<24x128xf32, #tpu.memory_space<vmem>>, vector<16x128xf32>,
    %cst_13 = arith.constant 0.000000e+00 : f32
    %13 = vector.broadcast %cst_13 : f32 to vector<7x128xf32>
    %c17 = arith.constant 17 : index
    %c0_14 = arith.constant 0 : index
    %14 = vector.load %arg6[%c17, %c0_14] : memref<24x128xf32, #tpu.memory_space<vmem>>, vector<7x128xf32>
    tpu.vector_store %arg6[%c17, %c0_14], %13 {strides = array<i32>} : memref<24x128xf32, #tpu.memory_space<vmem>>, vector<7x128xf32>,
    return
  }
  func.func @transform_0(%arg0: i32) -> (i32, i32, i32) {
    %c0_i32 = arith.constant 0 : i32
    %c0_i32_0 = arith.constant 0 : i32
    %c0_i32_1 = arith.constant 0 : i32
    return %arg0, %c0_i32, %c0_i32_0 : i32, i32, i32
  }
  func.func @transform_1(%arg0: i32) -> (i32, i32) {
    %c0_i32 = arith.constant 0 : i32
    %c0_i32_0 = arith.constant 0 : i32
    %c0_i32_1 = arith.constant 0 : i32
    return %c0_i32, %c0_i32_0 : i32, i32
  }
  func.func @transform_2(%arg0: i32) -> (i32, i32) {
    %c0_i32 = arith.constant 0 : i32
    %c0_i32_0 = arith.constant 0 : i32
    %c0_i32_1 = arith.constant 0 : i32
    return %c0_i32, %c0_i32_0 : i32, i32
  }
  func.func @transform_3(%arg0: i32) -> (i32, i32) {
    %c0_i32 = arith.constant 0 : i32
    %c0_i32_0 = arith.constant 0 : i32
    %c0_i32_1 = arith.constant 0 : i32
    return %c0_i32, %c0_i32_0 : i32, i32
  }
  func.func @transform_4(%arg0: i32) -> (i32, i32) {
    %c0_i32 = arith.constant 0 : i32
    %c0_i32_0 = arith.constant 0 : i32
    %c0_i32_1 = arith.constant 0 : i32
    return %c0_i32, %c0_i32_0 : i32, i32
  }
  func.func @transform_5(%arg0: i32) -> (i32, i32) {
    %c0_i32 = arith.constant 0 : i32
    %c0_i32_0 = arith.constant 0 : i32
    return %arg0, %c0_i32 : i32, i32
  }
}

module attributes {stable_mosaic.version = 11 : i64} {
  func.func @_vit_stack_kernel(%arg0: i32, %arg1: memref<48x128xf32, #tpu.memory_space<vmem>>, %arg2: memref<1x1x128xf32, #tpu.memory_space<vmem>>, %arg3: memref<1x1x128xf32, #tpu.memory_space<vmem>>, %arg4: memref<1x128x384xbf16, #tpu.memory_space<vmem>>, %arg5: memref<1x1x384xf32, #tpu.memory_space<vmem>>, %arg6: memref<1x128x128xbf16, #tpu.memory_space<vmem>>, %arg7: memref<1x1x128xf32, #tpu.memory_space<vmem>>, %arg8: memref<1x1x128xf32, #tpu.memory_space<vmem>>, %arg9: memref<1x1x128xf32, #tpu.memory_space<vmem>>, %arg10: memref<1x128x512xbf16, #tpu.memory_space<vmem>>, %arg11: memref<1x1x512xf32, #tpu.memory_space<vmem>>, %arg12: memref<1x512x128xbf16, #tpu.memory_space<vmem>>, %arg13: memref<1x1x128xf32, #tpu.memory_space<vmem>>, %arg14: memref<1x128xf32, #tpu.memory_space<vmem>>, %arg15: memref<1x128xf32, #tpu.memory_space<vmem>>, %arg16: memref<48x128xf32, #tpu.memory_space<vmem>>, %arg17: memref<48x128xf32, #tpu.memory_space<vmem>>, %arg18: memref<48x384xf32, #tpu.memory_space<vmem>>, %arg19: memref<48x128xf32, #tpu.memory_space<vmem>>) attributes {dimension_semantics = [#tpu.dimension_semantics<arbitrary>], iteration_bounds = array<i64: 12>, scalar_prefetch = 0 : i64, scratch_operands = 3 : i64, tpu.core_type = #tpu.core_type<tc>, window_params = [{pipeline_mode = #tpu.pipeline_mode<synchronous>, transform_indices = @transform_0, window_bounds = array<i64: 48, 128>}, {transform_indices = @transform_1, window_bounds = array<i64: 1, 1, 128>}, {transform_indices = @transform_2, window_bounds = array<i64: 1, 1, 128>}, {transform_indices = @transform_3, window_bounds = array<i64: 1, 128, 384>}, {transform_indices = @transform_4, window_bounds = array<i64: 1, 1, 384>}, {transform_indices = @transform_5, window_bounds = array<i64: 1, 128, 128>}, {transform_indices = @transform_6, window_bounds = array<i64: 1, 1, 128>}, {transform_indices = @transform_7, window_bounds = array<i64: 1, 1, 128>}, {transform_indices = @transform_8, window_bounds = array<i64: 1, 1, 128>}, {transform_indices = @transform_9, window_bounds = array<i64: 1, 128, 512>}, {transform_indices = @transform_10, window_bounds = array<i64: 1, 1, 512>}, {transform_indices = @transform_11, window_bounds = array<i64: 1, 512, 128>}, {transform_indices = @transform_12, window_bounds = array<i64: 1, 1, 128>}, {pipeline_mode = #tpu.pipeline_mode<synchronous>, transform_indices = @transform_13, window_bounds = array<i64: 1, 128>}, {pipeline_mode = #tpu.pipeline_mode<synchronous>, transform_indices = @transform_14, window_bounds = array<i64: 1, 128>}, {pipeline_mode = #tpu.pipeline_mode<synchronous>, transform_indices = @transform_15, window_bounds = array<i64: 48, 128>}]} {
    %c0_i32 = arith.constant 0 : i32
    %0 = arith.cmpi eq, %arg0, %c0_i32 : i32
    %1 = arith.extui %0 : i1 to i32
    %c0_i32_0 = arith.constant 0 : i32
    %2 = arith.cmpi ne, %1, %c0_i32_0 : i32
    scf.if %2 {
      %c0_148 = arith.constant 0 : index
      %c0_149 = arith.constant 0 : index
      %295 = vector.load %arg1[%c0_148, %c0_149] : memref<48x128xf32, #tpu.memory_space<vmem>>, vector<48x128xf32>
      %c0_150 = arith.constant 0 : index
      %c0_151 = arith.constant 0 : index
      %296 = vector.load %arg17[%c0_150, %c0_151] : memref<48x128xf32, #tpu.memory_space<vmem>>, vector<48x128xf32>
      tpu.vector_store %arg17[%c0_150, %c0_151], %295 {strides = array<i32>} : memref<48x128xf32, #tpu.memory_space<vmem>>, vector<48x128xf32>,
    } else {
    }
    %c0 = arith.constant 0 : index
    %c0_1 = arith.constant 0 : index
    %3 = vector.load %arg17[%c0, %c0_1] : memref<48x128xf32, #tpu.memory_space<vmem>>, vector<48x128xf32>
    %c0_2 = arith.constant 0 : index
    %c0_3 = arith.constant 0 : index
    %c0_4 = arith.constant 0 : index
    %4 = vector.load %arg2[%c0_2, %c0_3, %c0_4] : memref<1x1x128xf32, #tpu.memory_space<vmem>>, vector<1x1x128xf32>
    %5 = vector.shape_cast %4 : vector<1x1x128xf32> to vector<1x128xf32>
    %c0_5 = arith.constant 0 : index
    %c0_6 = arith.constant 0 : index
    %c0_7 = arith.constant 0 : index
    %6 = vector.load %arg3[%c0_5, %c0_6, %c0_7] : memref<1x1x128xf32, #tpu.memory_space<vmem>>, vector<1x1x128xf32>
    %7 = vector.shape_cast %6 : vector<1x1x128xf32> to vector<1x128xf32>
    %cst = arith.constant dense<0.000000e+00> : vector<48xf32>
    %8 = vector.multi_reduction <add>, %3, %cst [1] : vector<48x128xf32> to vector<48xf32>
    %9 = vector.shape_cast %8 : vector<48xf32> to vector<48x1xf32>
    %cst_8 = arith.constant 1.280000e+02 : f32
    %10 = vector.broadcast %cst_8 : f32 to vector<48x1xf32>
    %11 = arith.divf %9, %10 : vector<48x1xf32>
    %12 = vector.broadcast %11 : vector<48x1xf32> to vector<48x128xf32>
    %13 = arith.subf %3, %12 : vector<48x128xf32>
    %14 = vector.broadcast %11 : vector<48x1xf32> to vector<48x128xf32>
    %15 = arith.subf %3, %14 : vector<48x128xf32>
    %16 = arith.mulf %13, %15 : vector<48x128xf32>
    %cst_9 = arith.constant dense<0.000000e+00> : vector<48xf32>
    %17 = vector.multi_reduction <add>, %16, %cst_9 [1] : vector<48x128xf32> to vector<48xf32>
    %18 = vector.shape_cast %17 : vector<48xf32> to vector<48x1xf32>
    %cst_10 = arith.constant 1.280000e+02 : f32
    %19 = vector.broadcast %cst_10 : f32 to vector<48x1xf32>
    %20 = arith.divf %18, %19 : vector<48x1xf32>
    %21 = vector.broadcast %11 : vector<48x1xf32> to vector<48x128xf32>
    %22 = arith.subf %3, %21 : vector<48x128xf32>
    %cst_11 = arith.constant 9.99999997E-7 : f32
    %23 = vector.broadcast %cst_11 : f32 to vector<48x1xf32>
    %24 = arith.addf %20, %23 : vector<48x1xf32>
    %25 = math.rsqrt %24 : vector<48x1xf32>
    %26 = vector.broadcast %25 : vector<48x1xf32> to vector<48x128xf32>
    %27 = arith.mulf %22, %26 : vector<48x128xf32>
    %28 = vector.broadcast %5 : vector<1x128xf32> to vector<48x128xf32>
    %29 = arith.mulf %27, %28 : vector<48x128xf32>
    %30 = vector.broadcast %7 : vector<1x128xf32> to vector<48x128xf32>
    %31 = arith.addf %29, %30 : vector<48x128xf32>
    %32 = arith.truncf %31 : vector<48x128xf32> to vector<48x128xbf16>
    %c0_12 = arith.constant 0 : index
    %c0_13 = arith.constant 0 : index
    %c0_14 = arith.constant 0 : index
    %33 = vector.load %arg4[%c0_12, %c0_13, %c0_14] : memref<1x128x384xbf16, #tpu.memory_space<vmem>>, vector<1x128x384xbf16>
    %34 = vector.shape_cast %33 : vector<1x128x384xbf16> to vector<128x384xbf16>
    %cst_15 = arith.constant dense<0.000000e+00> : vector<48x384xf32>
    %35 = tpu.matmul %32, %34, %cst_15 {dimension_numbers = #tpu.dot_dimension_numbers<[1], [0], [0], [1], [0, 0, 1, 1], [], []>} : vector<48x128xbf16>, vector<128x384xbf16>, vector<48x384xf32> -> vector<48x384xf32>
    %c0_16 = arith.constant 0 : index
    %c0_17 = arith.constant 0 : index
    %c0_18 = arith.constant 0 : index
    %36 = vector.load %arg5[%c0_16, %c0_17, %c0_18] : memref<1x1x384xf32, #tpu.memory_space<vmem>>, vector<1x1x384xf32>
    %37 = vector.shape_cast %36 : vector<1x1x384xf32> to vector<1x384xf32>
    %38 = vector.broadcast %37 : vector<1x384xf32> to vector<48x384xf32>
    %39 = arith.addf %35, %38 : vector<48x384xf32>
    %c0_19 = arith.constant 0 : index
    %c0_20 = arith.constant 0 : index
    %40 = vector.load %arg18[%c0_19, %c0_20] : memref<48x384xf32, #tpu.memory_space<vmem>>, vector<48x384xf32>
    tpu.vector_store %arg18[%c0_19, %c0_20], %39 {strides = array<i32>} : memref<48x384xf32, #tpu.memory_space<vmem>>, vector<48x384xf32>,
    %41 = tpu.iota {dimensions = array<i32: 1>} : vector<1x24xi32>
    %c17_i32 = arith.constant 17 : i32
    %42 = vector.broadcast %c17_i32 : i32 to vector<1x24xi32>
    %43 = arith.cmpi slt, %41, %42 : vector<1x24xi32>
    %cst_21 = arith.constant 0.000000e+00 : f32
    %cst_22 = arith.constant -1.000000e+30 : f32
    %44 = vector.broadcast %cst_21 : f32 to vector<1x24xf32>
    %45 = vector.broadcast %cst_22 : f32 to vector<1x24xf32>
    %46 = arith.select %43, %44, %45 : vector<1x24xi1>, vector<1x24xf32>
    %c0_23 = arith.constant 0 : index
    %c0_24 = arith.constant 0 : index
    %47 = vector.load %arg18[%c0_23, %c0_24] : memref<48x384xf32, #tpu.memory_space<vmem>>, vector<24x32xf32>
    %48 = arith.truncf %47 : vector<24x32xf32> to vector<24x32xbf16>
    %c0_25 = arith.constant 0 : index
    %c128 = arith.constant 128 : index
    %49 = vector.load %arg18[%c0_25, %c128] : memref<48x384xf32, #tpu.memory_space<vmem>>, vector<24x32xf32>
    %50 = arith.truncf %49 : vector<24x32xf32> to vector<24x32xbf16>
    %c0_26 = arith.constant 0 : index
    %c256 = arith.constant 256 : index
    %51 = vector.load %arg18[%c0_26, %c256] : memref<48x384xf32, #tpu.memory_space<vmem>>, vector<24x32xf32>
    %52 = arith.truncf %51 : vector<24x32xf32> to vector<24x32xbf16>
    %cst_27 = arith.constant dense<0.000000e+00> : vector<24x24xf32>
    %53 = tpu.matmul %48, %50, %cst_27 {dimension_numbers = #tpu.dot_dimension_numbers<[1], [1], [0], [0], [0, 0, 1, 0], [], []>} : vector<24x32xbf16>, vector<24x32xbf16>, vector<24x24xf32> -> vector<24x24xf32>
    %54 = vector.broadcast %46 : vector<1x24xf32> to vector<24x24xf32>
    %55 = arith.addf %53, %54 : vector<24x24xf32>
    %cst_28 = arith.constant dense<0xFF800000> : vector<24xf32>
    %56 = vector.multi_reduction <maximumf>, %55, %cst_28 [1] : vector<24x24xf32> to vector<24xf32>
    %57 = vector.shape_cast %56 : vector<24xf32> to vector<24x1xf32>
    %58 = vector.broadcast %57 : vector<24x1xf32> to vector<24x24xf32>
    %59 = arith.subf %55, %58 : vector<24x24xf32>
    %60 = math.exp %59 : vector<24x24xf32>
    %cst_29 = arith.constant dense<0.000000e+00> : vector<24xf32>
    %61 = vector.multi_reduction <add>, %60, %cst_29 [1] : vector<24x24xf32> to vector<24xf32>
    %62 = vector.shape_cast %61 : vector<24xf32> to vector<24x1xf32>
    %63 = tpu.reciprocal %62 {approx = true} : vector<24x1xf32> -> vector<24x1xf32>
    %64 = vector.broadcast %63 : vector<24x1xf32> to vector<24x24xf32>
    %65 = arith.mulf %60, %64 : vector<24x24xf32>
    %66 = arith.truncf %65 : vector<24x24xf32> to vector<24x24xbf16>
    %cst_30 = arith.constant dense<0.000000e+00> : vector<24x32xf32>
    %67 = tpu.matmul %66, %52, %cst_30 {dimension_numbers = #tpu.dot_dimension_numbers<[1], [0], [0], [1], [0, 0, 1, 1], [], []>} : vector<24x24xbf16>, vector<24x32xbf16>, vector<24x32xf32> -> vector<24x32xf32>
    %c0_31 = arith.constant 0 : index
    %c0_32 = arith.constant 0 : index
    %68 = vector.load %arg19[%c0_31, %c0_32] : memref<48x128xf32, #tpu.memory_space<vmem>>, vector<24x32xf32>
    tpu.vector_store %arg19[%c0_31, %c0_32], %67 {strides = array<i32>} : memref<48x128xf32, #tpu.memory_space<vmem>>, vector<24x32xf32>,
    %c0_33 = arith.constant 0 : index
    %c32 = arith.constant 32 : index
    %69 = vector.load %arg18[%c0_33, %c32] : memref<48x384xf32, #tpu.memory_space<vmem>>, vector<24x32xf32>
    %70 = arith.truncf %69 : vector<24x32xf32> to vector<24x32xbf16>
    %c0_34 = arith.constant 0 : index
    %c160 = arith.constant 160 : index
    %71 = vector.load %arg18[%c0_34, %c160] : memref<48x384xf32, #tpu.memory_space<vmem>>, vector<24x32xf32>
    %72 = arith.truncf %71 : vector<24x32xf32> to vector<24x32xbf16>
    %c0_35 = arith.constant 0 : index
    %c288 = arith.constant 288 : index
    %73 = vector.load %arg18[%c0_35, %c288] : memref<48x384xf32, #tpu.memory_space<vmem>>, vector<24x32xf32>
    %74 = arith.truncf %73 : vector<24x32xf32> to vector<24x32xbf16>
    %cst_36 = arith.constant dense<0.000000e+00> : vector<24x24xf32>
    %75 = tpu.matmul %70, %72, %cst_36 {dimension_numbers = #tpu.dot_dimension_numbers<[1], [1], [0], [0], [0, 0, 1, 0], [], []>} : vector<24x32xbf16>, vector<24x32xbf16>, vector<24x24xf32> -> vector<24x24xf32>
    %76 = vector.broadcast %46 : vector<1x24xf32> to vector<24x24xf32>
    %77 = arith.addf %75, %76 : vector<24x24xf32>
    %cst_37 = arith.constant dense<0xFF800000> : vector<24xf32>
    %78 = vector.multi_reduction <maximumf>, %77, %cst_37 [1] : vector<24x24xf32> to vector<24xf32>
    %79 = vector.shape_cast %78 : vector<24xf32> to vector<24x1xf32>
    %80 = vector.broadcast %79 : vector<24x1xf32> to vector<24x24xf32>
    %81 = arith.subf %77, %80 : vector<24x24xf32>
    %82 = math.exp %81 : vector<24x24xf32>
    %cst_38 = arith.constant dense<0.000000e+00> : vector<24xf32>
    %83 = vector.multi_reduction <add>, %82, %cst_38 [1] : vector<24x24xf32> to vector<24xf32>
    %84 = vector.shape_cast %83 : vector<24xf32> to vector<24x1xf32>
    %85 = tpu.reciprocal %84 {approx = true} : vector<24x1xf32> -> vector<24x1xf32>
    %86 = vector.broadcast %85 : vector<24x1xf32> to vector<24x24xf32>
    %87 = arith.mulf %82, %86 : vector<24x24xf32>
    %88 = arith.truncf %87 : vector<24x24xf32> to vector<24x24xbf16>
    %cst_39 = arith.constant dense<0.000000e+00> : vector<24x32xf32>
    %89 = tpu.matmul %88, %74, %cst_39 {dimension_numbers = #tpu.dot_dimension_numbers<[1], [0], [0], [1], [0, 0, 1, 1], [], []>} : vector<24x24xbf16>, vector<24x32xbf16>, vector<24x32xf32> -> vector<24x32xf32>
    %c0_40 = arith.constant 0 : index
    %c32_41 = arith.constant 32 : index
    %90 = vector.load %arg19[%c0_40, %c32_41] : memref<48x128xf32, #tpu.memory_space<vmem>>, vector<24x32xf32>
    tpu.vector_store %arg19[%c0_40, %c32_41], %89 {strides = array<i32>} : memref<48x128xf32, #tpu.memory_space<vmem>>, vector<24x32xf32>,
    %c0_42 = arith.constant 0 : index
    %c64 = arith.constant 64 : index
    %91 = vector.load %arg18[%c0_42, %c64] : memref<48x384xf32, #tpu.memory_space<vmem>>, vector<24x32xf32>
    %92 = arith.truncf %91 : vector<24x32xf32> to vector<24x32xbf16>
    %c0_43 = arith.constant 0 : index
    %c192 = arith.constant 192 : index
    %93 = vector.load %arg18[%c0_43, %c192] : memref<48x384xf32, #tpu.memory_space<vmem>>, vector<24x32xf32>
    %94 = arith.truncf %93 : vector<24x32xf32> to vector<24x32xbf16>
    %c0_44 = arith.constant 0 : index
    %c320 = arith.constant 320 : index
    %95 = vector.load %arg18[%c0_44, %c320] : memref<48x384xf32, #tpu.memory_space<vmem>>, vector<24x32xf32>
    %96 = arith.truncf %95 : vector<24x32xf32> to vector<24x32xbf16>
    %cst_45 = arith.constant dense<0.000000e+00> : vector<24x24xf32>
    %97 = tpu.matmul %92, %94, %cst_45 {dimension_numbers = #tpu.dot_dimension_numbers<[1], [1], [0], [0], [0, 0, 1, 0], [], []>} : vector<24x32xbf16>, vector<24x32xbf16>, vector<24x24xf32> -> vector<24x24xf32>
    %98 = vector.broadcast %46 : vector<1x24xf32> to vector<24x24xf32>
    %99 = arith.addf %97, %98 : vector<24x24xf32>
    %cst_46 = arith.constant dense<0xFF800000> : vector<24xf32>
    %100 = vector.multi_reduction <maximumf>, %99, %cst_46 [1] : vector<24x24xf32> to vector<24xf32>
    %101 = vector.shape_cast %100 : vector<24xf32> to vector<24x1xf32>
    %102 = vector.broadcast %101 : vector<24x1xf32> to vector<24x24xf32>
    %103 = arith.subf %99, %102 : vector<24x24xf32>
    %104 = math.exp %103 : vector<24x24xf32>
    %cst_47 = arith.constant dense<0.000000e+00> : vector<24xf32>
    %105 = vector.multi_reduction <add>, %104, %cst_47 [1] : vector<24x24xf32> to vector<24xf32>
    %106 = vector.shape_cast %105 : vector<24xf32> to vector<24x1xf32>
    %107 = tpu.reciprocal %106 {approx = true} : vector<24x1xf32> -> vector<24x1xf32>
    %108 = vector.broadcast %107 : vector<24x1xf32> to vector<24x24xf32>
    %109 = arith.mulf %104, %108 : vector<24x24xf32>
    %110 = arith.truncf %109 : vector<24x24xf32> to vector<24x24xbf16>
    %cst_48 = arith.constant dense<0.000000e+00> : vector<24x32xf32>
    %111 = tpu.matmul %110, %96, %cst_48 {dimension_numbers = #tpu.dot_dimension_numbers<[1], [0], [0], [1], [0, 0, 1, 1], [], []>} : vector<24x24xbf16>, vector<24x32xbf16>, vector<24x32xf32> -> vector<24x32xf32>
    %c0_49 = arith.constant 0 : index
    %c64_50 = arith.constant 64 : index
    %112 = vector.load %arg19[%c0_49, %c64_50] : memref<48x128xf32, #tpu.memory_space<vmem>>, vector<24x32xf32>
    tpu.vector_store %arg19[%c0_49, %c64_50], %111 {strides = array<i32>} : memref<48x128xf32, #tpu.memory_space<vmem>>, vector<24x32xf32>,
    %c0_51 = arith.constant 0 : index
    %c96 = arith.constant 96 : index
    %113 = vector.load %arg18[%c0_51, %c96] : memref<48x384xf32, #tpu.memory_space<vmem>>, vector<24x32xf32>
    %114 = arith.truncf %113 : vector<24x32xf32> to vector<24x32xbf16>
    %c0_52 = arith.constant 0 : index
    %c224 = arith.constant 224 : index
    %115 = vector.load %arg18[%c0_52, %c224] : memref<48x384xf32, #tpu.memory_space<vmem>>, vector<24x32xf32>
    %116 = arith.truncf %115 : vector<24x32xf32> to vector<24x32xbf16>
    %c0_53 = arith.constant 0 : index
    %c352 = arith.constant 352 : index
    %117 = vector.load %arg18[%c0_53, %c352] : memref<48x384xf32, #tpu.memory_space<vmem>>, vector<24x32xf32>
    %118 = arith.truncf %117 : vector<24x32xf32> to vector<24x32xbf16>
    %cst_54 = arith.constant dense<0.000000e+00> : vector<24x24xf32>
    %119 = tpu.matmul %114, %116, %cst_54 {dimension_numbers = #tpu.dot_dimension_numbers<[1], [1], [0], [0], [0, 0, 1, 0], [], []>} : vector<24x32xbf16>, vector<24x32xbf16>, vector<24x24xf32> -> vector<24x24xf32>
    %120 = vector.broadcast %46 : vector<1x24xf32> to vector<24x24xf32>
    %121 = arith.addf %119, %120 : vector<24x24xf32>
    %cst_55 = arith.constant dense<0xFF800000> : vector<24xf32>
    %122 = vector.multi_reduction <maximumf>, %121, %cst_55 [1] : vector<24x24xf32> to vector<24xf32>
    %123 = vector.shape_cast %122 : vector<24xf32> to vector<24x1xf32>
    %124 = vector.broadcast %123 : vector<24x1xf32> to vector<24x24xf32>
    %125 = arith.subf %121, %124 : vector<24x24xf32>
    %126 = math.exp %125 : vector<24x24xf32>
    %cst_56 = arith.constant dense<0.000000e+00> : vector<24xf32>
    %127 = vector.multi_reduction <add>, %126, %cst_56 [1] : vector<24x24xf32> to vector<24xf32>
    %128 = vector.shape_cast %127 : vector<24xf32> to vector<24x1xf32>
    %129 = tpu.reciprocal %128 {approx = true} : vector<24x1xf32> -> vector<24x1xf32>
    %130 = vector.broadcast %129 : vector<24x1xf32> to vector<24x24xf32>
    %131 = arith.mulf %126, %130 : vector<24x24xf32>
    %132 = arith.truncf %131 : vector<24x24xf32> to vector<24x24xbf16>
    %cst_57 = arith.constant dense<0.000000e+00> : vector<24x32xf32>
    %133 = tpu.matmul %132, %118, %cst_57 {dimension_numbers = #tpu.dot_dimension_numbers<[1], [0], [0], [1], [0, 0, 1, 1], [], []>} : vector<24x24xbf16>, vector<24x32xbf16>, vector<24x32xf32> -> vector<24x32xf32>
    %c0_58 = arith.constant 0 : index
    %c96_59 = arith.constant 96 : index
    %134 = vector.load %arg19[%c0_58, %c96_59] : memref<48x128xf32, #tpu.memory_space<vmem>>, vector<24x32xf32>
    tpu.vector_store %arg19[%c0_58, %c96_59], %133 {strides = array<i32>} : memref<48x128xf32, #tpu.memory_space<vmem>>, vector<24x32xf32>,
    %c24 = arith.constant 24 : index
    %c0_60 = arith.constant 0 : index
    %135 = vector.load %arg18[%c24, %c0_60] : memref<48x384xf32, #tpu.memory_space<vmem>>, vector<24x32xf32>
    %136 = arith.truncf %135 : vector<24x32xf32> to vector<24x32xbf16>
    %c24_61 = arith.constant 24 : index
    %c128_62 = arith.constant 128 : index
    %137 = vector.load %arg18[%c24_61, %c128_62] : memref<48x384xf32, #tpu.memory_space<vmem>>, vector<24x32xf32>
    %138 = arith.truncf %137 : vector<24x32xf32> to vector<24x32xbf16>
    %c24_63 = arith.constant 24 : index
    %c256_64 = arith.constant 256 : index
    %139 = vector.load %arg18[%c24_63, %c256_64] : memref<48x384xf32, #tpu.memory_space<vmem>>, vector<24x32xf32>
    %140 = arith.truncf %139 : vector<24x32xf32> to vector<24x32xbf16>
    %cst_65 = arith.constant dense<0.000000e+00> : vector<24x24xf32>
    %141 = tpu.matmul %136, %138, %cst_65 {dimension_numbers = #tpu.dot_dimension_numbers<[1], [1], [0], [0], [0, 0, 1, 0], [], []>} : vector<24x32xbf16>, vector<24x32xbf16>, vector<24x24xf32> -> vector<24x24xf32>
    %142 = vector.broadcast %46 : vector<1x24xf32> to vector<24x24xf32>
    %143 = arith.addf %141, %142 : vector<24x24xf32>
    %cst_66 = arith.constant dense<0xFF800000> : vector<24xf32>
    %144 = vector.multi_reduction <maximumf>, %143, %cst_66 [1] : vector<24x24xf32> to vector<24xf32>
    %145 = vector.shape_cast %144 : vector<24xf32> to vector<24x1xf32>
    %146 = vector.broadcast %145 : vector<24x1xf32> to vector<24x24xf32>
    %147 = arith.subf %143, %146 : vector<24x24xf32>
    %148 = math.exp %147 : vector<24x24xf32>
    %cst_67 = arith.constant dense<0.000000e+00> : vector<24xf32>
    %149 = vector.multi_reduction <add>, %148, %cst_67 [1] : vector<24x24xf32> to vector<24xf32>
    %150 = vector.shape_cast %149 : vector<24xf32> to vector<24x1xf32>
    %151 = tpu.reciprocal %150 {approx = true} : vector<24x1xf32> -> vector<24x1xf32>
    %152 = vector.broadcast %151 : vector<24x1xf32> to vector<24x24xf32>
    %153 = arith.mulf %148, %152 : vector<24x24xf32>
    %154 = arith.truncf %153 : vector<24x24xf32> to vector<24x24xbf16>
    %cst_68 = arith.constant dense<0.000000e+00> : vector<24x32xf32>
    %155 = tpu.matmul %154, %140, %cst_68 {dimension_numbers = #tpu.dot_dimension_numbers<[1], [0], [0], [1], [0, 0, 1, 1], [], []>} : vector<24x24xbf16>, vector<24x32xbf16>, vector<24x32xf32> -> vector<24x32xf32>
    %c24_69 = arith.constant 24 : index
    %c0_70 = arith.constant 0 : index
    %156 = vector.load %arg19[%c24_69, %c0_70] : memref<48x128xf32, #tpu.memory_space<vmem>>, vector<24x32xf32>
    tpu.vector_store %arg19[%c24_69, %c0_70], %155 {strides = array<i32>} : memref<48x128xf32, #tpu.memory_space<vmem>>, vector<24x32xf32>,
    %c24_71 = arith.constant 24 : index
    %c32_72 = arith.constant 32 : index
    %157 = vector.load %arg18[%c24_71, %c32_72] : memref<48x384xf32, #tpu.memory_space<vmem>>, vector<24x32xf32>
    %158 = arith.truncf %157 : vector<24x32xf32> to vector<24x32xbf16>
    %c24_73 = arith.constant 24 : index
    %c160_74 = arith.constant 160 : index
    %159 = vector.load %arg18[%c24_73, %c160_74] : memref<48x384xf32, #tpu.memory_space<vmem>>, vector<24x32xf32>
    %160 = arith.truncf %159 : vector<24x32xf32> to vector<24x32xbf16>
    %c24_75 = arith.constant 24 : index
    %c288_76 = arith.constant 288 : index
    %161 = vector.load %arg18[%c24_75, %c288_76] : memref<48x384xf32, #tpu.memory_space<vmem>>, vector<24x32xf32>
    %162 = arith.truncf %161 : vector<24x32xf32> to vector<24x32xbf16>
    %cst_77 = arith.constant dense<0.000000e+00> : vector<24x24xf32>
    %163 = tpu.matmul %158, %160, %cst_77 {dimension_numbers = #tpu.dot_dimension_numbers<[1], [1], [0], [0], [0, 0, 1, 0], [], []>} : vector<24x32xbf16>, vector<24x32xbf16>, vector<24x24xf32> -> vector<24x24xf32>
    %164 = vector.broadcast %46 : vector<1x24xf32> to vector<24x24xf32>
    %165 = arith.addf %163, %164 : vector<24x24xf32>
    %cst_78 = arith.constant dense<0xFF800000> : vector<24xf32>
    %166 = vector.multi_reduction <maximumf>, %165, %cst_78 [1] : vector<24x24xf32> to vector<24xf32>
    %167 = vector.shape_cast %166 : vector<24xf32> to vector<24x1xf32>
    %168 = vector.broadcast %167 : vector<24x1xf32> to vector<24x24xf32>
    %169 = arith.subf %165, %168 : vector<24x24xf32>
    %170 = math.exp %169 : vector<24x24xf32>
    %cst_79 = arith.constant dense<0.000000e+00> : vector<24xf32>
    %171 = vector.multi_reduction <add>, %170, %cst_79 [1] : vector<24x24xf32> to vector<24xf32>
    %172 = vector.shape_cast %171 : vector<24xf32> to vector<24x1xf32>
    %173 = tpu.reciprocal %172 {approx = true} : vector<24x1xf32> -> vector<24x1xf32>
    %174 = vector.broadcast %173 : vector<24x1xf32> to vector<24x24xf32>
    %175 = arith.mulf %170, %174 : vector<24x24xf32>
    %176 = arith.truncf %175 : vector<24x24xf32> to vector<24x24xbf16>
    %cst_80 = arith.constant dense<0.000000e+00> : vector<24x32xf32>
    %177 = tpu.matmul %176, %162, %cst_80 {dimension_numbers = #tpu.dot_dimension_numbers<[1], [0], [0], [1], [0, 0, 1, 1], [], []>} : vector<24x24xbf16>, vector<24x32xbf16>, vector<24x32xf32> -> vector<24x32xf32>
    %c24_81 = arith.constant 24 : index
    %c32_82 = arith.constant 32 : index
    %178 = vector.load %arg19[%c24_81, %c32_82] : memref<48x128xf32, #tpu.memory_space<vmem>>, vector<24x32xf32>
    tpu.vector_store %arg19[%c24_81, %c32_82], %177 {strides = array<i32>} : memref<48x128xf32, #tpu.memory_space<vmem>>, vector<24x32xf32>,
    %c24_83 = arith.constant 24 : index
    %c64_84 = arith.constant 64 : index
    %179 = vector.load %arg18[%c24_83, %c64_84] : memref<48x384xf32, #tpu.memory_space<vmem>>, vector<24x32xf32>
    %180 = arith.truncf %179 : vector<24x32xf32> to vector<24x32xbf16>
    %c24_85 = arith.constant 24 : index
    %c192_86 = arith.constant 192 : index
    %181 = vector.load %arg18[%c24_85, %c192_86] : memref<48x384xf32, #tpu.memory_space<vmem>>, vector<24x32xf32>
    %182 = arith.truncf %181 : vector<24x32xf32> to vector<24x32xbf16>
    %c24_87 = arith.constant 24 : index
    %c320_88 = arith.constant 320 : index
    %183 = vector.load %arg18[%c24_87, %c320_88] : memref<48x384xf32, #tpu.memory_space<vmem>>, vector<24x32xf32>
    %184 = arith.truncf %183 : vector<24x32xf32> to vector<24x32xbf16>
    %cst_89 = arith.constant dense<0.000000e+00> : vector<24x24xf32>
    %185 = tpu.matmul %180, %182, %cst_89 {dimension_numbers = #tpu.dot_dimension_numbers<[1], [1], [0], [0], [0, 0, 1, 0], [], []>} : vector<24x32xbf16>, vector<24x32xbf16>, vector<24x24xf32> -> vector<24x24xf32>
    %186 = vector.broadcast %46 : vector<1x24xf32> to vector<24x24xf32>
    %187 = arith.addf %185, %186 : vector<24x24xf32>
    %cst_90 = arith.constant dense<0xFF800000> : vector<24xf32>
    %188 = vector.multi_reduction <maximumf>, %187, %cst_90 [1] : vector<24x24xf32> to vector<24xf32>
    %189 = vector.shape_cast %188 : vector<24xf32> to vector<24x1xf32>
    %190 = vector.broadcast %189 : vector<24x1xf32> to vector<24x24xf32>
    %191 = arith.subf %187, %190 : vector<24x24xf32>
    %192 = math.exp %191 : vector<24x24xf32>
    %cst_91 = arith.constant dense<0.000000e+00> : vector<24xf32>
    %193 = vector.multi_reduction <add>, %192, %cst_91 [1] : vector<24x24xf32> to vector<24xf32>
    %194 = vector.shape_cast %193 : vector<24xf32> to vector<24x1xf32>
    %195 = tpu.reciprocal %194 {approx = true} : vector<24x1xf32> -> vector<24x1xf32>
    %196 = vector.broadcast %195 : vector<24x1xf32> to vector<24x24xf32>
    %197 = arith.mulf %192, %196 : vector<24x24xf32>
    %198 = arith.truncf %197 : vector<24x24xf32> to vector<24x24xbf16>
    %cst_92 = arith.constant dense<0.000000e+00> : vector<24x32xf32>
    %199 = tpu.matmul %198, %184, %cst_92 {dimension_numbers = #tpu.dot_dimension_numbers<[1], [0], [0], [1], [0, 0, 1, 1], [], []>} : vector<24x24xbf16>, vector<24x32xbf16>, vector<24x32xf32> -> vector<24x32xf32>
    %c24_93 = arith.constant 24 : index
    %c64_94 = arith.constant 64 : index
    %200 = vector.load %arg19[%c24_93, %c64_94] : memref<48x128xf32, #tpu.memory_space<vmem>>, vector<24x32xf32>
    tpu.vector_store %arg19[%c24_93, %c64_94], %199 {strides = array<i32>} : memref<48x128xf32, #tpu.memory_space<vmem>>, vector<24x32xf32>,
    %c24_95 = arith.constant 24 : index
    %c96_96 = arith.constant 96 : index
    %201 = vector.load %arg18[%c24_95, %c96_96] : memref<48x384xf32, #tpu.memory_space<vmem>>, vector<24x32xf32>
    %202 = arith.truncf %201 : vector<24x32xf32> to vector<24x32xbf16>
    %c24_97 = arith.constant 24 : index
    %c224_98 = arith.constant 224 : index
    %203 = vector.load %arg18[%c24_97, %c224_98] : memref<48x384xf32, #tpu.memory_space<vmem>>, vector<24x32xf32>
    %204 = arith.truncf %203 : vector<24x32xf32> to vector<24x32xbf16>
    %c24_99 = arith.constant 24 : index
    %c352_100 = arith.constant 352 : index
    %205 = vector.load %arg18[%c24_99, %c352_100] : memref<48x384xf32, #tpu.memory_space<vmem>>, vector<24x32xf32>
    %206 = arith.truncf %205 : vector<24x32xf32> to vector<24x32xbf16>
    %cst_101 = arith.constant dense<0.000000e+00> : vector<24x24xf32>
    %207 = tpu.matmul %202, %204, %cst_101 {dimension_numbers = #tpu.dot_dimension_numbers<[1], [1], [0], [0], [0, 0, 1, 0], [], []>} : vector<24x32xbf16>, vector<24x32xbf16>, vector<24x24xf32> -> vector<24x24xf32>
    %208 = vector.broadcast %46 : vector<1x24xf32> to vector<24x24xf32>
    %209 = arith.addf %207, %208 : vector<24x24xf32>
    %cst_102 = arith.constant dense<0xFF800000> : vector<24xf32>
    %210 = vector.multi_reduction <maximumf>, %209, %cst_102 [1] : vector<24x24xf32> to vector<24xf32>
    %211 = vector.shape_cast %210 : vector<24xf32> to vector<24x1xf32>
    %212 = vector.broadcast %211 : vector<24x1xf32> to vector<24x24xf32>
    %213 = arith.subf %209, %212 : vector<24x24xf32>
    %214 = math.exp %213 : vector<24x24xf32>
    %cst_103 = arith.constant dense<0.000000e+00> : vector<24xf32>
    %215 = vector.multi_reduction <add>, %214, %cst_103 [1] : vector<24x24xf32> to vector<24xf32>
    %216 = vector.shape_cast %215 : vector<24xf32> to vector<24x1xf32>
    %217 = tpu.reciprocal %216 {approx = true} : vector<24x1xf32> -> vector<24x1xf32>
    %218 = vector.broadcast %217 : vector<24x1xf32> to vector<24x24xf32>
    %219 = arith.mulf %214, %218 : vector<24x24xf32>
    %220 = arith.truncf %219 : vector<24x24xf32> to vector<24x24xbf16>
    %cst_104 = arith.constant dense<0.000000e+00> : vector<24x32xf32>
    %221 = tpu.matmul %220, %206, %cst_104 {dimension_numbers = #tpu.dot_dimension_numbers<[1], [0], [0], [1], [0, 0, 1, 1], [], []>} : vector<24x24xbf16>, vector<24x32xbf16>, vector<24x32xf32> -> vector<24x32xf32>
    %c24_105 = arith.constant 24 : index
    %c96_106 = arith.constant 96 : index
    %222 = vector.load %arg19[%c24_105, %c96_106] : memref<48x128xf32, #tpu.memory_space<vmem>>, vector<24x32xf32>
    tpu.vector_store %arg19[%c24_105, %c96_106], %221 {strides = array<i32>} : memref<48x128xf32, #tpu.memory_space<vmem>>, vector<24x32xf32>,
    %c0_107 = arith.constant 0 : index
    %c0_108 = arith.constant 0 : index
    %223 = vector.load %arg19[%c0_107, %c0_108] : memref<48x128xf32, #tpu.memory_space<vmem>>, vector<48x128xf32>
    %224 = arith.truncf %223 : vector<48x128xf32> to vector<48x128xbf16>
    %c0_109 = arith.constant 0 : index
    %c0_110 = arith.constant 0 : index
    %c0_111 = arith.constant 0 : index
    %225 = vector.load %arg6[%c0_109, %c0_110, %c0_111] : memref<1x128x128xbf16, #tpu.memory_space<vmem>>, vector<1x128x128xbf16>
    %226 = vector.shape_cast %225 : vector<1x128x128xbf16> to vector<128x128xbf16>
    %cst_112 = arith.constant dense<0.000000e+00> : vector<48x128xf32>
    %227 = tpu.matmul %224, %226, %cst_112 {dimension_numbers = #tpu.dot_dimension_numbers<[1], [0], [0], [1], [0, 0, 1, 1], [], []>} : vector<48x128xbf16>, vector<128x128xbf16>, vector<48x128xf32> -> vector<48x128xf32>
    %c0_113 = arith.constant 0 : index
    %c0_114 = arith.constant 0 : index
    %c0_115 = arith.constant 0 : index
    %228 = vector.load %arg7[%c0_113, %c0_114, %c0_115] : memref<1x1x128xf32, #tpu.memory_space<vmem>>, vector<1x1x128xf32>
    %229 = vector.shape_cast %228 : vector<1x1x128xf32> to vector<1x128xf32>
    %230 = vector.broadcast %229 : vector<1x128xf32> to vector<48x128xf32>
    %231 = arith.addf %227, %230 : vector<48x128xf32>
    %232 = arith.addf %3, %231 : vector<48x128xf32>
    %c0_116 = arith.constant 0 : index
    %c0_117 = arith.constant 0 : index
    %c0_118 = arith.constant 0 : index
    %233 = vector.load %arg8[%c0_116, %c0_117, %c0_118] : memref<1x1x128xf32, #tpu.memory_space<vmem>>, vector<1x1x128xf32>
    %234 = vector.shape_cast %233 : vector<1x1x128xf32> to vector<1x128xf32>
    %c0_119 = arith.constant 0 : index
    %c0_120 = arith.constant 0 : index
    %c0_121 = arith.constant 0 : index
    %235 = vector.load %arg9[%c0_119, %c0_120, %c0_121] : memref<1x1x128xf32, #tpu.memory_space<vmem>>, vector<1x1x128xf32>
    %236 = vector.shape_cast %235 : vector<1x1x128xf32> to vector<1x128xf32>
    %cst_122 = arith.constant dense<0.000000e+00> : vector<48xf32>
    %237 = vector.multi_reduction <add>, %232, %cst_122 [1] : vector<48x128xf32> to vector<48xf32>
    %238 = vector.shape_cast %237 : vector<48xf32> to vector<48x1xf32>
    %cst_123 = arith.constant 1.280000e+02 : f32
    %239 = vector.broadcast %cst_123 : f32 to vector<48x1xf32>
    %240 = arith.divf %238, %239 : vector<48x1xf32>
    %241 = vector.broadcast %240 : vector<48x1xf32> to vector<48x128xf32>
    %242 = arith.subf %232, %241 : vector<48x128xf32>
    %243 = vector.broadcast %240 : vector<48x1xf32> to vector<48x128xf32>
    %244 = arith.subf %232, %243 : vector<48x128xf32>
    %245 = arith.mulf %242, %244 : vector<48x128xf32>
    %cst_124 = arith.constant dense<0.000000e+00> : vector<48xf32>
    %246 = vector.multi_reduction <add>, %245, %cst_124 [1] : vector<48x128xf32> to vector<48xf32>
    %247 = vector.shape_cast %246 : vector<48xf32> to vector<48x1xf32>
    %cst_125 = arith.constant 1.280000e+02 : f32
    %248 = vector.broadcast %cst_125 : f32 to vector<48x1xf32>
    %249 = arith.divf %247, %248 : vector<48x1xf32>
    %250 = vector.broadcast %240 : vector<48x1xf32> to vector<48x128xf32>
    %251 = arith.subf %232, %250 : vector<48x128xf32>
    %cst_126 = arith.constant 9.99999997E-7 : f32
    %252 = vector.broadcast %cst_126 : f32 to vector<48x1xf32>
    %253 = arith.addf %249, %252 : vector<48x1xf32>
    %254 = math.rsqrt %253 : vector<48x1xf32>
    %255 = vector.broadcast %254 : vector<48x1xf32> to vector<48x128xf32>
    %256 = arith.mulf %251, %255 : vector<48x128xf32>
    %257 = vector.broadcast %234 : vector<1x128xf32> to vector<48x128xf32>
    %258 = arith.mulf %256, %257 : vector<48x128xf32>
    %259 = vector.broadcast %236 : vector<1x128xf32> to vector<48x128xf32>
    %260 = arith.addf %258, %259 : vector<48x128xf32>
    %261 = arith.truncf %260 : vector<48x128xf32> to vector<48x128xbf16>
    %c0_127 = arith.constant 0 : index
    %c0_128 = arith.constant 0 : index
    %c0_129 = arith.constant 0 : index
    %262 = vector.load %arg10[%c0_127, %c0_128, %c0_129] : memref<1x128x512xbf16, #tpu.memory_space<vmem>>, vector<1x128x512xbf16>
    %263 = vector.shape_cast %262 : vector<1x128x512xbf16> to vector<128x512xbf16>
    %cst_130 = arith.constant dense<0.000000e+00> : vector<48x512xf32>
    %264 = tpu.matmul %261, %263, %cst_130 {dimension_numbers = #tpu.dot_dimension_numbers<[1], [0], [0], [1], [0, 0, 1, 1], [], []>} : vector<48x128xbf16>, vector<128x512xbf16>, vector<48x512xf32> -> vector<48x512xf32>
    %c0_131 = arith.constant 0 : index
    %c0_132 = arith.constant 0 : index
    %c0_133 = arith.constant 0 : index
    %265 = vector.load %arg11[%c0_131, %c0_132, %c0_133] : memref<1x1x512xf32, #tpu.memory_space<vmem>>, vector<1x1x512xf32>
    %266 = vector.shape_cast %265 : vector<1x1x512xf32> to vector<1x512xf32>
    %267 = vector.broadcast %266 : vector<1x512xf32> to vector<48x512xf32>
    %268 = arith.addf %264, %267 : vector<48x512xf32>
    %269 = arith.mulf %268, %268 : vector<48x512xf32>
    %270 = arith.mulf %268, %269 : vector<48x512xf32>
    %cst_134 = arith.constant 4.471500e-02 : f32
    %271 = vector.broadcast %cst_134 : f32 to vector<48x512xf32>
    %272 = arith.mulf %271, %270 : vector<48x512xf32>
    %273 = arith.addf %268, %272 : vector<48x512xf32>
    %cst_135 = arith.constant 0.797884583 : f32
    %274 = vector.broadcast %cst_135 : f32 to vector<48x512xf32>
    %275 = arith.mulf %274, %273 : vector<48x512xf32>
    %276 = math.tanh %275 : vector<48x512xf32>
    %cst_136 = arith.constant 1.000000e+00 : f32
    %277 = vector.broadcast %cst_136 : f32 to vector<48x512xf32>
    %278 = arith.addf %277, %276 : vector<48x512xf32>
    %cst_137 = arith.constant 5.000000e-01 : f32
    %279 = vector.broadcast %cst_137 : f32 to vector<48x512xf32>
    %280 = arith.mulf %279, %278 : vector<48x512xf32>
    %281 = arith.mulf %268, %280 : vector<48x512xf32>
    %282 = arith.truncf %281 : vector<48x512xf32> to vector<48x512xbf16>
    %c0_138 = arith.constant 0 : index
    %c0_139 = arith.constant 0 : index
    %c0_140 = arith.constant 0 : index
    %283 = vector.load %arg12[%c0_138, %c0_139, %c0_140] : memref<1x512x128xbf16, #tpu.memory_space<vmem>>, vector<1x512x128xbf16>
    %284 = vector.shape_cast %283 : vector<1x512x128xbf16> to vector<512x128xbf16>
    %cst_141 = arith.constant dense<0.000000e+00> : vector<48x128xf32>
    %285 = tpu.matmul %282, %284, %cst_141 {dimension_numbers = #tpu.dot_dimension_numbers<[1], [0], [0], [1], [0, 0, 1, 1], [], []>} : vector<48x512xbf16>, vector<512x128xbf16>, vector<48x128xf32> -> vector<48x128xf32>
    %c0_142 = arith.constant 0 : index
    %c0_143 = arith.constant 0 : index
    %c0_144 = arith.constant 0 : index
    %286 = vector.load %arg13[%c0_142, %c0_143, %c0_144] : memref<1x1x128xf32, #tpu.memory_space<vmem>>, vector<1x1x128xf32>
    %287 = vector.shape_cast %286 : vector<1x1x128xf32> to vector<1x128xf32>
    %288 = vector.broadcast %287 : vector<1x128xf32> to vector<48x128xf32>
    %289 = arith.addf %285, %288 : vector<48x128xf32>
    %290 = arith.addf %232, %289 : vector<48x128xf32>
    %c0_145 = arith.constant 0 : index
    %c0_146 = arith.constant 0 : index
    %291 = vector.load %arg17[%c0_145, %c0_146] : memref<48x128xf32, #tpu.memory_space<vmem>>, vector<48x128xf32>
    tpu.vector_store %arg17[%c0_145, %c0_146], %290 {strides = array<i32>} : memref<48x128xf32, #tpu.memory_space<vmem>>, vector<48x128xf32>,
    %c11_i32 = arith.constant 11 : i32
    %292 = arith.cmpi eq, %arg0, %c11_i32 : i32
    %293 = arith.extui %292 : i1 to i32
    %c0_i32_147 = arith.constant 0 : i32
    %294 = arith.cmpi ne, %293, %c0_i32_147 : i32
    scf.if %294 {
      %c0_148 = arith.constant 0 : index
      %c0_149 = arith.constant 0 : index
      %295 = vector.load %arg14[%c0_148, %c0_149] : memref<1x128xf32, #tpu.memory_space<vmem>>, vector<1x128xf32>
      %c0_150 = arith.constant 0 : index
      %c0_151 = arith.constant 0 : index
      %296 = vector.load %arg15[%c0_150, %c0_151] : memref<1x128xf32, #tpu.memory_space<vmem>>, vector<1x128xf32>
      %cst_152 = arith.constant dense<0.000000e+00> : vector<48xf32>
      %297 = vector.multi_reduction <add>, %290, %cst_152 [1] : vector<48x128xf32> to vector<48xf32>
      %298 = vector.shape_cast %297 : vector<48xf32> to vector<48x1xf32>
      %cst_153 = arith.constant 1.280000e+02 : f32
      %299 = vector.broadcast %cst_153 : f32 to vector<48x1xf32>
      %300 = arith.divf %298, %299 : vector<48x1xf32>
      %301 = vector.broadcast %300 : vector<48x1xf32> to vector<48x128xf32>
      %302 = arith.subf %290, %301 : vector<48x128xf32>
      %303 = vector.broadcast %300 : vector<48x1xf32> to vector<48x128xf32>
      %304 = arith.subf %290, %303 : vector<48x128xf32>
      %305 = arith.mulf %302, %304 : vector<48x128xf32>
      %cst_154 = arith.constant dense<0.000000e+00> : vector<48xf32>
      %306 = vector.multi_reduction <add>, %305, %cst_154 [1] : vector<48x128xf32> to vector<48xf32>
      %307 = vector.shape_cast %306 : vector<48xf32> to vector<48x1xf32>
      %cst_155 = arith.constant 1.280000e+02 : f32
      %308 = vector.broadcast %cst_155 : f32 to vector<48x1xf32>
      %309 = arith.divf %307, %308 : vector<48x1xf32>
      %310 = vector.broadcast %300 : vector<48x1xf32> to vector<48x128xf32>
      %311 = arith.subf %290, %310 : vector<48x128xf32>
      %cst_156 = arith.constant 9.99999997E-7 : f32
      %312 = vector.broadcast %cst_156 : f32 to vector<48x1xf32>
      %313 = arith.addf %309, %312 : vector<48x1xf32>
      %314 = math.rsqrt %313 : vector<48x1xf32>
      %315 = vector.broadcast %314 : vector<48x1xf32> to vector<48x128xf32>
      %316 = arith.mulf %311, %315 : vector<48x128xf32>
      %317 = vector.broadcast %295 : vector<1x128xf32> to vector<48x128xf32>
      %318 = arith.mulf %316, %317 : vector<48x128xf32>
      %319 = vector.broadcast %296 : vector<1x128xf32> to vector<48x128xf32>
      %320 = arith.addf %318, %319 : vector<48x128xf32>
      %c0_157 = arith.constant 0 : index
      %c0_158 = arith.constant 0 : index
      %321 = vector.load %arg16[%c0_157, %c0_158] : memref<48x128xf32, #tpu.memory_space<vmem>>, vector<48x128xf32>
      tpu.vector_store %arg16[%c0_157, %c0_158], %320 {strides = array<i32>} : memref<48x128xf32, #tpu.memory_space<vmem>>, vector<48x128xf32>,
    } else {
    }
    return
  }
  func.func @transform_0(%arg0: i32) -> (i32, i32) {
    %c0_i32 = arith.constant 0 : i32
    %c0_i32_0 = arith.constant 0 : i32
    %c0_i32_1 = arith.constant 0 : i32
    return %c0_i32, %c0_i32_0 : i32, i32
  }
  func.func @transform_1(%arg0: i32) -> (i32, i32, i32) {
    %c0_i32 = arith.constant 0 : i32
    %c0_i32_0 = arith.constant 0 : i32
    %c0_i32_1 = arith.constant 0 : i32
    return %arg0, %c0_i32, %c0_i32_0 : i32, i32, i32
  }
  func.func @transform_2(%arg0: i32) -> (i32, i32, i32) {
    %c0_i32 = arith.constant 0 : i32
    %c0_i32_0 = arith.constant 0 : i32
    %c0_i32_1 = arith.constant 0 : i32
    return %arg0, %c0_i32, %c0_i32_0 : i32, i32, i32
  }
  func.func @transform_3(%arg0: i32) -> (i32, i32, i32) {
    %c0_i32 = arith.constant 0 : i32
    %c0_i32_0 = arith.constant 0 : i32
    %c0_i32_1 = arith.constant 0 : i32
    return %arg0, %c0_i32, %c0_i32_0 : i32, i32, i32
  }
  func.func @transform_4(%arg0: i32) -> (i32, i32, i32) {
    %c0_i32 = arith.constant 0 : i32
    %c0_i32_0 = arith.constant 0 : i32
    %c0_i32_1 = arith.constant 0 : i32
    return %arg0, %c0_i32, %c0_i32_0 : i32, i32, i32
  }
  func.func @transform_5(%arg0: i32) -> (i32, i32, i32) {
    %c0_i32 = arith.constant 0 : i32
    %c0_i32_0 = arith.constant 0 : i32
    %c0_i32_1 = arith.constant 0 : i32
    return %arg0, %c0_i32, %c0_i32_0 : i32, i32, i32
  }
  func.func @transform_6(%arg0: i32) -> (i32, i32, i32) {
    %c0_i32 = arith.constant 0 : i32
    %c0_i32_0 = arith.constant 0 : i32
    %c0_i32_1 = arith.constant 0 : i32
    return %arg0, %c0_i32, %c0_i32_0 : i32, i32, i32
  }
  func.func @transform_7(%arg0: i32) -> (i32, i32, i32) {
    %c0_i32 = arith.constant 0 : i32
    %c0_i32_0 = arith.constant 0 : i32
    %c0_i32_1 = arith.constant 0 : i32
    return %arg0, %c0_i32, %c0_i32_0 : i32, i32, i32
  }
  func.func @transform_8(%arg0: i32) -> (i32, i32, i32) {
    %c0_i32 = arith.constant 0 : i32
    %c0_i32_0 = arith.constant 0 : i32
    %c0_i32_1 = arith.constant 0 : i32
    return %arg0, %c0_i32, %c0_i32_0 : i32, i32, i32
  }
  func.func @transform_9(%arg0: i32) -> (i32, i32, i32) {
    %c0_i32 = arith.constant 0 : i32
    %c0_i32_0 = arith.constant 0 : i32
    %c0_i32_1 = arith.constant 0 : i32
    return %arg0, %c0_i32, %c0_i32_0 : i32, i32, i32
  }
  func.func @transform_10(%arg0: i32) -> (i32, i32, i32) {
    %c0_i32 = arith.constant 0 : i32
    %c0_i32_0 = arith.constant 0 : i32
    %c0_i32_1 = arith.constant 0 : i32
    return %arg0, %c0_i32, %c0_i32_0 : i32, i32, i32
  }
  func.func @transform_11(%arg0: i32) -> (i32, i32, i32) {
    %c0_i32 = arith.constant 0 : i32
    %c0_i32_0 = arith.constant 0 : i32
    %c0_i32_1 = arith.constant 0 : i32
    return %arg0, %c0_i32, %c0_i32_0 : i32, i32, i32
  }
  func.func @transform_12(%arg0: i32) -> (i32, i32, i32) {
    %c0_i32 = arith.constant 0 : i32
    %c0_i32_0 = arith.constant 0 : i32
    %c0_i32_1 = arith.constant 0 : i32
    return %arg0, %c0_i32, %c0_i32_0 : i32, i32, i32
  }
  func.func @transform_13(%arg0: i32) -> (i32, i32) {
    %c0_i32 = arith.constant 0 : i32
    %c0_i32_0 = arith.constant 0 : i32
    %c0_i32_1 = arith.constant 0 : i32
    return %c0_i32, %c0_i32_0 : i32, i32
  }
  func.func @transform_14(%arg0: i32) -> (i32, i32) {
    %c0_i32 = arith.constant 0 : i32
    %c0_i32_0 = arith.constant 0 : i32
    %c0_i32_1 = arith.constant 0 : i32
    return %c0_i32, %c0_i32_0 : i32, i32
  }
  func.func @transform_15(%arg0: i32) -> (i32, i32) {
    %c0_i32 = arith.constant 0 : i32
    %c0_i32_0 = arith.constant 0 : i32
    %c0_i32_1 = arith.constant 0 : i32
    return %c0_i32, %c0_i32_0 : i32, i32
  }
}

</mosaic_0001>

<llo_original>
// kernel: forward_rgb_features.2
$region0: #{forward_rgb_features.2}
  #allocation0 [shape = 'u32[]', space=smem, size = 0x4, offset = 0x4, fixed_abs, tag = 'smem constant byte address 0x4 - core index']
  #allocation1 [shape = 'u32[144,128]{1,0:T(1,128)}', space=vmem, size = 0x12000, scoped, tag = 'internal scratch']
  %s0 = inlined_call_operand.vmem [shape: f32[2,16,192], index: 0, kind: input, shape index: {}]
  %s1 = inlined_call_operand.vmem [shape: bf16[192,128], index: 1, kind: input, shape index: {}]
  %s2 = inlined_call_operand.vmem [shape: f32[1,128], index: 2, kind: input, shape index: {}]
  %s3 = inlined_call_operand.vmem [shape: f32[1,128], index: 3, kind: input, shape index: {}]
  %s4 = inlined_call_operand.vmem [shape: f32[16,128], index: 4, kind: input, shape index: {}]
  %s5 = inlined_call_operand.vmem [shape: f32[48,128], index: 5, kind: output, shape index: {}]
  %s6 = sld [smem:[#allocation0]]
  $region53: #{forward_rgb_features.2} parent=0
    _
  %s8 = ssub.s32 1, %s6
  %s9 = scalar_select 0, %s8, %s6
  loop: start=0, step=1, limit=4
  $region2: #{forward_rgb_features.2} parent=0 // loop_pre_header
    _
  $region3: #{forward_rgb_features.2} parent=0 // loop_header
    %s11 = sphi 0, %s15
    %p12 = scmp.ge.s32.totalorder %s11, 4
    %s21 = sphi 0, %s23
    %s24 = sphi 0, %s21
    %s25 = sphi 0, %s24
    %s41 = sphi 0, %s25
    %s45 = sphi 0, %s45
    %s47 = sphi 0, %s45
    %s48 = sphi 0, %s47
    %s62 = sphi 0, %s48
    %s66 = sphi 0, %s66
    %s68 = sphi 0, %s66
    %s69 = sphi 0, %s68
    %s83 = sphi 0, %s69
    %s87 = sphi 0, %s87
    %s89 = sphi 0, %s87
    %s90 = sphi 0, %s89
    %s104 = sphi 0, %s90
    %s108 = sphi 0, %s108
    %s110 = sphi 0, %s108
    %s111 = sphi 0, %s110
    %s125 = sphi 0, %s111
    %s131 = sphi 0, %s133
    %s134 = sphi 0, %s131
    %s135 = sphi 0, %s134
    %s151 = sphi 0, %s135
  $region4: #{forward_rgb_features.2} parent=0 // loop_header_branch
    %14 = sbr.rel (%p12) target = $region8
  $region5: #{forward_rgb_features.2} parent=0 // loop_body
    %s16 = ssub.s32 %s11, 1
    %s17 = ssub.s32 %s11, 2
    %s18 = sadd.s32 %s11, 1
    %s19 = ssub.s32 %s11, %s18
    %p20 = scmp.eq.s32.totalorder %s19, 0
    %s22 = sadd.s32 %s21, 1
    %s23 = scalar_select %p20, %s21, %s22
    %p26 = pneg %p20
    %p27 = scmp.eq.s32.totalorder %s11, 1
    %p28 = por %p26, %p27
    %p29 = scmp.ne.s32.totalorder %s21, %s24
    %p30 = scmp.eq.s32.totalorder %s11, 0
    %p31 = por %p29, %p30
    %p32 = scmp.ne.s32.totalorder %s21, %s24
    %p33 = scmp.eq.s32.totalorder %s16, 1
    %p34 = por %p32, %p33
    %p35 = scmp.ne.s32.totalorder %s24, %s25
    %p36 = scmp.eq.s32.totalorder %s16, 0
    %p37 = por %p35, %p36
    %p38 = scmp.ne.s32.totalorder %s24, %s25
    %p39 = scmp.eq.s32.totalorder %s17, 1
    %p40 = por %p38, %p39
    %p42 = scmp.ne.s32.totalorder %s25, %s41
    %p43 = scmp.eq.s32.totalorder %s17, 0
    %p44 = por %p42, %p43
    %s46 = sadd.s32 %s45, 1
    %p49 = scmp.eq.s32.totalorder %s11, 1
    %p50 = scmp.ne.s32.totalorder %s45, %s47
    %p51 = scmp.eq.s32.totalorder %s11, 0
    %p52 = por %p50, %p51
    %p53 = scmp.ne.s32.totalorder %s45, %s47
    %p54 = scmp.eq.s32.totalorder %s16, 1
    %p55 = por %p53, %p54
    %p56 = scmp.ne.s32.totalorder %s47, %s48
    %p57 = scmp.eq.s32.totalorder %s16, 0
    %p58 = por %p56, %p57
    %p59 = scmp.ne.s32.totalorder %s47, %s48
    %p60 = scmp.eq.s32.totalorder %s17, 1
    %p61 = por %p59, %p60
    %p63 = scmp.ne.s32.totalorder %s48, %s62
    %p64 = scmp.eq.s32.totalorder %s17, 0
    %p65 = por %p63, %p64
    %s67 = sadd.s32 %s66, 1
    %p70 = scmp.eq.s32.totalorder %s11, 1
    %p71 = scmp.ne.s32.totalorder %s66, %s68
    %p72 = scmp.eq.s32.totalorder %s11, 0
    %p73 = por %p71, %p72
    %p74 = scmp.ne.s32.totalorder %s66, %s68
    %p75 = scmp.eq.s32.totalorder %s16, 1
    %p76 = por %p74, %p75
    %p77 = scmp.ne.s32.totalorder %s68, %s69
    %p78 = scmp.eq.s32.totalorder %s16, 0
    %p79 = por %p77, %p78
    %p80 = scmp.ne.s32.totalorder %s68, %s69
    %p81 = scmp.eq.s32.totalorder %s17, 1
    %p82 = por %p80, %p81
    %p84 = scmp.ne.s32.totalorder %s69, %s83
    %p85 = scmp.eq.s32.totalorder %s17, 0
    %p86 = por %p84, %p85
    %s88 = sadd.s32 %s87, 1
    %p91 = scmp.eq.s32.totalorder %s11, 1
    %p92 = scmp.ne.s32.totalorder %s87, %s89
    %p93 = scmp.eq.s32.totalorder %s11, 0
    %p94 = por %p92, %p93
    %p95 = scmp.ne.s32.totalorder %s87, %s89
    %p96 = scmp.eq.s32.totalorder %s16, 1
    %p97 = por %p95, %p96
    %p98 = scmp.ne.s32.totalorder %s89, %s90
    %p99 = scmp.eq.s32.totalorder %s16, 0
    %p100 = por %p98, %p99
    %p101 = scmp.ne.s32.totalorder %s89, %s90
    %p102 = scmp.eq.s32.totalorder %s17, 1
    %p103 = por %p101, %p102
    %p105 = scmp.ne.s32.totalorder %s90, %s104
    %p106 = scmp.eq.s32.totalorder %s17, 0
    %p107 = por %p105, %p106
    %s109 = sadd.s32 %s108, 1
    %p112 = scmp.eq.s32.totalorder %s11, 1
    %p113 = scmp.ne.s32.totalorder %s108, %s110
    %p114 = scmp.eq.s32.totalorder %s11, 0
    %p115 = por %p113, %p114
    %p116 = scmp.ne.s32.totalorder %s108, %s110
    %p117 = scmp.eq.s32.totalorder %s16, 1
    %p118 = por %p116, %p117
    %p119 = scmp.ne.s32.totalorder %s110, %s111
    %p120 = scmp.eq.s32.totalorder %s16, 0
    %p121 = por %p119, %p120
    %p122 = scmp.ne.s32.totalorder %s110, %s111
    %p123 = scmp.eq.s32.totalorder %s17, 1
    %p124 = por %p122, %p123
    %p126 = scmp.ne.s32.totalorder %s111, %s125
    %p127 = scmp.eq.s32.totalorder %s17, 0
    %p128 = por %p126, %p127
    %s129 = ssub.s32 %s11, %s18
    %p130 = scmp.eq.s32.totalorder %s129, 0
    %s132 = sadd.s32 %s131, 1
    %s133 = scalar_select %p130, %s131, %s132
    %p136 = pneg %p130
    %p137 = scmp.eq.s32.totalorder %s11, 1
    %p138 = por %p136, %p137
    %p139 = scmp.ne.s32.totalorder %s131, %s134
    %p140 = scmp.eq.s32.totalorder %s11, 0
    %p141 = por %p139, %p140
    %p142 = scmp.ne.s32.totalorder %s131, %s134
    %p143 = scmp.eq.s32.totalorder %s16, 1
    %p144 = por %p142, %p143
    %p145 = scmp.ne.s32.totalorder %s134, %s135
    %p146 = scmp.eq.s32.totalorder %s16, 0
    %p147 = por %p145, %p146
    %p148 = scmp.ne.s32.totalorder %s134, %s135
    %p149 = scmp.eq.s32.totalorder %s17, 1
    %p150 = por %p148, %p149
    %p152 = scmp.ne.s32.totalorder %s135, %s151
    %p153 = scmp.eq.s32.totalorder %s17, 0
    %p154 = por %p152, %p153
    %p155 = scmp.le.s32.totalorder 1, %s11
    %p156 = scmp.lt.s32.totalorder %s11, 3
    %p157 = pnand %p155, %p156
    %p158 = pneg %p157
    // Predicated region
    $region9: #{forward_rgb_features.2} parent=5 // pred_check
      _
    $region10: #{forward_rgb_features.2} parent=5 // pred_check_branch
      %160 = sbr.rel (%p157) target = $region12
    $region11: #{forward_rgb_features.2} parent=5 // pred_region
      %s161 = ssub.s32 %s11, 1
      // Predicated region
      $region13: #{forward_rgb_features.2} parent=11 // pred_check
        %p162 = pneg %p58
      $region14: #{forward_rgb_features.2} parent=11 // pred_check_branch
        %164 = sbr.rel (%p162) target = $region16
      $region15: #{forward_rgb_features.2} parent=11 // pred_region
        _
      $region16: #{forward_rgb_features.2} parent=11 // pred_fallthru
        _
      // Predicated region
      $region17: #{forward_rgb_features.2} parent=11 // pred_check
        %p165 = pneg %p79
      $region18: #{forward_rgb_features.2} parent=11 // pred_check_branch
        %167 = sbr.rel (%p165) target = $region20
      $region19: #{forward_rgb_features.2} parent=11 // pred_region
        _
      $region20: #{forward_rgb_features.2} parent=11 // pred_fallthru
        _
      // Predicated region
      $region21: #{forward_rgb_features.2} parent=11 // pred_check
        %p168 = pneg %p100
      $region22: #{forward_rgb_features.2} parent=11 // pred_check_branch
        %170 = sbr.rel (%p168) target = $region24
      $region23: #{forward_rgb_features.2} parent=11 // pred_region
        _
      $region24: #{forward_rgb_features.2} parent=11 // pred_fallthru
        _
      // Predicated region
      $region25: #{forward_rgb_features.2} parent=11 // pred_check
        %p171 = pneg %p121
      $region26: #{forward_rgb_features.2} parent=11 // pred_check_branch
        %173 = sbr.rel (%p171) target = $region28
      $region27: #{forward_rgb_features.2} parent=11 // pred_region
        _
      $region28: #{forward_rgb_features.2} parent=11 // pred_fallthru
        _
    $region12: #{forward_rgb_features.2} parent=5 // pred_fallthru
      _
    %p174 = scmp.lt.s32.totalorder %s11, 2
    // Predicated region
    $region29: #{forward_rgb_features.2} parent=5 // pred_check
      %p175 = pneg %p174
    $region30: #{forward_rgb_features.2} parent=5 // pred_check_branch
      %177 = sbr.rel (%p175) target = $region32
    $region31: #{forward_rgb_features.2} parent=5 // pred_region
      // Predicated region
      $region33: #{forward_rgb_features.2} parent=31 // pred_check
        %p178 = pneg %p31
      $region34: #{forward_rgb_features.2} parent=31 // pred_check_branch
        %180 = sbr.rel (%p178) target = $region36
      $region35: #{forward_rgb_features.2} parent=31 // pred_region
        %p181 = scmp.lt.s32.totalorder %s11, 1
        %s182 = scalar_select %p181, %s11, 1
        %s183 = smul.addr %s182, 4
        %s184 = smul.addr %s183, 8
        %s185 = scalar_lea.vmem %s0, %s184
      $region36: #{forward_rgb_features.2} parent=31 // pred_fallthru
        _
    $region32: #{forward_rgb_features.2} parent=5 // pred_fallthru
      _
    %p186 = scmp.le.s32.totalorder 1, %s11
    %p187 = scmp.lt.s32.totalorder %s11, 3
    %p188 = pnand %p186, %p187
    %p189 = pneg %p188
    // Predicated region
    $region37: #{forward_rgb_features.2} parent=5 // pred_check
      _
    $region38: #{forward_rgb_features.2} parent=5 // pred_check_branch
      %191 = sbr.rel (%p188) target = $region40
    $region39: #{forward_rgb_features.2} parent=5 // pred_region
      %s192 = ssub.s32 %s11, 1
      %p193 = scmp.lt.s32.totalorder %s16, 1
      %s194 = scalar_select %p193, %s16, 1
      %s195 = smul.addr %s194, 4
      %s196 = smul.addr %s195, 8
      %s197 = scalar_lea.vmem %s0, %s196
      %p198 = pneg %p37
      %p199 = pneg %p34
      %p200 = pneg %p58
      %p201 = pneg %p55
      %p202 = pneg %p79
      %p203 = pneg %p76
      %p204 = pneg %p100
      %p205 = pneg %p97
      %p206 = pneg %p121
      %p207 = pneg %p118
      %p208 = pneg %p147
      %p209 = pneg %p144
      %s210 = smul.u32 3, %s16
      %p211 = scmp.lt.s32.totalorder %s210, 5
      %s212 = scalar_select %p211, %s210, 5
      %s213 = smul.addr %s212, 8
      %s214 = scalar_lea.vmem %s5, %s213
      %p215 = scmp.lt.s32.totalorder %s16, 1
      %s216 = scalar_select %p215, %s16, 1
      %s217 = smul.addr %s216, 4
      %s218 = smul.addr %s217, 8
      %s219 = scalar_lea.vmem %s0, %s218
      %s220 = smul.u32 3, %s16
      %p221 = scmp.lt.s32.totalorder %s220, 5
      %s222 = scalar_select %p221, %s220, 5
      %s223 = smul.addr %s222, 8
      %s224 = scalar_lea.vmem %s5, %s223
      %s225 = smul.u32 3, %s16
      %v227 = vld [vmem:[%s219] sm:$0xff]
      %v228 = vld [vmem:[%s219 + $0x8] sm:$0xff]
      %v229 = vld [vmem:[%s219 + $0x10] sm:$0xff]
      %v230 = vld [vmem:[%s219 + $0x18] sm:$0xff]
      %v231 = vpack.c.bf16 %v229, %v227
      %v232 = vpack.c.bf16 %v230, %v228
      %v233 = vld [vmem:[%s1] sm:$0xf]
      %v234 = vld [vmem:[%s1 + $0x4] sm:$0xf]
      %v235 = vld [vmem:[%s1 + $0x8] sm:$0xf]
      %v236 = vld [vmem:[%s1 + $0xc] sm:$0xf]
      %v237 = vld [vmem:[%s1 + $0x10] sm:$0xf]
      %v238 = vld [vmem:[%s1 + $0x14] sm:$0xf]
      %v239 = vld [vmem:[%s1 + $0x18] sm:$0xf]
      %v240 = vld [vmem:[%s1 + $0x1c] sm:$0xf]
      %v241 = vld [vmem:[%s1 + $0x20] sm:$0xf]
      %v242 = vld [vmem:[%s1 + $0x24] sm:$0xf]
      %v243 = vld [vmem:[%s1 + $0x28] sm:$0xf]
      %v244 = vld [vmem:[%s1 + $0x2c] sm:$0xf]
      %v245 = vld [vmem:[%s1 + $0x30] sm:$0xf]
      %v246 = vld [vmem:[%s1 + $0x34] sm:$0xf]
      %v247 = vld [vmem:[%s1 + $0x38] sm:$0xf]
      %v248 = vld [vmem:[%s1 + $0x3c] sm:$0xf]
      %v249 = vld [vmem:[%s1 + $0x40] sm:$0xf]
      %v250 = vld [vmem:[%s1 + $0x44] sm:$0xf]
      %v251 = vld [vmem:[%s1 + $0x48] sm:$0xf]
      %v252 = vld [vmem:[%s1 + $0x4c] sm:$0xf]
      %v253 = vld [vmem:[%s1 + $0x50] sm:$0xf]
      %v254 = vld [vmem:[%s1 + $0x54] sm:$0xf]
      %v255 = vld [vmem:[%s1 + $0x58] sm:$0xf]
      %v256 = vld [vmem:[%s1 + $0x5c] sm:$0xf]
      %v257 = vld [vmem:[%s2] sm:$0x1]
      %v259 = vlaneseq
      %v260 = vshrl.u32 %v259, 7
      %v261 = vsub.s32 0, %v260
      %v262 = vrot.slane %v257, %v261
      %v288 = vunpack.c.l.b16 %v233
      %v289 = vunpack.c.l.b16 %v234
      %v290 = vunpack.c.l.b16 %v235
      %v291 = vunpack.c.l.b16 %v236
      %v292 = vunpack.c.l.b16 %v237
      %v293 = vunpack.c.l.b16 %v238
      %v294 = vunpack.c.l.b16 %v239
      %v295 = vunpack.c.l.b16 %v240
      %v296 = vunpack.c.l.b16 %v241
      %v297 = vunpack.c.l.b16 %v242
      %v298 = vunpack.c.l.b16 %v243
      %v299 = vunpack.c.l.b16 %v244
      %v300 = vunpack.c.l.b16 %v245
      %v301 = vunpack.c.l.b16 %v246
      %v302 = vunpack.c.l.b16 %v247
      %v303 = vunpack.c.l.b16 %v248
      %v304 = vunpack.c.l.b16 %v249
      %v305 = vunpack.c.l.b16 %v250
      %v306 = vunpack.c.l.b16 %v251
      %v307 = vunpack.c.l.b16 %v252
      %v308 = vunpack.c.l.b16 %v253
      %v309 = vunpack.c.l.b16 %v254
      %v310 = vunpack.c.l.b16 %v255
      %v311 = vunpack.c.l.b16 %v256
      %v312 = vpack.c.b16 %v289, %v288
      %v313 = vpack.c.b16 %v291, %v290
      %v314 = vpack.c.b16 %v293, %v292
      %v315 = vpack.c.b16 %v295, %v294
      %v316 = vpack.c.b16 %v297, %v296
      %v317 = vpack.c.b16 %v299, %v298
      %v318 = vpack.c.b16 %v301, %v300
      %v319 = vpack.c.b16 %v303, %v302
      %v320 = vpack.c.b16 %v305, %v304
      %v321 = vpack.c.b16 %v307, %v306
      %v322 = vpack.c.b16 %v309, %v308
      %v323 = vpack.c.b16 %v311, %v310
      %vm336 = vcmask 523264
      %v338 = vsel %vm336, %v232, 0
      %340 = vmatprep.subr.bf16.mxu0 0
      %341 = vmatpush1.bf16.msra.mxu0 %v312
      %342 = vmatprep.subr.bf16.mxu0 0
      %343 = vmatpush1.bf16.msra.mxu0 %v313
      %344 = vmatprep.subr.bf16.mxu0 0
      %345 = vmatpush1.bf16.msra.mxu0 %v314
      %346 = vmatprep.subr.bf16.mxu0 0
      %347 = vmatpush1.bf16.msra.mxu0 %v315
      %348 = vmatprep.subr.bf16.mxu0 0
      %349 = vmatpush1.bf16.msra.mxu0 %v316
      %350 = vmatprep.subr.bf16.mxu0 0
      %351 = vmatpush1.bf16.msra.mxu0 %v317
      %352 = vmatprep.subr.bf16.mxu0 0
      %353 = vmatpush1.bf16.msra.mxu0 %v318
      %354 = vmatprep.subr.bf16.mxu0 0
      %355 = vmatpush1.bf16.msra.mxu0 %v319
      %356 = vmatprep.subr.bf16.mxu0 0
      %357 = vmatpush1.bf16.msra.mxu0 %v320
      %358 = vmatprep.subr.bf16.mxu0 0
      %359 = vmatpush1.bf16.msra.mxu0 %v321
      %360 = vmatprep.subr.bf16.mxu0 0
      %361 = vmatpush1.bf16.msra.mxu0 %v322
      %362 = vmatprep.subr.bf16.mxu0 0
      %363 = vmatpush1.bf16.msra.mxu0 %v323
      %364 = vmatprep.subr.bf16.mxu0 0
      %365 = vmatpush1.bf16.msra.mxu0 0
      %366 = vmatprep.subr.bf16.mxu0 0
      %367 = vmatpush1.bf16.msra.mxu0 0
      %368 = vmatprep.subr.bf16.mxu0 0
      %369 = vmatpush1.bf16.msra.mxu0 0
      %370 = vmatprep.subr.bf16.mxu0 0
      %371 = vmatpush1.bf16.msra.mxu0 0
      %372 = vmatprep.mubr.bf16.mxu0 %v338
      %373 = vmatmul.mubr.bf16.gmra.mrb[0].mxu0 %v231
      %v374 = vpop.f32.mrb[0].mxu0
      %v375 = vadd.f32 %v262, %v374
      %v376 = vpop.f32.mrb[0].mxu0
      %v377 = vpop.f32.mrb[0].mxu0
      %v378 = vadd.f32 %v262, %v377
      %v379 = vpop.f32.mrb[0].mxu0
      %380 = vdwg.mxu0
      %v381 = vld [vmem:[%s4] sm:$0xff]
      %v382 = vld [vmem:[%s4 + $0x8] sm:$0xff]
      %v383 = vadd.f32 %v375, %v381
      %v384 = vadd.f32 %v378, %v382
      %v385 = vld [vmem:[%s3] sm:$0x1]
      %386 = vst [vmem:[%s224] sm:$0x1] %v385
      %387 = vst [vmem:[%s224 + $0x1] sm:$0xff] %v383
      %388 = vst [vmem:[%s224 + $0x9] sm:$0xff] %v384
      %389 = vst [vmem:[%s224 + $0x11] sm:$0x7f] 0.0
      %s390 = smul.u32 3, %s16
      %p391 = scmp.lt.s32.totalorder %s390, 5
      %s392 = scalar_select %p391, %s390, 5
      %s393 = smul.addr %s392, 8
      %s394 = scalar_lea.vmem %s5, %s393
      // Predicated region
      $region41: #{forward_rgb_features.2} parent=39 // pred_check
        %p395 = pneg %p144
      $region42: #{forward_rgb_features.2} parent=39 // pred_check_branch
        %397 = sbr.rel (%p395) target = $region44
      $region43: #{forward_rgb_features.2} parent=39 // pred_region
        %s398 = smul.u32 3, %s16
      $region44: #{forward_rgb_features.2} parent=39 // pred_fallthru
        _
    $region40: #{forward_rgb_features.2} parent=5 // pred_fallthru
      _
    %p399 = scmp.le.s32.totalorder 2, %s11
    // Predicated region
    $region45: #{forward_rgb_features.2} parent=5 // pred_check
      %p400 = pneg %p399
    $region46: #{forward_rgb_features.2} parent=5 // pred_check_branch
      %402 = sbr.rel (%p400) target = $region48
    $region47: #{forward_rgb_features.2} parent=5 // pred_region
      %s403 = ssub.s32 %s11, 2
      // Predicated region
      $region49: #{forward_rgb_features.2} parent=47 // pred_check
        %p404 = pneg %p150
      $region50: #{forward_rgb_features.2} parent=47 // pred_check_branch
        %406 = sbr.rel (%p404) target = $region52
      $region51: #{forward_rgb_features.2} parent=47 // pred_region
        %s407 = smul.u32 3, %s17
        %p408 = scmp.lt.s32.totalorder %s407, 5
        %s409 = scalar_select %p408, %s407, 5
        %s410 = smul.addr %s409, 8
        %s411 = scalar_lea.vmem %s5, %s410
      $region52: #{forward_rgb_features.2} parent=47 // pred_fallthru
        _
    $region48: #{forward_rgb_features.2} parent=5 // pred_fallthru
      _
  $region6: #{forward_rgb_features.2} parent=0 // loop_footer
    %s15 = sadd.s32 1, %s11
  $region7: #{forward_rgb_features.2} parent=0 // loop_footer_branch
    %10 = sbr.rel target = $region3
  $region8: #{forward_rgb_features.2} parent=0 // loop_exit
    _

// kernel: forward_rgb_features.3
$region0: #{forward_rgb_features.3}
  #allocation0 [shape = 'u32[]', space=smem, size = 0x4, offset = 0x4, fixed_abs, tag = 'smem constant byte address 0x4 - core index']
  #allocation1 [shape = 'u32[144,128]{1,0:T(1,128)}', space=vmem, size = 0x12000, scoped, tag = 'internal scratch']
  #allocation2 [shape = 'f32[48,128]{1,0:T(8,128)}', space=vmem, size = 0x6000, scoped, tag = 'scratch operand']
  #allocation3 [shape = 'f32[48,384]{1,0:T(8,128)}', space=vmem, size = 0x12000, scoped, tag = 'scratch operand']
  #allocation4 [shape = 'f32[48,128]{1,0:T(8,128)}', space=vmem, size = 0x6000, scoped, tag = 'scratch operand']
  %s0 = inlined_call_operand.vmem [shape: f32[48,128], index: 0, kind: input, shape index: {}]
  %s1 = inlined_call_operand.vmem [shape: f32[12,1,128], index: 1, kind: input, shape index: {}]
  %s2 = inlined_call_operand.vmem [shape: f32[12,1,128], index: 2, kind: input, shape index: {}]
  %s3 = inlined_call_operand.hbm [shape: bf16[12,128,384], index: 3, kind: input, shape index: {}]
  %s4 = inlined_call_operand.vmem [shape: f32[12,1,384], index: 4, kind: input, shape index: {}]
  %s5 = inlined_call_operand.hbm [shape: bf16[12,128,128], index: 5, kind: input, shape index: {}]
  %s6 = inlined_call_operand.vmem [shape: f32[12,1,128], index: 6, kind: input, shape index: {}]
  %s7 = inlined_call_operand.vmem [shape: f32[12,1,128], index: 7, kind: input, shape index: {}]
  %s8 = inlined_call_operand.vmem [shape: f32[12,1,128], index: 8, kind: input, shape index: {}]
  %s9 = inlined_call_operand.vmem [shape: bf16[12,128,512], index: 9, kind: input, shape index: {}]
  %s10 = inlined_call_operand.vmem [shape: f32[12,1,512], index: 10, kind: input, shape index: {}]
  %s11 = inlined_call_operand.hbm [shape: bf16[12,512,128], index: 11, kind: input, shape index: {}]
  %s12 = inlined_call_operand.vmem [shape: f32[12,1,128], index: 12, kind: input, shape index: {}]
  %s13 = inlined_call_operand.vmem [shape: f32[1,128], index: 13, kind: input, shape index: {}]
  %s14 = inlined_call_operand.vmem [shape: f32[1,128], index: 14, kind: input, shape index: {}]
  %s15 = inlined_call_operand.vmem [shape: f32[48,128], index: 15, kind: output, shape index: {}]
  %s16 = sld [smem:[#allocation0]]
  $region113: #{forward_rgb_features.3} parent=0
    _
  %s18 = ssub.s32 1, %s16
  %s19 = scalar_select 0, %s18, %s16
  $region1: #{forward_rgb_features.3} parent=0
    #allocation5 [shape = 'u8[196608]{0}', space=vmem, size = 0x30000, scoped, tag = 'input window, operand 3']
    #allocation6 [shape = 's32[2]{0}', space=sflag, size = 0x8, scoped, tag = 'scoped memory for forward_rgb_features.3']
    #allocation7 [shape = 'u8[65536]{0}', space=vmem, size = 0x10000, scoped, tag = 'input window, operand 5']
    #allocation8 [shape = 's32[2]{0}', space=sflag, size = 0x8, scoped, tag = 'scoped memory for forward_rgb_features.3']
    #allocation9 [shape = 'u8[262144]{0}', space=vmem, size = 0x40000, scoped, tag = 'input window, operand 11']
    %20 = vsyncpa [#allocation6], 0
    %s21 = scalar_lea.sflag [#allocation6], 1
    %22 = vsyncpa %s21, 0
    %23 = vsyncpa [#allocation8], 0
    %s24 = scalar_lea.sflag [#allocation8], 1
    %25 = vsyncpa %s24, 0
    loop: start=0, step=1, limit=14
    $region2: #{forward_rgb_features.3} parent=1 // loop_pre_header
      _
    $region3: #{forward_rgb_features.3} parent=1 // loop_header
      %s27 = sphi 0, %s31
      %p28 = scmp.ge.s32.totalorder %s27, 14
      %s35 = sphi 0, %s35
      %s37 = sphi 0, %s35
      %s38 = sphi 0, %s37
      %s52 = sphi 0, %s38
      %s58 = sphi 0, %s60
      %s61 = sphi 0, %s58
      %s62 = sphi 0, %s61
      %s78 = sphi 0, %s62
      %s84 = sphi 0, %s86
      %s87 = sphi 0, %s84
      %s88 = sphi 0, %s87
      %s104 = sphi 0, %s88
      %s110 = sphi 0, %s112
      %s113 = sphi 0, %s110
      %s114 = sphi 0, %s113
      %s130 = sphi 0, %s114
      %s136 = sphi 0, %s138
      %s139 = sphi 0, %s136
      %s140 = sphi 0, %s139
      %s156 = sphi 0, %s140
      %s162 = sphi 0, %s164
      %s165 = sphi 0, %s162
      %s166 = sphi 0, %s165
      %s182 = sphi 0, %s166
      %s188 = sphi 0, %s190
      %s191 = sphi 0, %s188
      %s192 = sphi 0, %s191
      %s208 = sphi 0, %s192
      %s214 = sphi 0, %s216
      %s217 = sphi 0, %s214
      %s218 = sphi 0, %s217
      %s234 = sphi 0, %s218
      %s240 = sphi 0, %s242
      %s243 = sphi 0, %s240
      %s244 = sphi 0, %s243
      %s260 = sphi 0, %s244
      %s266 = sphi 0, %s268
      %s269 = sphi 0, %s266
      %s270 = sphi 0, %s269
      %s286 = sphi 0, %s270
      %s292 = sphi 0, %s294
      %s295 = sphi 0, %s292
      %s296 = sphi 0, %s295
      %s312 = sphi 0, %s296
      %s318 = sphi 0, %s320
      %s321 = sphi 0, %s318
      %s322 = sphi 0, %s321
      %s338 = sphi 0, %s322
      %s344 = sphi 0, %s346
      %s347 = sphi 0, %s344
      %s348 = sphi 0, %s347
      %s364 = sphi 0, %s348
      %s368 = sphi 0, %s368
      %s370 = sphi 0, %s368
      %s371 = sphi 0, %s370
      %s385 = sphi 0, %s371
      %s389 = sphi 0, %s389
      %s391 = sphi 0, %s389
      %s392 = sphi 0, %s391
      %s406 = sphi 0, %s392
      %s410 = sphi 0, %s410
      %s412 = sphi 0, %s410
      %s413 = sphi 0, %s412
      %s427 = sphi 0, %s413
    $region4: #{forward_rgb_features.3} parent=1 // loop_header_branch
      %30 = sbr.rel (%p28) target = $region8
    $region5: #{forward_rgb_features.3} parent=1 // loop_body
      %s32 = ssub.s32 %s27, 1
      %s33 = ssub.s32 %s27, 2
      %s34 = sadd.s32 %s27, 1
      %s36 = sadd.s32 %s35, 1
      %p39 = scmp.eq.s32.totalorder %s27, 11
      %p40 = scmp.ne.s32.totalorder %s35, %s37
      %p41 = scmp.eq.s32.totalorder %s27, 0
      %p42 = por %p40, %p41
      %p43 = scmp.ne.s32.totalorder %s35, %s37
      %p44 = scmp.eq.s32.totalorder %s32, 11
      %p45 = por %p43, %p44
      %p46 = scmp.ne.s32.totalorder %s37, %s38
      %p47 = scmp.eq.s32.totalorder %s32, 0
      %p48 = por %p46, %p47
      %p49 = scmp.ne.s32.totalorder %s37, %s38
      %p50 = scmp.eq.s32.totalorder %s33, 11
      %p51 = por %p49, %p50
      %p53 = scmp.ne.s32.totalorder %s38, %s52
      %p54 = scmp.eq.s32.totalorder %s33, 0
      %p55 = por %p53, %p54
      %s56 = ssub.s32 %s27, %s34
      %p57 = scmp.eq.s32.totalorder %s56, 0
      %s59 = sadd.s32 %s58, 1
      %s60 = scalar_select %p57, %s58, %s59
      %p63 = pneg %p57
      %p64 = scmp.eq.s32.totalorder %s27, 11
      %p65 = por %p63, %p64
      %p66 = scmp.ne.s32.totalorder %s58, %s61
      %p67 = scmp.eq.s32.totalorder %s27, 0
      %p68 = por %p66, %p67
      %p69 = scmp.ne.s32.totalorder %s58, %s61
      %p70 = scmp.eq.s32.totalorder %s32, 11
      %p71 = por %p69, %p70
      %p72 = scmp.ne.s32.totalorder %s61, %s62
      %p73 = scmp.eq.s32.totalorder %s32, 0
      %p74 = por %p72, %p73
      %p75 = scmp.ne.s32.totalorder %s61, %s62
      %p76 = scmp.eq.s32.totalorder %s33, 11
      %p77 = por %p75, %p76
      %p79 = scmp.ne.s32.totalorder %s62, %s78
      %p80 = scmp.eq.s32.totalorder %s33, 0
      %p81 = por %p79, %p80
      %s82 = ssub.s32 %s27, %s34
      %p83 = scmp.eq.s32.totalorder %s82, 0
      %s85 = sadd.s32 %s84, 1
      %s86 = scalar_select %p83, %s84, %s85
      %p89 = pneg %p83
      %p90 = scmp.eq.s32.totalorder %s27, 11
      %p91 = por %p89, %p90
      %p92 = scmp.ne.s32.totalorder %s84, %s87
      %p93 = scmp.eq.s32.totalorder %s27, 0
      %p94 = por %p92, %p93
      %p95 = scmp.ne.s32.totalorder %s84, %s87
      %p96 = scmp.eq.s32.totalorder %s32, 11
      %p97 = por %p95, %p96
      %p98 = scmp.ne.s32.totalorder %s87, %s88
      %p99 = scmp.eq.s32.totalorder %s32, 0
      %p100 = por %p98, %p99
      %p101 = scmp.ne.s32.totalorder %s87, %s88
      %p102 = scmp.eq.s32.totalorder %s33, 11
      %p103 = por %p101, %p102
      %p105 = scmp.ne.s32.totalorder %s88, %s104
      %p106 = scmp.eq.s32.totalorder %s33, 0
      %p107 = por %p105, %p106
      %s108 = ssub.s32 %s27, %s34
      %p109 = scmp.eq.s32.totalorder %s108, 0
      %s111 = sadd.s32 %s110, 1
      %s112 = scalar_select %p109, %s110, %s111
      %p115 = pneg %p109
      %p116 = scmp.eq.s32.totalorder %s27, 11
      %p117 = por %p115, %p116
      %p118 = scmp.ne.s32.totalorder %s110, %s113
      %p119 = scmp.eq.s32.totalorder %s27, 0
      %p120 = por %p118, %p119
      %p121 = scmp.ne.s32.totalorder %s110, %s113
      %p122 = scmp.eq.s32.totalorder %s32, 11
      %p123 = por %p121, %p122
      %p124 = scmp.ne.s32.totalorder %s113, %s114
      %p125 = scmp.eq.s32.totalorder %s32, 0
      %p126 = por %p124, %p125
      %p127 = scmp.ne.s32.totalorder %s113, %s114
      %p128 = scmp.eq.s32.totalorder %s33, 11
      %p129 = por %p127, %p128
      %p131 = scmp.ne.s32.totalorder %s114, %s130
      %p132 = scmp.eq.s32.totalorder %s33, 0
      %p133 = por %p131, %p132
      %s134 = ssub.s32 %s27, %s34
      %p135 = scmp.eq.s32.totalorder %s134, 0
      %s137 = sadd.s32 %s136, 1
      %s138 = scalar_select %p135, %s136, %s137
      %p141 = pneg %p135
      %p142 = scmp.eq.s32.totalorder %s27, 11
      %p143 = por %p141, %p142
      %p144 = scmp.ne.s32.totalorder %s136, %s139
      %p145 = scmp.eq.s32.totalorder %s27, 0
      %p146 = por %p144, %p145
      %p147 = scmp.ne.s32.totalorder %s136, %s139
      %p148 = scmp.eq.s32.totalorder %s32, 11
      %p149 = por %p147, %p148
      %p150 = scmp.ne.s32.totalorder %s139, %s140
      %p151 = scmp.eq.s32.totalorder %s32, 0
      %p152 = por %p150, %p151
      %p153 = scmp.ne.s32.totalorder %s139, %s140
      %p154 = scmp.eq.s32.totalorder %s33, 11
      %p155 = por %p153, %p154
      %p157 = scmp.ne.s32.totalorder %s140, %s156
      %p158 = scmp.eq.s32.totalorder %s33, 0
      %p159 = por %p157, %p158
      %s160 = ssub.s32 %s27, %s34
      %p161 = scmp.eq.s32.totalorder %s160, 0
      %s163 = sadd.s32 %s162, 1
      %s164 = scalar_select %p161, %s162, %s163
      %p167 = pneg %p161
      %p168 = scmp.eq.s32.totalorder %s27, 11
      %p169 = por %p167, %p168
      %p170 = scmp.ne.s32.totalorder %s162, %s165
      %p171 = scmp.eq.s32.totalorder %s27, 0
      %p172 = por %p170, %p171
      %p173 = scmp.ne.s32.totalorder %s162, %s165
      %p174 = scmp.eq.s32.totalorder %s32, 11
      %p175 = por %p173, %p174
      %p176 = scmp.ne.s32.totalorder %s165, %s166
      %p177 = scmp.eq.s32.totalorder %s32, 0
      %p178 = por %p176, %p177
      %p179 = scmp.ne.s32.totalorder %s165, %s166
      %p180 = scmp.eq.s32.totalorder %s33, 11
      %p181 = por %p179, %p180
      %p183 = scmp.ne.s32.totalorder %s166, %s182
      %p184 = scmp.eq.s32.totalorder %s33, 0
      %p185 = por %p183, %p184
      %s186 = ssub.s32 %s27, %s34
      %p187 = scmp.eq.s32.totalorder %s186, 0
      %s189 = sadd.s32 %s188, 1
      %s190 = scalar_select %p187, %s188, %s189
      %p193 = pneg %p187
      %p194 = scmp.eq.s32.totalorder %s27, 11
      %p195 = por %p193, %p194
      %p196 = scmp.ne.s32.totalorder %s188, %s191
      %p197 = scmp.eq.s32.totalorder %s27, 0
      %p198 = por %p196, %p197
      %p199 = scmp.ne.s32.totalorder %s188, %s191
      %p200 = scmp.eq.s32.totalorder %s32, 11
      %p201 = por %p199, %p200
      %p202 = scmp.ne.s32.totalorder %s191, %s192
      %p203 = scmp.eq.s32.totalorder %s32, 0
      %p204 = por %p202, %p203
      %p205 = scmp.ne.s32.totalorder %s191, %s192
      %p206 = scmp.eq.s32.totalorder %s33, 11
      %p207 = por %p205, %p206
      %p209 = scmp.ne.s32.totalorder %s192, %s208
      %p210 = scmp.eq.s32.totalorder %s33, 0
      %p211 = por %p209, %p210
      %s212 = ssub.s32 %s27, %s34
      %p213 = scmp.eq.s32.totalorder %s212, 0
      %s215 = sadd.s32 %s214, 1
      %s216 = scalar_select %p213, %s214, %s215
      %p219 = pneg %p213
      %p220 = scmp.eq.s32.totalorder %s27, 11
      %p221 = por %p219, %p220
      %p222 = scmp.ne.s32.totalorder %s214, %s217
      %p223 = scmp.eq.s32.totalorder %s27, 0
      %p224 = por %p222, %p223
      %p225 = scmp.ne.s32.totalorder %s214, %s217
      %p226 = scmp.eq.s32.totalorder %s32, 11
      %p227 = por %p225, %p226
      %p228 = scmp.ne.s32.totalorder %s217, %s218
      %p229 = scmp.eq.s32.totalorder %s32, 0
      %p230 = por %p228, %p229
      %p231 = scmp.ne.s32.totalorder %s217, %s218
      %p232 = scmp.eq.s32.totalorder %s33, 11
      %p233 = por %p231, %p232
      %p235 = scmp.ne.s32.totalorder %s218, %s234
      %p236 = scmp.eq.s32.totalorder %s33, 0
      %p237 = por %p235, %p236
      %s238 = ssub.s32 %s27, %s34
      %p239 = scmp.eq.s32.totalorder %s238, 0
      %s241 = sadd.s32 %s240, 1
      %s242 = scalar_select %p239, %s240, %s241
      %p245 = pneg %p239
      %p246 = scmp.eq.s32.totalorder %s27, 11
      %p247 = por %p245, %p246
      %p248 = scmp.ne.s32.totalorder %s240, %s243
      %p249 = scmp.eq.s32.totalorder %s27, 0
      %p250 = por %p248, %p249
      %p251 = scmp.ne.s32.totalorder %s240, %s243
      %p252 = scmp.eq.s32.totalorder %s32, 11
      %p253 = por %p251, %p252
      %p254 = scmp.ne.s32.totalorder %s243, %s244
      %p255 = scmp.eq.s32.totalorder %s32, 0
      %p256 = por %p254, %p255
      %p257 = scmp.ne.s32.totalorder %s243, %s244
      %p258 = scmp.eq.s32.totalorder %s33, 11
      %p259 = por %p257, %p258
      %p261 = scmp.ne.s32.totalorder %s244, %s260
      %p262 = scmp.eq.s32.totalorder %s33, 0
      %p263 = por %p261, %p262
      %s264 = ssub.s32 %s27, %s34
      %p265 = scmp.eq.s32.totalorder %s264, 0
      %s267 = sadd.s32 %s266, 1
      %s268 = scalar_select %p265, %s266, %s267
      %p271 = pneg %p265
      %p272 = scmp.eq.s32.totalorder %s27, 11
      %p273 = por %p271, %p272
      %p274 = scmp.ne.s32.totalorder %s266, %s269
      %p275 = scmp.eq.s32.totalorder %s27, 0
      %p276 = por %p274, %p275
      %p277 = scmp.ne.s32.totalorder %s266, %s269
      %p278 = scmp.eq.s32.totalorder %s32, 11
      %p279 = por %p277, %p278
      %p280 = scmp.ne.s32.totalorder %s269, %s270
      %p281 = scmp.eq.s32.totalorder %s32, 0
      %p282 = por %p280, %p281
      %p283 = scmp.ne.s32.totalorder %s269, %s270
      %p284 = scmp.eq.s32.totalorder %s33, 11
      %p285 = por %p283, %p284
      %p287 = scmp.ne.s32.totalorder %s270, %s286
      %p288 = scmp.eq.s32.totalorder %s33, 0
      %p289 = por %p287, %p288
      %s290 = ssub.s32 %s27, %s34
      %p291 = scmp.eq.s32.totalorder %s290, 0
      %s293 = sadd.s32 %s292, 1
      %s294 = scalar_select %p291, %s292, %s293
      %p297 = pneg %p291
      %p298 = scmp.eq.s32.totalorder %s27, 11
      %p299 = por %p297, %p298
      %p300 = scmp.ne.s32.totalorder %s292, %s295
      %p301 = scmp.eq.s32.totalorder %s27, 0
      %p302 = por %p300, %p301
      %p303 = scmp.ne.s32.totalorder %s292, %s295
      %p304 = scmp.eq.s32.totalorder %s32, 11
      %p305 = por %p303, %p304
      %p306 = scmp.ne.s32.totalorder %s295, %s296
      %p307 = scmp.eq.s32.totalorder %s32, 0
      %p308 = por %p306, %p307
      %p309 = scmp.ne.s32.totalorder %s295, %s296
      %p310 = scmp.eq.s32.totalorder %s33, 11
      %p311 = por %p309, %p310
      %p313 = scmp.ne.s32.totalorder %s296, %s312
      %p314 = scmp.eq.s32.totalorder %s33, 0
      %p315 = por %p313, %p314
      %s316 = ssub.s32 %s27, %s34
      %p317 = scmp.eq.s32.totalorder %s316, 0
      %s319 = sadd.s32 %s318, 1
      %s320 = scalar_select %p317, %s318, %s319
      %p323 = pneg %p317
      %p324 = scmp.eq.s32.totalorder %s27, 11
      %p325 = por %p323, %p324
      %p326 = scmp.ne.s32.totalorder %s318, %s321
      %p327 = scmp.eq.s32.totalorder %s27, 0
      %p328 = por %p326, %p327
      %p329 = scmp.ne.s32.totalorder %s318, %s321
      %p330 = scmp.eq.s32.totalorder %s32, 11
      %p331 = por %p329, %p330
      %p332 = scmp.ne.s32.totalorder %s321, %s322
      %p333 = scmp.eq.s32.totalorder %s32, 0
      %p334 = por %p332, %p333
      %p335 = scmp.ne.s32.totalorder %s321, %s322
      %p336 = scmp.eq.s32.totalorder %s33, 11
      %p337 = por %p335, %p336
      %p339 = scmp.ne.s32.totalorder %s322, %s338
      %p340 = scmp.eq.s32.totalorder %s33, 0
      %p341 = por %p339, %p340
      %s342 = ssub.s32 %s27, %s34
      %p343 = scmp.eq.s32.totalorder %s342, 0
      %s345 = sadd.s32 %s344, 1
      %s346 = scalar_select %p343, %s344, %s345
      %p349 = pneg %p343
      %p350 = scmp.eq.s32.totalorder %s27, 11
      %p351 = por %p349, %p350
      %p352 = scmp.ne.s32.totalorder %s344, %s347
      %p353 = scmp.eq.s32.totalorder %s27, 0
      %p354 = por %p352, %p353
      %p355 = scmp.ne.s32.totalorder %s344, %s347
      %p356 = scmp.eq.s32.totalorder %s32, 11
      %p357 = por %p355, %p356
      %p358 = scmp.ne.s32.totalorder %s347, %s348
      %p359 = scmp.eq.s32.totalorder %s32, 0
      %p360 = por %p358, %p359
      %p361 = scmp.ne.s32.totalorder %s347, %s348
      %p362 = scmp.eq.s32.totalorder %s33, 11
      %p363 = por %p361, %p362
      %p365 = scmp.ne.s32.totalorder %s348, %s364
      %p366 = scmp.eq.s32.totalorder %s33, 0
      %p367 = por %p365, %p366
      %s369 = sadd.s32 %s368, 1
      %p372 = scmp.eq.s32.totalorder %s27, 11
      %p373 = scmp.ne.s32.totalorder %s368, %s370
      %p374 = scmp.eq.s32.totalorder %s27, 0
      %p375 = por %p373, %p374
      %p376 = scmp.ne.s32.totalorder %s368, %s370
      %p377 = scmp.eq.s32.totalorder %s32, 11
      %p378 = por %p376, %p377
      %p379 = scmp.ne.s32.totalorder %s370, %s371
      %p380 = scmp.eq.s32.totalorder %s32, 0
      %p381 = por %p379, %p380
      %p382 = scmp.ne.s32.totalorder %s370, %s371
      %p383 = scmp.eq.s32.totalorder %s33, 11
      %p384 = por %p382, %p383
      %p386 = scmp.ne.s32.totalorder %s371, %s385
      %p387 = scmp.eq.s32.totalorder %s33, 0
      %p388 = por %p386, %p387
      %s390 = sadd.s32 %s389, 1
      %p393 = scmp.eq.s32.totalorder %s27, 11
      %p394 = scmp.ne.s32.totalorder %s389, %s391
      %p395 = scmp.eq.s32.totalorder %s27, 0
      %p396 = por %p394, %p395
      %p397 = scmp.ne.s32.totalorder %s389, %s391
      %p398 = scmp.eq.s32.totalorder %s32, 11
      %p399 = por %p397, %p398
      %p400 = scmp.ne.s32.totalorder %s391, %s392
      %p401 = scmp.eq.s32.totalorder %s32, 0
      %p402 = por %p400, %p401
      %p403 = scmp.ne.s32.totalorder %s391, %s392
      %p404 = scmp.eq.s32.totalorder %s33, 11
      %p405 = por %p403, %p404
      %p407 = scmp.ne.s32.totalorder %s392, %s406
      %p408 = scmp.eq.s32.totalorder %s33, 0
      %p409 = por %p407, %p408
      %s411 = sadd.s32 %s410, 1
      %p414 = scmp.eq.s32.totalorder %s27, 11
      %p415 = scmp.ne.s32.totalorder %s410, %s412
      %p416 = scmp.eq.s32.totalorder %s27, 0
      %p417 = por %p415, %p416
      %p418 = scmp.ne.s32.totalorder %s410, %s412
      %p419 = scmp.eq.s32.totalorder %s32, 11
      %p420 = por %p418, %p419
      %p421 = scmp.ne.s32.totalorder %s412, %s413
      %p422 = scmp.eq.s32.totalorder %s32, 0
      %p423 = por %p421, %p422
      %p424 = scmp.ne.s32.totalorder %s412, %s413
      %p425 = scmp.eq.s32.totalorder %s33, 11
      %p426 = por %p424, %p425
      %p428 = scmp.ne.s32.totalorder %s413, %s427
      %p429 = scmp.eq.s32.totalorder %s33, 0
      %p430 = por %p428, %p429
      %p431 = scmp.le.s32.totalorder 1, %s27
      %p432 = scmp.lt.s32.totalorder %s27, 13
      %p433 = pnand %p431, %p432
      %p434 = pneg %p433
      // Predicated region
      $region9: #{forward_rgb_features.3} parent=5 // pred_check
        _
      $region10: #{forward_rgb_features.3} parent=5 // pred_check_branch
        %436 = sbr.rel (%p433) target = $region12
      $region11: #{forward_rgb_features.3} parent=5 // pred_region
        %s437 = ssub.s32 %s27, 1
        // Predicated region
        $region13: #{forward_rgb_features.3} parent=11 // pred_check
          %p438 = pneg %p48
        $region14: #{forward_rgb_features.3} parent=11 // pred_check_branch
          %440 = sbr.rel (%p438) target = $region16
        $region15: #{forward_rgb_features.3} parent=11 // pred_region
          _
        $region16: #{forward_rgb_features.3} parent=11 // pred_fallthru
          _
        // Predicated region
        $region17: #{forward_rgb_features.3} parent=11 // pred_check
          %p441 = pneg %p381
        $region18: #{forward_rgb_features.3} parent=11 // pred_check_branch
          %443 = sbr.rel (%p441) target = $region20
        $region19: #{forward_rgb_features.3} parent=11 // pred_region
          _
        $region20: #{forward_rgb_features.3} parent=11 // pred_fallthru
          _
        // Predicated region
        $region21: #{forward_rgb_features.3} parent=11 // pred_check
          %p444 = pneg %p402
        $region22: #{forward_rgb_features.3} parent=11 // pred_check_branch
          %446 = sbr.rel (%p444) target = $region24
        $region23: #{forward_rgb_features.3} parent=11 // pred_region
          _
        $region24: #{forward_rgb_features.3} parent=11 // pred_fallthru
          _
      $region12: #{forward_rgb_features.3} parent=5 // pred_fallthru
        _
      %p447 = scmp.lt.s32.totalorder %s27, 12
      // Predicated region
      $region25: #{forward_rgb_features.3} parent=5 // pred_check
        %p448 = pneg %p447
      $region26: #{forward_rgb_features.3} parent=5 // pred_check_branch
        %450 = sbr.rel (%p448) target = $region28
      $region27: #{forward_rgb_features.3} parent=5 // pred_region
        // Predicated region
        $region29: #{forward_rgb_features.3} parent=27 // pred_check
          %p451 = pneg %p68
        $region30: #{forward_rgb_features.3} parent=27 // pred_check_branch
          %453 = sbr.rel (%p451) target = $region32
        $region31: #{forward_rgb_features.3} parent=27 // pred_region
          %p454 = scmp.lt.s32.totalorder %s27, 11
          %s455 = scalar_select %p454, %s27, 11
          %s456 = scalar_lea.vmem %s1, %s455
        $region32: #{forward_rgb_features.3} parent=27 // pred_fallthru
          _
        // Predicated region
        $region33: #{forward_rgb_features.3} parent=27 // pred_check
          %p457 = pneg %p94
        $region34: #{forward_rgb_features.3} parent=27 // pred_check_branch
          %459 = sbr.rel (%p457) target = $region36
        $region35: #{forward_rgb_features.3} parent=27 // pred_region
          %p460 = scmp.lt.s32.totalorder %s27, 11
          %s461 = scalar_select %p460, %s27, 11
          %s462 = scalar_lea.vmem %s2, %s461
        $region36: #{forward_rgb_features.3} parent=27 // pred_fallthru
          _
        // Predicated region
        $region37: #{forward_rgb_features.3} parent=27 // pred_check
          %p463 = pneg %p120
        $region38: #{forward_rgb_features.3} parent=27 // pred_check_branch
          %465 = sbr.rel (%p463) target = $region40
        $region39: #{forward_rgb_features.3} parent=27 // pred_region
          %s466 = sand.u32 %s110, 1
          %s467 = scalar_lea.sflag [#allocation6], %s466
          %s468 = sand.u32 %s110, 1
          %s469 = smul.addr %s468, 192
          %s470 = scalar_lea.vmem [#allocation5], %s469
          %s472 = ssub.s32 3072, 3072
          %473 = vsyncadd %s467, %s472
          %s474 = smul.addr %s27, 48
          %s475 = smul.addr %s474, 64
          %s476 = scalar_lea.hbm %s3, %s475
          %s477 = sshll.u32 %s470, 4
          %s478 = int_to_ptr.vmem [resolvable:$true] %s477
          %483 = dma.hbm_to_vmem [thread:$0]  %s476, 3072, %s478, %s467, 192, 192, 12
        $region40: #{forward_rgb_features.3} parent=27 // pred_fallthru
          _
        // Predicated region
        $region41: #{forward_rgb_features.3} parent=27 // pred_check
          %p484 = pneg %p146
        $region42: #{forward_rgb_features.3} parent=27 // pred_check_branch
          %486 = sbr.rel (%p484) target = $region44
        $region43: #{forward_rgb_features.3} parent=27 // pred_region
          %p487 = scmp.lt.s32.totalorder %s27, 11
          %s488 = scalar_select %p487, %s27, 11
          %s489 = smul.addr %s488, 3
          %s490 = scalar_lea.vmem %s4, %s489
        $region44: #{forward_rgb_features.3} parent=27 // pred_fallthru
          _
        // Predicated region
        $region45: #{forward_rgb_features.3} parent=27 // pred_check
          %p491 = pneg %p172
        $region46: #{forward_rgb_features.3} parent=27 // pred_check_branch
          %493 = sbr.rel (%p491) target = $region48
        $region47: #{forward_rgb_features.3} parent=27 // pred_region
          %s494 = sand.u32 %s27, 1
          %s495 = scalar_lea.sflag [#allocation8], %s494
          %s496 = sand.u32 %s162, 1
          %s497 = smul.addr %s496, 64
          %s498 = scalar_lea.vmem [#allocation7], %s497
          %s500 = ssub.s32 1024, 1024
          %501 = vsyncadd %s495, %s500
          %s502 = smul.addr %s27, 16
          %s503 = smul.addr %s502, 64
          %s504 = scalar_lea.hbm %s5, %s503
          %s505 = sshll.u32 %s498, 4
          %s506 = int_to_ptr.vmem [resolvable:$true] %s505
          %511 = dma.hbm_to_vmem [thread:$0]  %s504, 1024, %s506, %s495, 64, 64, 4
        $region48: #{forward_rgb_features.3} parent=27 // pred_fallthru
          _
        // Predicated region
        $region49: #{forward_rgb_features.3} parent=27 // pred_check
          %p512 = pneg %p198
        $region50: #{forward_rgb_features.3} parent=27 // pred_check_branch
          %514 = sbr.rel (%p512) target = $region52
        $region51: #{forward_rgb_features.3} parent=27 // pred_region
          %p515 = scmp.lt.s32.totalorder %s27, 11
          %s516 = scalar_select %p515, %s27, 11
          %s517 = scalar_lea.vmem %s6, %s516
        $region52: #{forward_rgb_features.3} parent=27 // pred_fallthru
          _
        // Predicated region
        $region53: #{forward_rgb_features.3} parent=27 // pred_check
          %p518 = pneg %p224
        $region54: #{forward_rgb_features.3} parent=27 // pred_check_branch
          %520 = sbr.rel (%p518) target = $region56
        $region55: #{forward_rgb_features.3} parent=27 // pred_region
          %p521 = scmp.lt.s32.totalorder %s27, 11
          %s522 = scalar_select %p521, %s27, 11
          %s523 = scalar_lea.vmem %s7, %s522
        $region56: #{forward_rgb_features.3} parent=27 // pred_fallthru
          _
        // Predicated region
        $region57: #{forward_rgb_features.3} parent=27 // pred_check
          %p524 = pneg %p250
        $region58: #{forward_rgb_features.3} parent=27 // pred_check_branch
          %526 = sbr.rel (%p524) target = $region60
        $region59: #{forward_rgb_features.3} parent=27 // pred_region
          %p527 = scmp.lt.s32.totalorder %s27, 11
          %s528 = scalar_select %p527, %s27, 11
          %s529 = scalar_lea.vmem %s8, %s528
        $region60: #{forward_rgb_features.3} parent=27 // pred_fallthru
          _
        // Predicated region
        $region61: #{forward_rgb_features.3} parent=27 // pred_check
          %p530 = pneg %p276
        $region62: #{forward_rgb_features.3} parent=27 // pred_check_branch
          %532 = sbr.rel (%p530) target = $region64
        $region63: #{forward_rgb_features.3} parent=27 // pred_region
          %p533 = scmp.lt.s32.totalorder %s27, 11
          %s534 = scalar_select %p533, %s27, 11
          %s535 = smul.addr %s534, 64
          %s536 = smul.addr %s535, 4
          %s537 = scalar_lea.vmem %s9, %s536
        $region64: #{forward_rgb_features.3} parent=27 // pred_fallthru
          _
        // Predicated region
        $region65: #{forward_rgb_features.3} parent=27 // pred_check
          %p538 = pneg %p302
        $region66: #{forward_rgb_features.3} parent=27 // pred_check_branch
          %540 = sbr.rel (%p538) target = $region68
        $region67: #{forward_rgb_features.3} parent=27 // pred_region
          %p541 = scmp.lt.s32.totalorder %s27, 11
          %s542 = scalar_select %p541, %s27, 11
          %s543 = smul.addr %s542, 4
          %s544 = scalar_lea.vmem %s10, %s543
        $region68: #{forward_rgb_features.3} parent=27 // pred_fallthru
          _
        // Predicated region
        $region69: #{forward_rgb_features.3} parent=27 // pred_check
          %p545 = pneg %p328
        $region70: #{forward_rgb_features.3} parent=27 // pred_check_branch
          %547 = sbr.rel (%p545) target = $region72
        $region71: #{forward_rgb_features.3} parent=27 // pred_region
          %s548 = sand.u32 %s27, 1
          %s549 = scalar_lea.sflag [#allocation8], %s548
          %s550 = sand.u32 %s318, 1
          %s551 = smul.addr %s550, 256
          %s552 = scalar_lea.vmem [#allocation9], %s551
          %s554 = ssub.s32 4096, 4096
          %555 = vsyncadd %s549, %s554
          %s556 = smul.addr %s27, 64
          %s557 = smul.addr %s556, 64
          %s558 = scalar_lea.hbm %s11, %s557
          %s559 = sshll.u32 %s552, 4
          %s560 = int_to_ptr.vmem [resolvable:$true] %s559
          %565 = dma.hbm_to_vmem [thread:$0]  %s558, 4096, %s560, %s549, 64, 64, 4
        $region72: #{forward_rgb_features.3} parent=27 // pred_fallthru
          _
        // Predicated region
        $region73: #{forward_rgb_features.3} parent=27 // pred_check
          %p566 = pneg %p354
        $region74: #{forward_rgb_features.3} parent=27 // pred_check_branch
          %568 = sbr.rel (%p566) target = $region76
        $region75: #{forward_rgb_features.3} parent=27 // pred_region
          %p569 = scmp.lt.s32.totalorder %s27, 11
          %s570 = scalar_select %p569, %s27, 11
          %s571 = scalar_lea.vmem %s12, %s570
        $region76: #{forward_rgb_features.3} parent=27 // pred_fallthru
          _
      $region28: #{forward_rgb_features.3} parent=5 // pred_fallthru
        _
      %p572 = scmp.le.s32.totalorder 1, %s27
      %p573 = scmp.lt.s32.totalorder %s27, 13
      %p574 = pnand %p572, %p573
      %p575 = pneg %p574
      // Predicated region
      $region77: #{forward_rgb_features.3} parent=5 // pred_check
        _
      $region78: #{forward_rgb_features.3} parent=5 // pred_check_branch
        %577 = sbr.rel (%p574) target = $region80
      $region79: #{forward_rgb_features.3} parent=5 // pred_region
        %s578 = ssub.s32 %s27, 1
        %s579 = sand.u32 %s113, 1
        %s580 = scalar_lea.sflag [#allocation6], %s579
        %s581 = sand.u32 %s113, 1
        %s582 = smul.addr %s581, 192
        %s583 = scalar_lea.vmem [#allocation5], %s582
        // Predicated region
        $region81: #{forward_rgb_features.3} parent=79 // pred_check
          %p584 = pneg %p126
        $region82: #{forward_rgb_features.3} parent=79 // pred_check_branch
          %586 = sbr.rel (%p584) target = $region84
        $region83: #{forward_rgb_features.3} parent=79 // pred_region
          %587 = dma.done %s580, 3072
        $region84: #{forward_rgb_features.3} parent=79 // pred_fallthru
          _
        %s588 = sand.u32 %s32, 1
        %s589 = scalar_lea.sflag [#allocation8], %s588
        %s590 = sand.u32 %s165, 1
        %s591 = smul.addr %s590, 64
        %s592 = scalar_lea.vmem [#allocation7], %s591
        // Predicated region
        $region85: #{forward_rgb_features.3} parent=79 // pred_check
          %p593 = pneg %p178
        $region86: #{forward_rgb_features.3} parent=79 // pred_check_branch
          %595 = sbr.rel (%p593) target = $region88
        $region87: #{forward_rgb_features.3} parent=79 // pred_region
          %596 = dma.done %s589, 1024
        $region88: #{forward_rgb_features.3} parent=79 // pred_fallthru
          _
        %s597 = sand.u32 %s32, 1
        %s598 = scalar_lea.sflag [#allocation8], %s597
        %s599 = sand.u32 %s321, 1
        %s600 = smul.addr %s599, 256
        %s601 = scalar_lea.vmem [#allocation9], %s600
        // Predicated region
        $region89: #{forward_rgb_features.3} parent=79 // pred_check
          %p602 = pneg %p334
        $region90: #{forward_rgb_features.3} parent=79 // pred_check_branch
          %604 = sbr.rel (%p602) target = $region92
        $region91: #{forward_rgb_features.3} parent=79 // pred_region
          %605 = dma.done %s598, 4096
        $region92: #{forward_rgb_features.3} parent=79 // pred_fallthru
          _
        %p606 = pneg %p48
        %p607 = pneg %p45
        %p608 = scmp.lt.s32.totalorder %s32, 11
        %s609 = scalar_select %p608, %s32, 11
        %s610 = scalar_lea.vmem %s1, %s609
        %p611 = pneg %p74
        %p612 = pneg %p71
        %p613 = scmp.lt.s32.totalorder %s32, 11
        %s614 = scalar_select %p613, %s32, 11
        %s615 = scalar_lea.vmem %s2, %s614
        %p616 = pneg %p100
        %p617 = pneg %p97
        %s618 = sand.u32 %s113, 1
        %s619 = scalar_lea.sflag [#allocation6], %s618
        %s620 = sand.u32 %s113, 1
        %s621 = smul.addr %s620, 192
        %s622 = scalar_lea.vmem [#allocation5], %s621
        %p623 = pneg %p126
        %p624 = pneg %p123
        %p625 = scmp.lt.s32.totalorder %s32, 11
        %s626 = scalar_select %p625, %s32, 11
        %s627 = smul.addr %s626, 3
        %s628 = scalar_lea.vmem %s4, %s627
        %p629 = pneg %p152
        %p630 = pneg %p149
        %s631 = sand.u32 %s32, 1
        %s632 = scalar_lea.sflag [#allocation8], %s631
        %s633 = sand.u32 %s165, 1
        %s634 = smul.addr %s633, 64
        %s635 = scalar_lea.vmem [#allocation7], %s634
        %p636 = pneg %p178
        %p637 = pneg %p175
        %p638 = scmp.lt.s32.totalorder %s32, 11
        %s639 = scalar_select %p638, %s32, 11
        %s640 = scalar_lea.vmem %s6, %s639
        %p641 = pneg %p204
        %p642 = pneg %p201
        %p643 = scmp.lt.s32.totalorder %s32, 11
        %s644 = scalar_select %p643, %s32, 11
        %s645 = scalar_lea.vmem %s7, %s644
        %p646 = pneg %p230
        %p647 = pneg %p227
        %p648 = scmp.lt.s32.totalorder %s32, 11
        %s649 = scalar_select %p648, %s32, 11
        %s650 = scalar_lea.vmem %s8, %s649
        %p651 = pneg %p256
        %p652 = pneg %p253
        %p653 = scmp.lt.s32.totalorder %s32, 11
        %s654 = scalar_select %p653, %s32, 11
        %s655 = smul.addr %s654, 64
        %s656 = smul.addr %s655, 4
        %s657 = scalar_lea.vmem %s9, %s656
        %p658 = pneg %p282
        %p659 = pneg %p279
        %p660 = scmp.lt.s32.totalorder %s32, 11
        %s661 = scalar_select %p660, %s32, 11
        %s662 = smul.addr %s661, 4
        %s663 = scalar_lea.vmem %s10, %s662
        %p664 = pneg %p308
        %p665 = pneg %p305
        %s666 = sand.u32 %s32, 1
        %s667 = scalar_lea.sflag [#allocation8], %s666
        %s668 = sand.u32 %s321, 1
        %s669 = smul.addr %s668, 256
        %s670 = scalar_lea.vmem [#allocation9], %s669
        %p671 = pneg %p334
        %p672 = pneg %p331
        %p673 = scmp.lt.s32.totalorder %s32, 11
        %s674 = scalar_select %p673, %s32, 11
        %s675 = scalar_lea.vmem %s12, %s674
        %p676 = pneg %p360
        %p677 = pneg %p357
        %p678 = pneg %p381
        %p679 = pneg %p378
        %p680 = pneg %p402
        %p681 = pneg %p399
        %p682 = pneg %p423
        %p683 = pneg %p420
        %p684 = scmp.lt.s32.totalorder %s32, 11
        %s685 = scalar_select %p684, %s32, 11
        %s686 = scalar_lea.vmem %s1, %s685
        %p687 = scmp.lt.s32.totalorder %s32, 11
        %s688 = scalar_select %p687, %s32, 11
        %s689 = scalar_lea.vmem %s2, %s688
        %p690 = scmp.lt.s32.totalorder %s32, 11
        %s691 = scalar_select %p690, %s32, 11
        %s692 = smul.addr %s691, 3
        %s693 = scalar_lea.vmem %s4, %s692
        %p694 = scmp.lt.s32.totalorder %s32, 11
        %s695 = scalar_select %p694, %s32, 11
        %s696 = scalar_lea.vmem %s6, %s695
        %p697 = scmp.lt.s32.totalorder %s32, 11
        %s698 = scalar_select %p697, %s32, 11
        %s699 = scalar_lea.vmem %s7, %s698
        %p700 = scmp.lt.s32.totalorder %s32, 11
        %s701 = scalar_select %p700, %s32, 11
        %s702 = scalar_lea.vmem %s8, %s701
        %p703 = scmp.lt.s32.totalorder %s32, 11
        %s704 = scalar_select %p703, %s32, 11
        %s705 = smul.addr %s704, 64
        %s706 = smul.addr %s705, 4
        %s707 = scalar_lea.vmem %s9, %s706
        %p708 = scmp.lt.s32.totalorder %s32, 11
        %s709 = scalar_select %p708, %s32, 11
        %s710 = smul.addr %s709, 4
        %s711 = scalar_lea.vmem %s10, %s710
        %p712 = scmp.lt.s32.totalorder %s32, 11
        %s713 = scalar_select %p712, %s32, 11
        %s714 = scalar_lea.vmem %s12, %s713
        %p716 = scmp.eq.s32.totalorder %s32, 0
        // Predicated region
        $region93: #{forward_rgb_features.3} parent=79 // pred_check
          %p717 = pneg %p716
        $region94: #{forward_rgb_features.3} parent=79 // pred_check_branch
          %719 = sbr.rel (%p717) target = $region96
        $region95: #{forward_rgb_features.3} parent=79 // pred_region
          %v720 = vld [vmem:[%s0] sm:$0xff]
          %v721 = vld [vmem:[%s0 + $0x8] sm:$0xff]
          %v722 = vld [vmem:[%s0 + $0x10] sm:$0xff]
          %v723 = vld [vmem:[%s0 + $0x18] sm:$0xff]
          %v724 = vld [vmem:[%s0 + $0x20] sm:$0xff]
          %v725 = vld [vmem:[%s0 + $0x28] sm:$0xff]
          %726 = vst [vmem:[#allocation2] sm:$0xff] %v720
          %727 = vst [vmem:[#allocation2 + $0x8] sm:$0xff] %v721
          %728 = vst [vmem:[#allocation2 + $0x10] sm:$0xff] %v722
          %729 = vst [vmem:[#allocation2 + $0x18] sm:$0xff] %v723
          %730 = vst [vmem:[#allocation2 + $0x20] sm:$0xff] %v724
          %731 = vst [vmem:[#allocation2 + $0x28] sm:$0xff] %v725
        $region96: #{forward_rgb_features.3} parent=79 // pred_fallthru
          _
        %v732 = vld [vmem:[#allocation2] sm:$0xff]
        %v733 = vld [vmem:[#allocation2 + $0x8] sm:$0xff]
        %v734 = vld [vmem:[#allocation2 + $0x10] sm:$0xff]
        %v735 = vld [vmem:[#allocation2 + $0x18] sm:$0xff]
        %v736 = vld [vmem:[#allocation2 + $0x20] sm:$0xff]
        %v737 = vld [vmem:[#allocation2 + $0x28] sm:$0xff]
        %v738 = vld [vmem:[%s686] sm:$0x1]
        %v739 = vld [vmem:[%s689] sm:$0x1]
        %740 = vadd.xlane.f32.xlu0 %v732
        %v741 = vpop.xlane.xlu0 %740
        %742 = vadd.xlane.f32.xlu0 %v733
        %v743 = vpop.xlane.xlu0 %742
        %744 = vadd.xlane.f32.xlu0 %v734
        %v745 = vpop.xlane.xlu0 %744
        %746 = vadd.xlane.f32.xlu0 %v735
        %v747 = vpop.xlane.xlu0 %746
        %748 = vadd.xlane.f32.xlu0 %v736
        %v749 = vpop.xlane.xlu0 %748
        %750 = vadd.xlane.f32.xlu0 %v737
        %v751 = vpop.xlane.xlu0 %750
        %v752 = vrcp.pop 128.0
        %v753 = vmul.f32 %v741, %v752
        %v754 = vmul.f32 %v743, %v752
        %v755 = vmul.f32 %v745, %v752
        %v756 = vmul.f32 %v747, %v752
        %v757 = vmul.f32 %v749, %v752
        %v758 = vmul.f32 %v751, %v752
        %v759 = vsub.f32 %v732, %v753
        %v760 = vsub.f32 %v733, %v754
        %v761 = vsub.f32 %v734, %v755
        %v762 = vsub.f32 %v735, %v756
        %v763 = vsub.f32 %v736, %v757
        %v764 = vsub.f32 %v737, %v758
        %v765 = vmul.f32 %v759, %v759
        %v766 = vmul.f32 %v760, %v760
        %v767 = vmul.f32 %v761, %v761
        %v768 = vmul.f32 %v762, %v762
        %v769 = vmul.f32 %v763, %v763
        %v770 = vmul.f32 %v764, %v764
        %771 = vadd.xlane.f32.xlu0 %v765
        %v772 = vpop.xlane.xlu0 %771
        %773 = vadd.xlane.f32.xlu0 %v766
        %v774 = vpop.xlane.xlu0 %773
        %775 = vadd.xlane.f32.xlu0 %v767
        %v776 = vpop.xlane.xlu0 %775
        %777 = vadd.xlane.f32.xlu0 %v768
        %v778 = vpop.xlane.xlu0 %777
        %779 = vadd.xlane.f32.xlu0 %v769
        %v780 = vpop.xlane.xlu0 %779
        %781 = vadd.xlane.f32.xlu0 %v770
        %v782 = vpop.xlane.xlu0 %781
        %v783 = vmul.f32 %v772, %v752
        %v784 = vmul.f32 %v774, %v752
        %v785 = vmul.f32 %v776, %v752
        %v786 = vmul.f32 %v778, %v752
        %v787 = vmul.f32 %v780, %v752
        %v788 = vmul.f32 %v782, %v752
        %v789 = vadd.f32 %v783, 1e-06
        %v790 = vadd.f32 %v784, 1e-06
        %v791 = vadd.f32 %v785, 1e-06
        %v792 = vadd.f32 %v786, 1e-06
        %v793 = vadd.f32 %v787, 1e-06
        %v794 = vadd.f32 %v788, 1e-06
        %v795 = vrsqrt.pop %v789
        %v796 = vrsqrt.pop %v790
        %v797 = vrsqrt.pop %v791
        %v798 = vrsqrt.pop %v792
        %v799 = vrsqrt.pop %v793
        %v800 = vrsqrt.pop %v794
        %v801 = vmul.f32 %v759, %v795
        %v802 = vmul.f32 %v760, %v796
        %v803 = vmul.f32 %v761, %v797
        %v804 = vmul.f32 %v762, %v798
        %v805 = vmul.f32 %v763, %v799
        %v806 = vmul.f32 %v764, %v800
        %v808 = vlaneseq
        %v809 = vshrl.u32 %v808, 7
        %v810 = vsub.s32 0, %v809
        %v811 = vrot.slane %v738, %v810
        %v813 = vmul.f32 %v801, %v811
        %v814 = vmul.f32 %v802, %v811
        %v815 = vmul.f32 %v803, %v811
        %v816 = vmul.f32 %v804, %v811
        %v817 = vmul.f32 %v805, %v811
        %v818 = vmul.f32 %v806, %v811
        %v820 = vlaneseq
        %v821 = vshrl.u32 %v820, 7
        %v822 = vsub.s32 0, %v821
        %v823 = vrot.slane %v739, %v822
        %v825 = vadd.f32 %v813, %v823
        %v826 = vadd.f32 %v814, %v823
        %v827 = vadd.f32 %v815, %v823
        %v828 = vadd.f32 %v816, %v823
        %v829 = vadd.f32 %v817, %v823
        %v830 = vadd.f32 %v818, %v823
        %v831 = vpack.c.bf16 %v826, %v825
        %v832 = vpack.c.bf16 %v828, %v827
        %v833 = vpack.c.bf16 %v830, %v829
        %v834 = vld [vmem:[%s583] sm:$0xff]
        %v835 = vld [vmem:[%s583 + $0x8] sm:$0xf]
        %v836 = vld [vmem:[%s583 + $0xc] sm:$0xff]
        %v837 = vld [vmem:[%s583 + $0x14] sm:$0xf]
        %v838 = vld [vmem:[%s583 + $0x18] sm:$0xff]
        %v839 = vld [vmem:[%s583 + $0x20] sm:$0xf]
        %v840 = vld [vmem:[%s583 + $0x24] sm:$0xff]
        %v841 = vld [vmem:[%s583 + $0x2c] sm:$0xf]
        %v842 = vld [vmem:[%s583 + $0x30] sm:$0xff]
        %v843 = vld [vmem:[%s583 + $0x38] sm:$0xf]
        %v844 = vld [vmem:[%s583 + $0x3c] sm:$0xff]
        %v845 = vld [vmem:[%s583 + $0x44] sm:$0xf]
        %v846 = vld [vmem:[%s583 + $0x48] sm:$0xff]
        %v847 = vld [vmem:[%s583 + $0x50] sm:$0xf]
        %v848 = vld [vmem:[%s583 + $0x54] sm:$0xff]
        %v849 = vld [vmem:[%s583 + $0x5c] sm:$0xf]
        %v850 = vld [vmem:[%s583 + $0x60] sm:$0xff]
        %v851 = vld [vmem:[%s583 + $0x68] sm:$0xf]
        %v852 = vld [vmem:[%s583 + $0x6c] sm:$0xff]
        %v853 = vld [vmem:[%s583 + $0x74] sm:$0xf]
        %v854 = vld [vmem:[%s583 + $0x78] sm:$0xff]
        %v855 = vld [vmem:[%s583 + $0x80] sm:$0xf]
        %v856 = vld [vmem:[%s583 + $0x84] sm:$0xff]
        %v857 = vld [vmem:[%s583 + $0x8c] sm:$0xf]
        %v858 = vld [vmem:[%s583 + $0x90] sm:$0xff]
        %v859 = vld [vmem:[%s583 + $0x98] sm:$0xf]
        %v860 = vld [vmem:[%s583 + $0x9c] sm:$0xff]
        %v861 = vld [vmem:[%s583 + $0xa4] sm:$0xf]
        %v862 = vld [vmem:[%s583 + $0xa8] sm:$0xff]
        %v863 = vld [vmem:[%s583 + $0xb0] sm:$0xf]
        %v864 = vld [vmem:[%s583 + $0xb4] sm:$0xff]
        %v865 = vld [vmem:[%s583 + $0xbc] sm:$0xf]
        %v866 = vld [vmem:[%s693] sm:$0x7]
        %v868 = vlaneseq
        %v869 = vshrl.u32 %v868, 7
        %v870 = vsub.s32 0, %v869
        %v871 = vrot.slane %v866, %v870
        %v872 = vlaneseq
        %v873 = vshrl.u32 %v872, 7
        %v874 = vsub.s32 1, %v873
        %v875 = vrot.slane %v866, %v874
        %v876 = vlaneseq
        %v877 = vshrl.u32 %v876, 7
        %v878 = vsub.s32 2, %v877
        %v879 = vrot.slane %v866, %v878
        %v915 = vunpack.c.l.b16 %v834
        %v916 = vunpack.c.h.b16 %v834
        %v917 = vunpack.c.l.b16 %v835
        %v918 = vunpack.c.l.b16 %v836
        %v919 = vunpack.c.h.b16 %v836
        %v920 = vunpack.c.l.b16 %v837
        %v921 = vunpack.c.l.b16 %v838
        %v922 = vunpack.c.h.b16 %v838
        %v923 = vunpack.c.l.b16 %v839
        %v924 = vunpack.c.l.b16 %v840
        %v925 = vunpack.c.h.b16 %v840
        %v926 = vunpack.c.l.b16 %v841
        %v927 = vunpack.c.l.b16 %v842
        %v928 = vunpack.c.h.b16 %v842
        %v929 = vunpack.c.l.b16 %v843
        %v930 = vunpack.c.l.b16 %v844
        %v931 = vunpack.c.h.b16 %v844
        %v932 = vunpack.c.l.b16 %v845
        %v933 = vunpack.c.l.b16 %v846
        %v934 = vunpack.c.h.b16 %v846
        %v935 = vunpack.c.l.b16 %v847
        %v936 = vunpack.c.l.b16 %v848
        %v937 = vunpack.c.h.b16 %v848
        %v938 = vunpack.c.l.b16 %v849
        %v939 = vunpack.c.l.b16 %v850
        %v940 = vunpack.c.h.b16 %v850
        %v941 = vunpack.c.l.b16 %v851
        %v942 = vunpack.c.l.b16 %v852
        %v943 = vunpack.c.h.b16 %v852
        %v944 = vunpack.c.l.b16 %v853
        %v945 = vunpack.c.l.b16 %v854
        %v946 = vunpack.c.h.b16 %v854
        %v947 = vunpack.c.l.b16 %v855
        %v948 = vunpack.c.l.b16 %v856
        %v949 = vunpack.c.h.b16 %v856
        %v950 = vunpack.c.l.b16 %v857
        %v951 = vunpack.c.l.b16 %v858
        %v952 = vunpack.c.h.b16 %v858
        %v953 = vunpack.c.l.b16 %v859
        %v954 = vunpack.c.l.b16 %v860
        %v955 = vunpack.c.h.b16 %v860
        %v956 = vunpack.c.l.b16 %v861
        %v957 = vunpack.c.l.b16 %v862
        %v958 = vunpack.c.h.b16 %v862
        %v959 = vunpack.c.l.b16 %v863
        %v960 = vunpack.c.l.b16 %v864
        %v961 = vunpack.c.h.b16 %v864
        %v962 = vunpack.c.l.b16 %v865
        %v963 = vpack.c.b16 %v918, %v915
        %v964 = vpack.c.b16 %v919, %v916
        %v965 = vpack.c.b16 %v920, %v917
        %v966 = vpack.c.b16 %v924, %v921
        %v967 = vpack.c.b16 %v925, %v922
        %v968 = vpack.c.b16 %v926, %v923
        %v969 = vpack.c.b16 %v930, %v927
        %v970 = vpack.c.b16 %v931, %v928
        %v971 = vpack.c.b16 %v932, %v929
        %v972 = vpack.c.b16 %v936, %v933
        %v973 = vpack.c.b16 %v937, %v934
        %v974 = vpack.c.b16 %v938, %v935
        %v975 = vpack.c.b16 %v942, %v939
        %v976 = vpack.c.b16 %v943, %v940
        %v977 = vpack.c.b16 %v944, %v941
        %v978 = vpack.c.b16 %v948, %v945
        %v979 = vpack.c.b16 %v949, %v946
        %v980 = vpack.c.b16 %v950, %v947
        %v981 = vpack.c.b16 %v954, %v951
        %v982 = vpack.c.b16 %v955, %v952
        %v983 = vpack.c.b16 %v956, %v953
        %v984 = vpack.c.b16 %v960, %v957
        %v985 = vpack.c.b16 %v961, %v958
        %v986 = vpack.c.b16 %v962, %v959
        %1011 = vmatprep.subr.bf16.mxu0 %v964
        %1012 = vmatpush1.bf16.msra.mxu0 %v963
        %1013 = vmatprep.subr.bf16.mxu0 %v967
        %1014 = vmatpush1.bf16.msra.mxu0 %v966
        %1015 = vmatprep.subr.bf16.mxu0 %v970
        %1016 = vmatpush1.bf16.msra.mxu0 %v969
        %1017 = vmatprep.subr.bf16.mxu0 %v973
        %1018 = vmatpush1.bf16.msra.mxu0 %v972
        %1019 = vmatprep.subr.bf16.mxu0 %v976
        %1020 = vmatpush1.bf16.msra.mxu0 %v975
        %1021 = vmatprep.subr.bf16.mxu0 %v979
        %1022 = vmatpush1.bf16.msra.mxu0 %v978
        %1023 = vmatprep.subr.bf16.mxu0 %v982
        %1024 = vmatpush1.bf16.msra.mxu0 %v981
        %1025 = vmatprep.subr.bf16.mxu0 %v985
        %1026 = vmatpush1.bf16.msra.mxu0 %v984
        %1027 = vmatprep.subr.bf16.mxu0 0
        %1028 = vmatpush1.bf16.msra.mxu0 0
        %1029 = vmatprep.subr.bf16.mxu0 0
        %1030 = vmatpush1.bf16.msra.mxu0 0
        %1031 = vmatprep.subr.bf16.mxu0 0
        %1032 = vmatpush1.bf16.msra.mxu0 0
        %1033 = vmatprep.subr.bf16.mxu0 0
        %1034 = vmatpush1.bf16.msra.mxu0 0
        %1035 = vmatprep.subr.bf16.mxu0 0
        %1036 = vmatpush1.bf16.msra.mxu0 0
        %1037 = vmatprep.subr.bf16.mxu0 0
        %1038 = vmatpush1.bf16.msra.mxu0 0
        %1039 = vmatprep.subr.bf16.mxu0 0
        %1040 = vmatpush1.bf16.msra.mxu0 0
        %1041 = vmatprep.subr.bf16.mxu0 0
        %1042 = vmatpush1.bf16.msra.mxu0 0
        %1043 = vmatprep.mubr.bf16.mxu0 0
        %1044 = vmatmul.mubr.bf16.gmra.mrb[0].mxu0 %v831
        %v1045 = vpop.f32.mrb[0].mxu0
        %v1046 = vadd.f32 %v871, %v1045
        %v1047 = vpop.f32.mrb[0].mxu0
        %v1048 = vadd.f32 %v875, %v1047
        %v1049 = vpop.f32.mrb[0].mxu0
        %v1050 = vadd.f32 %v871, %v1049
        %v1051 = vpop.f32.mrb[0].mxu0
        %v1052 = vadd.f32 %v875, %v1051
        %1053 = vmatprep.mubr.bf16.mxu0 0
        %1054 = vmatmul.mubr.bf16.gmra.mrb[0].mxu0 %v832
        %v1055 = vpop.f32.mrb[0].mxu0
        %v1056 = vadd.f32 %v871, %v1055
        %v1057 = vpop.f32.mrb[0].mxu0
        %v1058 = vadd.f32 %v875, %v1057
        %v1059 = vpop.f32.mrb[0].mxu0
        %v1060 = vadd.f32 %v871, %v1059
        %v1061 = vpop.f32.mrb[0].mxu0
        %v1062 = vadd.f32 %v875, %v1061
        %1063 = vmatprep.mubr.bf16.mxu0 0
        %1064 = vmatmul.mubr.bf16.gmra.mrb[0].mxu0 %v833
        %v1065 = vpop.f32.mrb[0].mxu0
        %v1066 = vadd.f32 %v871, %v1065
        %v1067 = vpop.f32.mrb[0].mxu0
        %v1068 = vadd.f32 %v875, %v1067
        %v1069 = vpop.f32.mrb[0].mxu0
        %v1070 = vadd.f32 %v871, %v1069
        %v1071 = vpop.f32.mrb[0].mxu0
        %v1072 = vadd.f32 %v875, %v1071
        %1073 = vdwg.mxu0
        %1074 = vmatprep.subr.bf16.mxu0 0
        %1075 = vmatpush1.bf16.msra.mxu0 %v965
        %1076 = vmatprep.subr.bf16.mxu0 0
        %1077 = vmatpush1.bf16.msra.mxu0 %v968
        %1078 = vmatprep.subr.bf16.mxu0 0
        %1079 = vmatpush1.bf16.msra.mxu0 %v971
        %1080 = vmatprep.subr.bf16.mxu0 0
        %1081 = vmatpush1.bf16.msra.mxu0 %v974
        %1082 = vmatprep.subr.bf16.mxu0 0
        %1083 = vmatpush1.bf16.msra.mxu0 %v977
        %1084 = vmatprep.subr.bf16.mxu0 0
        %1085 = vmatpush1.bf16.msra.mxu0 %v980
        %1086 = vmatprep.subr.bf16.mxu0 0
        %1087 = vmatpush1.bf16.msra.mxu0 %v983
        %1088 = vmatprep.subr.bf16.mxu0 0
        %1089 = vmatpush1.bf16.msra.mxu0 %v986
        %1090 = vmatprep.subr.bf16.mxu0 0
        %1091 = vmatpush1.bf16.msra.mxu0 0
        %1092 = vmatprep.subr.bf16.mxu0 0
        %1093 = vmatpush1.bf16.msra.mxu0 0
        %1094 = vmatprep.subr.bf16.mxu0 0
        %1095 = vmatpush1.bf16.msra.mxu0 0
        %1096 = vmatprep.subr.bf16.mxu0 0
        %1097 = vmatpush1.bf16.msra.mxu0 0
        %1098 = vmatprep.subr.bf16.mxu0 0
        %1099 = vmatpush1.bf16.msra.mxu0 0
        %1100 = vmatprep.subr.bf16.mxu0 0
        %1101 = vmatpush1.bf16.msra.mxu0 0
        %1102 = vmatprep.subr.bf16.mxu0 0
        %1103 = vmatpush1.bf16.msra.mxu0 0
        %1104 = vmatprep.subr.bf16.mxu0 0
        %1105 = vmatpush1.bf16.msra.mxu0 0
        %1106 = vmatprep.mubr.bf16.mxu0 0
        %1107 = vmatmul.mubr.bf16.gmra.mrb[0].mxu0 %v831
        %v1108 = vpop.f32.mrb[0].mxu0
        %v1109 = vadd.f32 %v879, %v1108
        %v1110 = vpop.f32.mrb[0].mxu0
        %v1111 = vpop.f32.mrb[0].mxu0
        %v1112 = vadd.f32 %v879, %v1111
        %v1113 = vpop.f32.mrb[0].mxu0
        %1114 = vmatprep.mubr.bf16.mxu0 0
        %1115 = vmatmul.mubr.bf16.gmra.mrb[0].mxu0 %v832
        %v1116 = vpop.f32.mrb[0].mxu0
        %v1117 = vadd.f32 %v879, %v1116
        %v1118 = vpop.f32.mrb[0].mxu0
        %v1119 = vpop.f32.mrb[0].mxu0
        %v1120 = vadd.f32 %v879, %v1119
        %v1121 = vpop.f32.mrb[0].mxu0
        %1122 = vmatprep.mubr.bf16.mxu0 0
        %1123 = vmatmul.mubr.bf16.gmra.mrb[0].mxu0 %v833
        %v1124 = vpop.f32.mrb[0].mxu0
        %v1125 = vadd.f32 %v879, %v1124
        %v1126 = vpop.f32.mrb[0].mxu0
        %v1127 = vpop.f32.mrb[0].mxu0
        %v1128 = vadd.f32 %v879, %v1127
        %v1129 = vpop.f32.mrb[0].mxu0
        %1130 = vdwg.mxu0
        %1131 = vst [vmem:[#allocation3] sm:$0xff] %v1046
        %1132 = vst [vmem:[#allocation3 + $0x8] sm:$0xff] %v1048
        %1133 = vst [vmem:[#allocation3 + $0x10] sm:$0xff] %v1109
        %1134 = vst [vmem:[#allocation3 + $0x18] sm:$0xff] %v1050
        %1135 = vst [vmem:[#allocation3 + $0x20] sm:$0xff] %v1052
        %1136 = vst [vmem:[#allocation3 + $0x28] sm:$0xff] %v1112
        %1137 = vst [vmem:[#allocation3 + $0x30] sm:$0xff] %v1056
        %1138 = vst [vmem:[#allocation3 + $0x38] sm:$0xff] %v1058
        %1139 = vst [vmem:[#allocation3 + $0x40] sm:$0xff] %v1117
        %1140 = vst [vmem:[#allocation3 + $0x48] sm:$0xff] %v1060
        %1141 = vst [vmem:[#allocation3 + $0x50] sm:$0xff] %v1062
        %1142 = vst [vmem:[#allocation3 + $0x58] sm:$0xff] %v1120
        %1143 = vst [vmem:[#allocation3 + $0x60] sm:$0xff] %v1066
        %1144 = vst [vmem:[#allocation3 + $0x68] sm:$0xff] %v1068
        %1145 = vst [vmem:[#allocation3 + $0x70] sm:$0xff] %v1125
        %1146 = vst [vmem:[#allocation3 + $0x78] sm:$0xff] %v1070
        %1147 = vst [vmem:[#allocation3 + $0x80] sm:$0xff] %v1072
        %1148 = vst [vmem:[#allocation3 + $0x88] sm:$0xff] %v1128
        %v1149 = vlaneseq
        %v1150 = vand.u32 %v1149, 127
        %vm1151 = vcmp.lt.s32.totalorder %v1150, 17
        %v1152 = vsel %vm1151, 0.0, -1e+30
        %v1153 = vld [vmem:[#allocation3] sm:$0xff]
        %v1154 = vld [vmem:[#allocation3 + $0x18] sm:$0xff]
        %v1155 = vld [vmem:[#allocation3 + $0x30] sm:$0xff]
        %v1156 = vpack.c.bf16 %v1154, %v1153
        %v1157 = vpack.c.bf16 %v1155, %v1155
        %v1158 = vld [vmem:[#allocation3 + $0x8] sm:$0xff]
        %v1159 = vld [vmem:[#allocation3 + $0x20] sm:$0xff]
        %v1160 = vld [vmem:[#allocation3 + $0x38] sm:$0xff]
        %v1161 = vpack.c.bf16 %v1159, %v1158
        %v1162 = vpack.c.bf16 %v1160, %v1160
        %v1163 = vld [vmem:[#allocation3 + $0x10] sm:$0xff]
        %v1164 = vld [vmem:[#allocation3 + $0x28] sm:$0xff]
        %v1165 = vld [vmem:[#allocation3 + $0x40] sm:$0xff]
        %v1166 = vpack.c.bf16 %v1164, %v1163
        %v1167 = vpack.c.bf16 %v1165, %v1165
        %vm1168 = vcmask 261120
        %v1170 = vsel %vm1168, %v1156, 0
        %v1173 = vsel %vm1168, %v1157, 0
        %v1176 = vsel %vm1168, %v1161, 0
        %v1179 = vsel %vm1168, %v1162, 0
        %1181 = vmatprep.subr.bf16.mxu0 0
        %1182 = vmatpush1.bf16.xpose.msra.mxu0 %v1176
        %1183 = vmatprep.subr.bf16.mxu0 0
        %1184 = vmatpush1.bf16.xpose.msra.mxu0 %v1179
        %1185 = vmatprep.subr.bf16.mxu0 0
        %1186 = vmatpush1.bf16.xpose.msra.mxu0 0
        %1187 = vmatprep.subr.bf16.mxu0 0
        %1188 = vmatpush1.bf16.xpose.msra.mxu0 0
        %1189 = vmatprep.subr.bf16.mxu0 0
        %1190 = vmatpush1.bf16.xpose.msra.mxu0 0
        %1191 = vmatprep.subr.bf16.mxu0 0
        %1192 = vmatpush1.bf16.xpose.msra.mxu0 0
        %1193 = vmatprep.subr.bf16.mxu0 0
        %1194 = vmatpush1.bf16.xpose.msra.mxu0 0
        %1195 = vmatprep.subr.bf16.mxu0 0
        %1196 = vmatpush1.bf16.xpose.msra.mxu0 0
        %1197 = vmatprep.subr.bf16.mxu0 0
        %1198 = vmatpush1.bf16.xpose.msra.mxu0 0
        %1199 = vmatprep.subr.bf16.mxu0 0
        %1200 = vmatpush1.bf16.xpose.msra.mxu0 0
        %1201 = vmatprep.subr.bf16.mxu0 0
        %1202 = vmatpush1.bf16.xpose.msra.mxu0 0
        %1203 = vmatprep.subr.bf16.mxu0 0
        %1204 = vmatpush1.bf16.xpose.msra.mxu0 0
        %1205 = vmatprep.subr.bf16.mxu0 0
        %1206 = vmatpush1.bf16.xpose.msra.mxu0 0
        %1207 = vmatprep.subr.bf16.mxu0 0
        %1208 = vmatpush1.bf16.xpose.msra.mxu0 0
        %1209 = vmatprep.subr.bf16.mxu0 0
        %1210 = vmatpush1.bf16.xpose.msra.mxu0 0
        %1211 = vmatprep.subr.bf16.mxu0 0
        %1212 = vmatpush1.bf16.xpose.msra.mxu0 0
        %1213 = vmatprep.mubr.bf16.mxu0 0
        %1214 = vmatmul.mubr.bf16.gmra.mrb[0].mxu0 %v1170
        %v1215 = vpop.f32.mrb[0].mxu0
        %v1216 = vadd.f32 %v1152, %v1215
        %v1217 = vpop.f32.mrb[0].mxu0
        %v1218 = vpop.f32.mrb[0].mxu0
        %v1219 = vadd.f32 %v1152, %v1218
        %v1220 = vpop.f32.mrb[0].mxu0
        %1221 = vmatprep.mubr.bf16.mxu0 0
        %1222 = vmatmul.mubr.bf16.gmra.mrb[0].mxu0 %v1173
        %v1223 = vpop.f32.mrb[0].mxu0
        %v1224 = vadd.f32 %v1152, %v1223
        %v1225 = vpop.f32.mrb[0].mxu0
        %v1226 = vpop.f32.mrb[0].mxu0
        %v1227 = vpop.f32.mrb[0].mxu0
        %1228 = vdwg.mxu0
        %vm1229 = vcmask 195584
        %v1230 = vsel %vm1229, %v1216, -inf
        %1231 = vmax.xlane.f32.xlu0 %v1230
        %v1232 = vpop.xlane.xlu0 %1231
        %v1233 = vsel %vm1229, %v1219, -inf
        %1234 = vmax.xlane.f32.xlu0 %v1233
        %v1235 = vpop.xlane.xlu0 %1234
        %v1236 = vsel %vm1229, %v1224, -inf
        %1237 = vmax.xlane.f32.xlu0 %v1236
        %v1238 = vpop.xlane.xlu0 %1237
        %v1239 = vsub.f32 %v1216, %v1232
        %v1240 = vsub.f32 %v1219, %v1235
        %v1241 = vsub.f32 %v1224, %v1238
        %v1242 = vmul.f32 %v1239, 1.442695
        %v1243 = vpow.pop %v1242
        %v1244 = vmul.f32 %v1240, 1.442695
        %v1245 = vpow.pop %v1244
        %v1246 = vmul.f32 %v1241, 1.442695
        %v1247 = vpow.pop %v1246
        %v1248 = vsel %vm1229, %v1243, 0.0
        %1249 = vadd.xlane.f32.xlu0 %v1248
        %v1250 = vpop.xlane.xlu0 %1249
        %v1251 = vsel %vm1229, %v1245, 0.0
        %1252 = vadd.xlane.f32.xlu0 %v1251
        %v1253 = vpop.xlane.xlu0 %1252
        %v1254 = vsel %vm1229, %v1247, 0.0
        %1255 = vadd.xlane.f32.xlu0 %v1254
        %v1256 = vpop.xlane.xlu0 %1255
        %v1257 = vrcp.pop %v1250
        %v1258 = vrcp.pop %v1253
        %v1259 = vrcp.pop %v1256
        %v1260 = vmul.f32 %v1243, %v1257
        %v1261 = vmul.f32 %v1245, %v1258
        %v1262 = vmul.f32 %v1247, %v1259
        %v1263 = vpack.c.bf16 %v1261, %v1260
        %v1264 = vpack.c.bf16 %v1262, %v1262
        %v1266 = vsel %vm1229, %v1263, 0
        %v1269 = vsel %vm1229, %v1264, 0
        %vm1271 = vcmask 1043456
        %v1273 = vsel %vm1271, %v1167, 0
        %1275 = vmatprep.subr.bf16.mxu0 0
        %1276 = vmatpush1.bf16.msra.mxu0 %v1166
        %1277 = vmatprep.subr.bf16.mxu0 0
        %1278 = vmatpush1.bf16.msra.mxu0 %v1273
        %1279 = vmatprep.subr.bf16.mxu0 0
        %1280 = vmatpush1.bf16.msra.mxu0 0
        %1281 = vmatprep.subr.bf16.mxu0 0
        %1282 = vmatpush1.bf16.msra.mxu0 0
        %1283 = vmatprep.subr.bf16.mxu0 0
        %1284 = vmatpush1.bf16.msra.mxu0 0
        %1285 = vmatprep.subr.bf16.mxu0 0
        %1286 = vmatpush1.bf16.msra.mxu0 0
        %1287 = vmatprep.subr.bf16.mxu0 0
        %1288 = vmatpush1.bf16.msra.mxu0 0
        %1289 = vmatprep.subr.bf16.mxu0 0
        %1290 = vmatpush1.bf16.msra.mxu0 0
        %1291 = vmatprep.subr.bf16.mxu0 0
        %1292 = vmatpush1.bf16.msra.mxu0 0
        %1293 = vmatprep.subr.bf16.mxu0 0
        %1294 = vmatpush1.bf16.msra.mxu0 0
        %1295 = vmatprep.subr.bf16.mxu0 0
        %1296 = vmatpush1.bf16.msra.mxu0 0
        %1297 = vmatprep.subr.bf16.mxu0 0
        %1298 = vmatpush1.bf16.msra.mxu0 0
        %1299 = vmatprep.subr.bf16.mxu0 0
        %1300 = vmatpush1.bf16.msra.mxu0 0
        %1301 = vmatprep.subr.bf16.mxu0 0
        %1302 = vmatpush1.bf16.msra.mxu0 0
        %1303 = vmatprep.subr.bf16.mxu0 0
        %1304 = vmatpush1.bf16.msra.mxu0 0
        %1305 = vmatprep.subr.bf16.mxu0 0
        %1306 = vmatpush1.bf16.msra.mxu0 0
        %1307 = vmatprep.mubr.bf16.mxu0 0
        %1308 = vmatmul.mubr.bf16.gmra.mrb[0].mxu0 %v1266
        %v1309 = vpop.f32.mrb[0].mxu0
        %v1310 = vadd.f32 0.0, %v1309
        %v1311 = vpop.f32.mrb[0].mxu0
        %v1312 = vpop.f32.mrb[0].mxu0
        %v1313 = vadd.f32 0.0, %v1312
        %v1314 = vpop.f32.mrb[0].mxu0
        %1315 = vmatprep.mubr.bf16.mxu0 0
        %1316 = vmatmul.mubr.bf16.gmra.mrb[0].mxu0 %v1269
        %v1317 = vpop.f32.mrb[0].mxu0
        %v1318 = vadd.f32 0.0, %v1317
        %v1319 = vpop.f32.mrb[0].mxu0
        %v1320 = vpop.f32.mrb[0].mxu0
        %v1321 = vpop.f32.mrb[0].mxu0
        %1322 = vdwg.mxu0
        %1323 = vst.msk [vmem:[#allocation4] sm:$0xff] %vm1168, %v1310
        %1324 = vst.msk [vmem:[#allocation4 + $0x8] sm:$0xff] %vm1168, %v1313
        %1325 = vst.msk [vmem:[#allocation4 + $0x10] sm:$0xff] %vm1168, %v1318
        %v1326 = vld [vmem:[#allocation3] sm:$0xff]
        %v1327 = vld [vmem:[#allocation3 + $0x18] sm:$0xff]
        %v1328 = vld [vmem:[#allocation3 + $0x30] sm:$0xff]
        %v1329 = vpack.c.bf16 %v1327, %v1326
        %v1330 = vpack.c.bf16 %v1328, %v1328
        %v1331 = vld [vmem:[#allocation3 + $0x8] sm:$0xff]
        %v1332 = vld [vmem:[#allocation3 + $0x20] sm:$0xff]
        %v1333 = vld [vmem:[#allocation3 + $0x38] sm:$0xff]
        %v1334 = vpack.c.bf16 %v1332, %v1331
        %v1335 = vpack.c.bf16 %v1333, %v1333
        %v1336 = vld [vmem:[#allocation3 + $0x10] sm:$0xff]
        %v1337 = vld [vmem:[#allocation3 + $0x28] sm:$0xff]
        %v1338 = vld [vmem:[#allocation3 + $0x40] sm:$0xff]
        %v1339 = vpack.c.bf16 %v1337, %v1336
        %v1340 = vpack.c.bf16 %v1338, %v1338
        %1343 = vrot.lane.b32.xlu0 %v1329, 96
        %v1344 = vpop.permute.xlu0 %1343
        %1345 = vrot.lane.b32.xlu0 %v1330, 96
        %v1346 = vpop.permute.xlu0 %1345
        %1349 = vrot.lane.b32.xlu0 %v1334, 96
        %v1350 = vpop.permute.xlu0 %1349
        %1351 = vrot.lane.b32.xlu0 %v1335, 96
        %v1352 = vpop.permute.xlu0 %1351
        %v1354 = vsel %vm1168, %v1344, 0
        %v1357 = vsel %vm1168, %v1346, 0
        %v1360 = vsel %vm1168, %v1350, 0
        %v1363 = vsel %vm1168, %v1352, 0
        %1365 = vmatprep.subr.bf16.mxu0 0
        %1366 = vmatpush1.bf16.xpose.msra.mxu0 %v1360
        %1367 = vmatprep.subr.bf16.mxu0 0
        %1368 = vmatpush1.bf16.xpose.msra.mxu0 %v1363
        %1369 = vmatprep.subr.bf16.mxu0 0
        %1370 = vmatpush1.bf16.xpose.msra.mxu0 0
        %1371 = vmatprep.subr.bf16.mxu0 0
        %1372 = vmatpush1.bf16.xpose.msra.mxu0 0
        %1373 = vmatprep.subr.bf16.mxu0 0
        %1374 = vmatpush1.bf16.xpose.msra.mxu0 0
        %1375 = vmatprep.subr.bf16.mxu0 0
        %1376 = vmatpush1.bf16.xpose.msra.mxu0 0
        %1377 = vmatprep.subr.bf16.mxu0 0
        %1378 = vmatpush1.bf16.xpose.msra.mxu0 0
        %1379 = vmatprep.subr.bf16.mxu0 0
        %1380 = vmatpush1.bf16.xpose.msra.mxu0 0
        %1381 = vmatprep.subr.bf16.mxu0 0
        %1382 = vmatpush1.bf16.xpose.msra.mxu0 0
        %1383 = vmatprep.subr.bf16.mxu0 0
        %1384 = vmatpush1.bf16.xpose.msra.mxu0 0
        %1385 = vmatprep.subr.bf16.mxu0 0
        %1386 = vmatpush1.bf16.xpose.msra.mxu0 0
        %1387 = vmatprep.subr.bf16.mxu0 0
        %1388 = vmatpush1.bf16.xpose.msra.mxu0 0
        %1389 = vmatprep.subr.bf16.mxu0 0
        %1390 = vmatpush1.bf16.xpose.msra.mxu0 0
        %1391 = vmatprep.subr.bf16.mxu0 0
        %1392 = vmatpush1.bf16.xpose.msra.mxu0 0
        %1393 = vmatprep.subr.bf16.mxu0 0
        %1394 = vmatpush1.bf16.xpose.msra.mxu0 0
        %1395 = vmatprep.subr.bf16.mxu0 0
        %1396 = vmatpush1.bf16.xpose.msra.mxu0 0
        %1397 = vmatprep.mubr.bf16.mxu0 0
        %1398 = vmatmul.mubr.bf16.gmra.mrb[0].mxu0 %v1354
        %v1399 = vpop.f32.mrb[0].mxu0
        %v1400 = vadd.f32 %v1152, %v1399
        %v1401 = vpop.f32.mrb[0].mxu0
        %v1402 = vpop.f32.mrb[0].mxu0
        %v1403 = vadd.f32 %v1152, %v1402
        %v1404 = vpop.f32.mrb[0].mxu0
        %1405 = vmatprep.mubr.bf16.mxu0 0
        %1406 = vmatmul.mubr.bf16.gmra.mrb[0].mxu0 %v1357
        %v1407 = vpop.f32.mrb[0].mxu0
        %v1408 = vadd.f32 %v1152, %v1407
        %v1409 = vpop.f32.mrb[0].mxu0
        %v1410 = vpop.f32.mrb[0].mxu0
        %v1411 = vpop.f32.mrb[0].mxu0
        %1412 = vdwg.mxu0
        %v1413 = vsel %vm1229, %v1400, -inf
        %1414 = vmax.xlane.f32.xlu0 %v1413
        %v1415 = vpop.xlane.xlu0 %1414
        %v1416 = vsel %vm1229, %v1403, -inf
        %1417 = vmax.xlane.f32.xlu0 %v1416
        %v1418 = vpop.xlane.xlu0 %1417
        %v1419 = vsel %vm1229, %v1408, -inf
        %1420 = vmax.xlane.f32.xlu0 %v1419
        %v1421 = vpop.xlane.xlu0 %1420
        %v1422 = vsub.f32 %v1400, %v1415
        %v1423 = vsub.f32 %v1403, %v1418
        %v1424 = vsub.f32 %v1408, %v1421
        %v1425 = vmul.f32 %v1422, 1.442695
        %v1426 = vpow.pop %v1425
        %v1427 = vmul.f32 %v1423, 1.442695
        %v1428 = vpow.pop %v1427
        %v1429 = vmul.f32 %v1424, 1.442695
        %v1430 = vpow.pop %v1429
        %v1431 = vsel %vm1229, %v1426, 0.0
        %1432 = vadd.xlane.f32.xlu0 %v1431
        %v1433 = vpop.xlane.xlu0 %1432
        %v1434 = vsel %vm1229, %v1428, 0.0
        %1435 = vadd.xlane.f32.xlu0 %v1434
        %v1436 = vpop.xlane.xlu0 %1435
        %v1437 = vsel %vm1229, %v1430, 0.0
        %1438 = vadd.xlane.f32.xlu0 %v1437
        %v1439 = vpop.xlane.xlu0 %1438
        %v1440 = vrcp.pop %v1433
        %v1441 = vrcp.pop %v1436
        %v1442 = vrcp.pop %v1439
        %v1443 = vmul.f32 %v1426, %v1440
        %v1444 = vmul.f32 %v1428, %v1441
        %v1445 = vmul.f32 %v1430, %v1442
        %v1446 = vpack.c.bf16 %v1444, %v1443
        %v1447 = vpack.c.bf16 %v1445, %v1445
        %1450 = vrot.lane.b32.xlu0 %v1339, 96
        %v1451 = vpop.permute.xlu0 %1450
        %1452 = vrot.lane.b32.xlu0 %v1340, 96
        %v1453 = vpop.permute.xlu0 %1452
        %v1456 = vsel %vm1229, %v1446, 0
        %v1459 = vsel %vm1229, %v1447, 0
        %v1462 = vsel %vm1271, %v1453, 0
        %1464 = vmatprep.subr.bf16.mxu0 0
        %1465 = vmatpush1.bf16.msra.mxu0 %v1451
        %1466 = vmatprep.subr.bf16.mxu0 0
        %1467 = vmatpush1.bf16.msra.mxu0 %v1462
        %1468 = vmatprep.subr.bf16.mxu0 0
        %1469 = vmatpush1.bf16.msra.mxu0 0
        %1470 = vmatprep.subr.bf16.mxu0 0
        %1471 = vmatpush1.bf16.msra.mxu0 0
        %1472 = vmatprep.subr.bf16.mxu0 0
        %1473 = vmatpush1.bf16.msra.mxu0 0
        %1474 = vmatprep.subr.bf16.mxu0 0
        %1475 = vmatpush1.bf16.msra.mxu0 0
        %1476 = vmatprep.subr.bf16.mxu0 0
        %1477 = vmatpush1.bf16.msra.mxu0 0
        %1478 = vmatprep.subr.bf16.mxu0 0
        %1479 = vmatpush1.bf16.msra.mxu0 0
        %1480 = vmatprep.subr.bf16.mxu0 0
        %1481 = vmatpush1.bf16.msra.mxu0 0
        %1482 = vmatprep.subr.bf16.mxu0 0
        %1483 = vmatpush1.bf16.msra.mxu0 0
        %1484 = vmatprep.subr.bf16.mxu0 0
        %1485 = vmatpush1.bf16.msra.mxu0 0
        %1486 = vmatprep.subr.bf16.mxu0 0
        %1487 = vmatpush1.bf16.msra.mxu0 0
        %1488 = vmatprep.subr.bf16.mxu0 0
        %1489 = vmatpush1.bf16.msra.mxu0 0
        %1490 = vmatprep.subr.bf16.mxu0 0
        %1491 = vmatpush1.bf16.msra.mxu0 0
        %1492 = vmatprep.subr.bf16.mxu0 0
        %1493 = vmatpush1.bf16.msra.mxu0 0
        %1494 = vmatprep.subr.bf16.mxu0 0
        %1495 = vmatpush1.bf16.msra.mxu0 0
        %1496 = vmatprep.mubr.bf16.mxu0 0
        %1497 = vmatmul.mubr.bf16.gmra.mrb[0].mxu0 %v1456
        %v1498 = vpop.f32.mrb[0].mxu0
        %v1499 = vadd.f32 0.0, %v1498
        %v1500 = vpop.f32.mrb[0].mxu0
        %v1501 = vpop.f32.mrb[0].mxu0
        %v1502 = vadd.f32 0.0, %v1501
        %v1503 = vpop.f32.mrb[0].mxu0
        %1504 = vmatprep.mubr.bf16.mxu0 0
        %1505 = vmatmul.mubr.bf16.gmra.mrb[0].mxu0 %v1459
        %v1506 = vpop.f32.mrb[0].mxu0
        %v1507 = vadd.f32 0.0, %v1506
        %v1508 = vpop.f32.mrb[0].mxu0
        %v1509 = vpop.f32.mrb[0].mxu0
        %v1510 = vpop.f32.mrb[0].mxu0
        %1511 = vdwg.mxu0
        %1515 = vrot.lane.b32.xlu0 %v1499, 32
        %v1516 = vpop.permute.xlu0 %1515
        %1517 = vrot.lane.b32.xlu0 %v1502, 32
        %v1518 = vpop.permute.xlu0 %1517
        %1519 = vrot.lane.b32.xlu0 %v1507, 32
        %v1520 = vpop.permute.xlu0 %1519
        %vm1524 = vcmask 523520
        %1525 = vst.msk [vmem:[#allocation4] sm:$0xff] %vm1524, %v1516
        %1526 = vst.msk [vmem:[#allocation4 + $0x8] sm:$0xff] %vm1524, %v1518
        %1527 = vst.msk [vmem:[#allocation4 + $0x10] sm:$0xff] %vm1524, %v1520
        %v1528 = vld [vmem:[#allocation3] sm:$0xff]
        %v1529 = vld [vmem:[#allocation3 + $0x18] sm:$0xff]
        %v1530 = vld [vmem:[#allocation3 + $0x30] sm:$0xff]
        %v1531 = vpack.c.bf16 %v1529, %v1528
        %v1532 = vpack.c.bf16 %v1530, %v1530
        %v1533 = vld [vmem:[#allocation3 + $0x8] sm:$0xff]
        %v1534 = vld [vmem:[#allocation3 + $0x20] sm:$0xff]
        %v1535 = vld [vmem:[#allocation3 + $0x38] sm:$0xff]
        %v1536 = vpack.c.bf16 %v1534, %v1533
        %v1537 = vpack.c.bf16 %v1535, %v1535
        %v1538 = vld [vmem:[#allocation3 + $0x10] sm:$0xff]
        %v1539 = vld [vmem:[#allocation3 + $0x28] sm:$0xff]
        %v1540 = vld [vmem:[#allocation3 + $0x40] sm:$0xff]
        %v1541 = vpack.c.bf16 %v1539, %v1538
        %v1542 = vpack.c.bf16 %v1540, %v1540
        %1545 = vrot.lane.b32.xlu0 %v1531, 64
        %v1546 = vpop.permute.xlu0 %1545
        %1547 = vrot.lane.b32.xlu0 %v1532, 64
        %v1548 = vpop.permute.xlu0 %1547
        %1551 = vrot.lane.b32.xlu0 %v1536, 64
        %v1552 = vpop.permute.xlu0 %1551
        %1553 = vrot.lane.b32.xlu0 %v1537, 64
        %v1554 = vpop.permute.xlu0 %1553
        %v1556 = vsel %vm1168, %v1546, 0
        %v1559 = vsel %vm1168, %v1548, 0
        %v1562 = vsel %vm1168, %v1552, 0
        %v1565 = vsel %vm1168, %v1554, 0
        %1567 = vmatprep.subr.bf16.mxu0 0
        %1568 = vmatpush1.bf16.xpose.msra.mxu0 %v1562
        %1569 = vmatprep.subr.bf16.mxu0 0
        %1570 = vmatpush1.bf16.xpose.msra.mxu0 %v1565
        %1571 = vmatprep.subr.bf16.mxu0 0
        %1572 = vmatpush1.bf16.xpose.msra.mxu0 0
        %1573 = vmatprep.subr.bf16.mxu0 0
        %1574 = vmatpush1.bf16.xpose.msra.mxu0 0
        %1575 = vmatprep.subr.bf16.mxu0 0
        %1576 = vmatpush1.bf16.xpose.msra.mxu0 0
        %1577 = vmatprep.subr.bf16.mxu0 0
        %1578 = vmatpush1.bf16.xpose.msra.mxu0 0
        %1579 = vmatprep.subr.bf16.mxu0 0
        %1580 = vmatpush1.bf16.xpose.msra.mxu0 0
        %1581 = vmatprep.subr.bf16.mxu0 0
        %1582 = vmatpush1.bf16.xpose.msra.mxu0 0
        %1583 = vmatprep.subr.bf16.mxu0 0
        %1584 = vmatpush1.bf16.xpose.msra.mxu0 0
        %1585 = vmatprep.subr.bf16.mxu0 0
        %1586 = vmatpush1.bf16.xpose.msra.mxu0 0
        %1587 = vmatprep.subr.bf16.mxu0 0
        %1588 = vmatpush1.bf16.xpose.msra.mxu0 0
        %1589 = vmatprep.subr.bf16.mxu0 0
        %1590 = vmatpush1.bf16.xpose.msra.mxu0 0
        %1591 = vmatprep.subr.bf16.mxu0 0
        %1592 = vmatpush1.bf16.xpose.msra.mxu0 0
        %1593 = vmatprep.subr.bf16.mxu0 0
        %1594 = vmatpush1.bf16.xpose.msra.mxu0 0
        %1595 = vmatprep.subr.bf16.mxu0 0
        %1596 = vmatpush1.bf16.xpose.msra.mxu0 0
        %1597 = vmatprep.subr.bf16.mxu0 0
        %1598 = vmatpush1.bf16.xpose.msra.mxu0 0
        %1599 = vmatprep.mubr.bf16.mxu0 0
        %1600 = vmatmul.mubr.bf16.gmra.mrb[0].mxu0 %v1556
        %v1601 = vpop.f32.mrb[0].mxu0
        %v1602 = vadd.f32 %v1152, %v1601
        %v1603 = vpop.f32.mrb[0].mxu0
        %v1604 = vpop.f32.mrb[0].mxu0
        %v1605 = vadd.f32 %v1152, %v1604
        %v1606 = vpop.f32.mrb[0].mxu0
        %1607 = vmatprep.mubr.bf16.mxu0 0
        %1608 = vmatmul.mubr.bf16.gmra.mrb[0].mxu0 %v1559
        %v1609 = vpop.f32.mrb[0].mxu0
        %v1610 = vadd.f32 %v1152, %v1609
        %v1611 = vpop.f32.mrb[0].mxu0
        %v1612 = vpop.f32.mrb[0].mxu0
        %v1613 = vpop.f32.mrb[0].mxu0
        %1614 = vdwg.mxu0
        %v1615 = vsel %vm1229, %v1602, -inf
        %1616 = vmax.xlane.f32.xlu0 %v1615
        %v1617 = vpop.xlane.xlu0 %1616
        %v1618 = vsel %vm1229, %v1605, -inf
        %1619 = vmax.xlane.f32.xlu0 %v1618
        %v1620 = vpop.xlane.xlu0 %1619
        %v1621 = vsel %vm1229, %v1610, -inf
        %1622 = vmax.xlane.f32.xlu0 %v1621
        %v1623 = vpop.xlane.xlu0 %1622
        %v1624 = vsub.f32 %v1602, %v1617
        %v1625 = vsub.f32 %v1605, %v1620
        %v1626 = vsub.f32 %v1610, %v1623
        %v1627 = vmul.f32 %v1624, 1.442695
        %v1628 = vpow.pop %v1627
        %v1629 = vmul.f32 %v1625, 1.442695
        %v1630 = vpow.pop %v1629
        %v1631 = vmul.f32 %v1626, 1.442695
        %v1632 = vpow.pop %v1631
        %v1633 = vsel %vm1229, %v1628, 0.0
        %1634 = vadd.xlane.f32.xlu0 %v1633
        %v1635 = vpop.xlane.xlu0 %1634
        %v1636 = vsel %vm1229, %v1630, 0.0
        %1637 = vadd.xlane.f32.xlu0 %v1636
        %v1638 = vpop.xlane.xlu0 %1637
        %v1639 = vsel %vm1229, %v1632, 0.0
        %1640 = vadd.xlane.f32.xlu0 %v1639
        %v1641 = vpop.xlane.xlu0 %1640
        %v1642 = vrcp.pop %v1635
        %v1643 = vrcp.pop %v1638
        %v1644 = vrcp.pop %v1641
        %v1645 = vmul.f32 %v1628, %v1642
        %v1646 = vmul.f32 %v1630, %v1643
        %v1647 = vmul.f32 %v1632, %v1644
        %v1648 = vpack.c.bf16 %v1646, %v1645
        %v1649 = vpack.c.bf16 %v1647, %v1647
        %1652 = vrot.lane.b32.xlu0 %v1541, 64
        %v1653 = vpop.permute.xlu0 %1652
        %1654 = vrot.lane.b32.xlu0 %v1542, 64
        %v1655 = vpop.permute.xlu0 %1654
        %v1658 = vsel %vm1229, %v1648, 0
        %v1661 = vsel %vm1229, %v1649, 0
        %v1664 = vsel %vm1271, %v1655, 0
        %1666 = vmatprep.subr.bf16.mxu0 0
        %1667 = vmatpush1.bf16.msra.mxu0 %v1653
        %1668 = vmatprep.subr.bf16.mxu0 0
        %1669 = vmatpush1.bf16.msra.mxu0 %v1664
        %1670 = vmatprep.subr.bf16.mxu0 0
        %1671 = vmatpush1.bf16.msra.mxu0 0
        %1672 = vmatprep.subr.bf16.mxu0 0
        %1673 = vmatpush1.bf16.msra.mxu0 0
        %1674 = vmatprep.subr.bf16.mxu0 0
        %1675 = vmatpush1.bf16.msra.mxu0 0
        %1676 = vmatprep.subr.bf16.mxu0 0
        %1677 = vmatpush1.bf16.msra.mxu0 0
        %1678 = vmatprep.subr.bf16.mxu0 0
        %1679 = vmatpush1.bf16.msra.mxu0 0
        %1680 = vmatprep.subr.bf16.mxu0 0
        %1681 = vmatpush1.bf16.msra.mxu0 0
        %1682 = vmatprep.subr.bf16.mxu0 0
        %1683 = vmatpush1.bf16.msra.mxu0 0
        %1684 = vmatprep.subr.bf16.mxu0 0
        %1685 = vmatpush1.bf16.msra.mxu0 0
        %1686 = vmatprep.subr.bf16.mxu0 0
        %1687 = vmatpush1.bf16.msra.mxu0 0
        %1688 = vmatprep.subr.bf16.mxu0 0
        %1689 = vmatpush1.bf16.msra.mxu0 0
        %1690 = vmatprep.subr.bf16.mxu0 0
        %1691 = vmatpush1.bf16.msra.mxu0 0
        %1692 = vmatprep.subr.bf16.mxu0 0
        %1693 = vmatpush1.bf16.msra.mxu0 0
        %1694 = vmatprep.subr.bf16.mxu0 0
        %1695 = vmatpush1.bf16.msra.mxu0 0
        %1696 = vmatprep.subr.bf16.mxu0 0
        %1697 = vmatpush1.bf16.msra.mxu0 0
        %1698 = vmatprep.mubr.bf16.mxu0 0
        %1699 = vmatmul.mubr.bf16.gmra.mrb[0].mxu0 %v1658
        %v1700 = vpop.f32.mrb[0].mxu0
        %v1701 = vadd.f32 0.0, %v1700
        %v1702 = vpop.f32.mrb[0].mxu0
        %v1703 = vpop.f32.mrb[0].mxu0
        %v1704 = vadd.f32 0.0, %v1703
        %v1705 = vpop.f32.mrb[0].mxu0
        %1706 = vmatprep.mubr.bf16.mxu0 0
        %1707 = vmatmul.mubr.bf16.gmra.mrb[0].mxu0 %v1661
        %v1708 = vpop.f32.mrb[0].mxu0
        %v1709 = vadd.f32 0.0, %v1708
        %v1710 = vpop.f32.mrb[0].mxu0
        %v1711 = vpop.f32.mrb[0].mxu0
        %v1712 = vpop.f32.mrb[0].mxu0
        %1713 = vdwg.mxu0
        %1717 = vrot.lane.b32.xlu0 %v1701, 64
        %v1718 = vpop.permute.xlu0 %1717
        %1719 = vrot.lane.b32.xlu0 %v1704, 64
        %v1720 = vpop.permute.xlu0 %1719
        %1721 = vrot.lane.b32.xlu0 %v1709, 64
        %v1722 = vpop.permute.xlu0 %1721
        %vm1726 = vcmask 785920
        %1727 = vst.msk [vmem:[#allocation4] sm:$0xff] %vm1726, %v1718
        %1728 = vst.msk [vmem:[#allocation4 + $0x8] sm:$0xff] %vm1726, %v1720
        %1729 = vst.msk [vmem:[#allocation4 + $0x10] sm:$0xff] %vm1726, %v1722
        %v1730 = vld [vmem:[#allocation3] sm:$0xff]
        %v1731 = vld [vmem:[#allocation3 + $0x18] sm:$0xff]
        %v1732 = vld [vmem:[#allocation3 + $0x30] sm:$0xff]
        %v1733 = vpack.c.bf16 %v1731, %v1730
        %v1734 = vpack.c.bf16 %v1732, %v1732
        %v1735 = vld [vmem:[#allocation3 + $0x8] sm:$0xff]
        %v1736 = vld [vmem:[#allocation3 + $0x20] sm:$0xff]
        %v1737 = vld [vmem:[#allocation3 + $0x38] sm:$0xff]
        %v1738 = vpack.c.bf16 %v1736, %v1735
        %v1739 = vpack.c.bf16 %v1737, %v1737
        %v1740 = vld [vmem:[#allocation3 + $0x10] sm:$0xff]
        %v1741 = vld [vmem:[#allocation3 + $0x28] sm:$0xff]
        %v1742 = vld [vmem:[#allocation3 + $0x40] sm:$0xff]
        %v1743 = vpack.c.bf16 %v1741, %v1740
        %v1744 = vpack.c.bf16 %v1742, %v1742
        %1747 = vrot.lane.b32.xlu0 %v1733, 32
        %v1748 = vpop.permute.xlu0 %1747
        %1749 = vrot.lane.b32.xlu0 %v1734, 32
        %v1750 = vpop.permute.xlu0 %1749
        %1753 = vrot.lane.b32.xlu0 %v1738, 32
        %v1754 = vpop.permute.xlu0 %1753
        %1755 = vrot.lane.b32.xlu0 %v1739, 32
        %v1756 = vpop.permute.xlu0 %1755
        %v1758 = vsel %vm1168, %v1748, 0
        %v1761 = vsel %vm1168, %v1750, 0
        %v1764 = vsel %vm1168, %v1754, 0
        %v1767 = vsel %vm1168, %v1756, 0
        %1769 = vmatprep.subr.bf16.mxu0 0
        %1770 = vmatpush1.bf16.xpose.msra.mxu0 %v1764
        %1771 = vmatprep.subr.bf16.mxu0 0
        %1772 = vmatpush1.bf16.xpose.msra.mxu0 %v1767
        %1773 = vmatprep.subr.bf16.mxu0 0
        %1774 = vmatpush1.bf16.xpose.msra.mxu0 0
        %1775 = vmatprep.subr.bf16.mxu0 0
        %1776 = vmatpush1.bf16.xpose.msra.mxu0 0
        %1777 = vmatprep.subr.bf16.mxu0 0
        %1778 = vmatpush1.bf16.xpose.msra.mxu0 0
        %1779 = vmatprep.subr.bf16.mxu0 0
        %1780 = vmatpush1.bf16.xpose.msra.mxu0 0
        %1781 = vmatprep.subr.bf16.mxu0 0
        %1782 = vmatpush1.bf16.xpose.msra.mxu0 0
        %1783 = vmatprep.subr.bf16.mxu0 0
        %1784 = vmatpush1.bf16.xpose.msra.mxu0 0
        %1785 = vmatprep.subr.bf16.mxu0 0
        %1786 = vmatpush1.bf16.xpose.msra.mxu0 0
        %1787 = vmatprep.subr.bf16.mxu0 0
        %1788 = vmatpush1.bf16.xpose.msra.mxu0 0
        %1789 = vmatprep.subr.bf16.mxu0 0
        %1790 = vmatpush1.bf16.xpose.msra.mxu0 0
        %1791 = vmatprep.subr.bf16.mxu0 0
        %1792 = vmatpush1.bf16.xpose.msra.mxu0 0
        %1793 = vmatprep.subr.bf16.mxu0 0
        %1794 = vmatpush1.bf16.xpose.msra.mxu0 0
        %1795 = vmatprep.subr.bf16.mxu0 0
        %1796 = vmatpush1.bf16.xpose.msra.mxu0 0
        %1797 = vmatprep.subr.bf16.mxu0 0
        %1798 = vmatpush1.bf16.xpose.msra.mxu0 0
        %1799 = vmatprep.subr.bf16.mxu0 0
        %1800 = vmatpush1.bf16.xpose.msra.mxu0 0
        %1801 = vmatprep.mubr.bf16.mxu0 0
        %1802 = vmatmul.mubr.bf16.gmra.mrb[0].mxu0 %v1758
        %v1803 = vpop.f32.mrb[0].mxu0
        %v1804 = vadd.f32 %v1152, %v1803
        %v1805 = vpop.f32.mrb[0].mxu0
        %v1806 = vpop.f32.mrb[0].mxu0
        %v1807 = vadd.f32 %v1152, %v1806
        %v1808 = vpop.f32.mrb[0].mxu0
        %1809 = vmatprep.mubr.bf16.mxu0 0
        %1810 = vmatmul.mubr.bf16.gmra.mrb[0].mxu0 %v1761
        %v1811 = vpop.f32.mrb[0].mxu0
        %v1812 = vadd.f32 %v1152, %v1811
        %v1813 = vpop.f32.mrb[0].mxu0
        %v1814 = vpop.f32.mrb[0].mxu0
        %v1815 = vpop.f32.mrb[0].mxu0
        %1816 = vdwg.mxu0
        %v1817 = vsel %vm1229, %v1804, -inf
        %1818 = vmax.xlane.f32.xlu0 %v1817
        %v1819 = vpop.xlane.xlu0 %1818
        %v1820 = vsel %vm1229, %v1807, -inf
        %1821 = vmax.xlane.f32.xlu0 %v1820
        %v1822 = vpop.xlane.xlu0 %1821
        %v1823 = vsel %vm1229, %v1812, -inf
        %1824 = vmax.xlane.f32.xlu0 %v1823
        %v1825 = vpop.xlane.xlu0 %1824
        %v1826 = vsub.f32 %v1804, %v1819
        %v1827 = vsub.f32 %v1807, %v1822
        %v1828 = vsub.f32 %v1812, %v1825
        %v1829 = vmul.f32 %v1826, 1.442695
        %v1830 = vpow.pop %v1829
        %v1831 = vmul.f32 %v1827, 1.442695
        %v1832 = vpow.pop %v1831
        %v1833 = vmul.f32 %v1828, 1.442695
        %v1834 = vpow.pop %v1833
        %v1835 = vsel %vm1229, %v1830, 0.0
        %1836 = vadd.xlane.f32.xlu0 %v1835
        %v1837 = vpop.xlane.xlu0 %1836
        %v1838 = vsel %vm1229, %v1832, 0.0
        %1839 = vadd.xlane.f32.xlu0 %v1838
        %v1840 = vpop.xlane.xlu0 %1839
        %v1841 = vsel %vm1229, %v1834, 0.0
        %1842 = vadd.xlane.f32.xlu0 %v1841
        %v1843 = vpop.xlane.xlu0 %1842
        %v1844 = vrcp.pop %v1837
        %v1845 = vrcp.pop %v1840
        %v1846 = vrcp.pop %v1843
        %v1847 = vmul.f32 %v1830, %v1844
        %v1848 = vmul.f32 %v1832, %v1845
        %v1849 = vmul.f32 %v1834, %v1846
        %v1850 = vpack.c.bf16 %v1848, %v1847
        %v1851 = vpack.c.bf16 %v1849, %v1849
        %1854 = vrot.lane.b32.xlu0 %v1743, 32
        %v1855 = vpop.permute.xlu0 %1854
        %1856 = vrot.lane.b32.xlu0 %v1744, 32
        %v1857 = vpop.permute.xlu0 %1856
        %v1860 = vsel %vm1229, %v1850, 0
        %v1863 = vsel %vm1229, %v1851, 0
        %v1866 = vsel %vm1271, %v1857, 0
        %1868 = vmatprep.subr.bf16.mxu0 0
        %1869 = vmatpush1.bf16.msra.mxu0 %v1855
        %1870 = vmatprep.subr.bf16.mxu0 0
        %1871 = vmatpush1.bf16.msra.mxu0 %v1866
        %1872 = vmatprep.subr.bf16.mxu0 0
        %1873 = vmatpush1.bf16.msra.mxu0 0
        %1874 = vmatprep.subr.bf16.mxu0 0
        %1875 = vmatpush1.bf16.msra.mxu0 0
        %1876 = vmatprep.subr.bf16.mxu0 0
        %1877 = vmatpush1.bf16.msra.mxu0 0
        %1878 = vmatprep.subr.bf16.mxu0 0
        %1879 = vmatpush1.bf16.msra.mxu0 0
        %1880 = vmatprep.subr.bf16.mxu0 0
        %1881 = vmatpush1.bf16.msra.mxu0 0
        %1882 = vmatprep.subr.bf16.mxu0 0
        %1883 = vmatpush1.bf16.msra.mxu0 0
        %1884 = vmatprep.subr.bf16.mxu0 0
        %1885 = vmatpush1.bf16.msra.mxu0 0
        %1886 = vmatprep.subr.bf16.mxu0 0
        %1887 = vmatpush1.bf16.msra.mxu0 0
        %1888 = vmatprep.subr.bf16.mxu0 0
        %1889 = vmatpush1.bf16.msra.mxu0 0
        %1890 = vmatprep.subr.bf16.mxu0 0
        %1891 = vmatpush1.bf16.msra.mxu0 0
        %1892 = vmatprep.subr.bf16.mxu0 0
        %1893 = vmatpush1.bf16.msra.mxu0 0
        %1894 = vmatprep.subr.bf16.mxu0 0
        %1895 = vmatpush1.bf16.msra.mxu0 0
        %1896 = vmatprep.subr.bf16.mxu0 0
        %1897 = vmatpush1.bf16.msra.mxu0 0
        %1898 = vmatprep.subr.bf16.mxu0 0
        %1899 = vmatpush1.bf16.msra.mxu0 0
        %1900 = vmatprep.mubr.bf16.mxu0 0
        %1901 = vmatmul.mubr.bf16.gmra.mrb[0].mxu0 %v1860
        %v1902 = vpop.f32.mrb[0].mxu0
        %v1903 = vadd.f32 0.0, %v1902
        %v1904 = vpop.f32.mrb[0].mxu0
        %v1905 = vpop.f32.mrb[0].mxu0
        %v1906 = vadd.f32 0.0, %v1905
        %v1907 = vpop.f32.mrb[0].mxu0
        %1908 = vmatprep.mubr.bf16.mxu0 0
        %1909 = vmatmul.mubr.bf16.gmra.mrb[0].mxu0 %v1863
        %v1910 = vpop.f32.mrb[0].mxu0
        %v1911 = vadd.f32 0.0, %v1910
        %v1912 = vpop.f32.mrb[0].mxu0
        %v1913 = vpop.f32.mrb[0].mxu0
        %v1914 = vpop.f32.mrb[0].mxu0
        %1915 = vdwg.mxu0
        %1919 = vrot.lane.b32.xlu0 %v1903, 96
        %v1920 = vpop.permute.xlu0 %1919
        %1921 = vrot.lane.b32.xlu0 %v1906, 96
        %v1922 = vpop.permute.xlu0 %1921
        %1923 = vrot.lane.b32.xlu0 %v1911, 96
        %v1924 = vpop.permute.xlu0 %1923
        %vm1928 = vcmask 1048320
        %1929 = vst.msk [vmem:[#allocation4] sm:$0xff] %vm1928, %v1920
        %1930 = vst.msk [vmem:[#allocation4 + $0x8] sm:$0xff] %vm1928, %v1922
        %1931 = vst.msk [vmem:[#allocation4 + $0x10] sm:$0xff] %vm1928, %v1924
        %v1932 = vld [vmem:[#allocation3 + $0x48] sm:$0xff]
        %v1933 = vld [vmem:[#allocation3 + $0x60] sm:$0xff]
        %v1934 = vld [vmem:[#allocation3 + $0x78] sm:$0xff]
        %v1935 = vpack.c.bf16 %v1933, %v1932
        %v1936 = vpack.c.bf16 %v1934, %v1934
        %v1937 = vld [vmem:[#allocation3 + $0x50] sm:$0xff]
        %v1938 = vld [vmem:[#allocation3 + $0x68] sm:$0xff]
        %v1939 = vld [vmem:[#allocation3 + $0x80] sm:$0xff]
        %v1940 = vpack.c.bf16 %v1938, %v1937
        %v1941 = vpack.c.bf16 %v1939, %v1939
        %v1942 = vld [vmem:[#allocation3 + $0x58] sm:$0xff]
        %v1943 = vld [vmem:[#allocation3 + $0x70] sm:$0xff]
        %v1944 = vld [vmem:[#allocation3 + $0x88] sm:$0xff]
        %v1945 = vpack.c.bf16 %v1943, %v1942
        %v1946 = vpack.c.bf16 %v1944, %v1944
        %v1948 = vsel %vm1168, %v1935, 0
        %v1951 = vsel %vm1168, %v1936, 0
        %v1954 = vsel %vm1168, %v1940, 0
        %v1957 = vsel %vm1168, %v1941, 0
        %1959 = vmatprep.subr.bf16.mxu0 0
        %1960 = vmatpush1.bf16.xpose.msra.mxu0 %v1954
        %1961 = vmatprep.subr.bf16.mxu0 0
        %1962 = vmatpush1.bf16.xpose.msra.mxu0 %v1957
        %1963 = vmatprep.subr.bf16.mxu0 0
        %1964 = vmatpush1.bf16.xpose.msra.mxu0 0
        %1965 = vmatprep.subr.bf16.mxu0 0
        %1966 = vmatpush1.bf16.xpose.msra.mxu0 0
        %1967 = vmatprep.subr.bf16.mxu0 0
        %1968 = vmatpush1.bf16.xpose.msra.mxu0 0
        %1969 = vmatprep.subr.bf16.mxu0 0
        %1970 = vmatpush1.bf16.xpose.msra.mxu0 0
        %1971 = vmatprep.subr.bf16.mxu0 0
        %1972 = vmatpush1.bf16.xpose.msra.mxu0 0
        %1973 = vmatprep.subr.bf16.mxu0 0
        %1974 = vmatpush1.bf16.xpose.msra.mxu0 0
        %1975 = vmatprep.subr.bf16.mxu0 0
        %1976 = vmatpush1.bf16.xpose.msra.mxu0 0
        %1977 = vmatprep.subr.bf16.mxu0 0
        %1978 = vmatpush1.bf16.xpose.msra.mxu0 0
        %1979 = vmatprep.subr.bf16.mxu0 0
        %1980 = vmatpush1.bf16.xpose.msra.mxu0 0
        %1981 = vmatprep.subr.bf16.mxu0 0
        %1982 = vmatpush1.bf16.xpose.msra.mxu0 0
        %1983 = vmatprep.subr.bf16.mxu0 0
        %1984 = vmatpush1.bf16.xpose.msra.mxu0 0
        %1985 = vmatprep.subr.bf16.mxu0 0
        %1986 = vmatpush1.bf16.xpose.msra.mxu0 0
        %1987 = vmatprep.subr.bf16.mxu0 0
        %1988 = vmatpush1.bf16.xpose.msra.mxu0 0
        %1989 = vmatprep.subr.bf16.mxu0 0
        %1990 = vmatpush1.bf16.xpose.msra.mxu0 0
        %1991 = vmatprep.mubr.bf16.mxu0 0
        %1992 = vmatmul.mubr.bf16.gmra.mrb[0].mxu0 %v1948
        %v1993 = vpop.f32.mrb[0].mxu0
        %v1994 = vadd.f32 %v1152, %v1993
        %v1995 = vpop.f32.mrb[0].mxu0
        %v1996 = vpop.f32.mrb[0].mxu0
        %v1997 = vadd.f32 %v1152, %v1996
        %v1998 = vpop.f32.mrb[0].mxu0
        %1999 = vmatprep.mubr.bf16.mxu0 0
        %2000 = vmatmul.mubr.bf16.gmra.mrb[0].mxu0 %v1951
        %v2001 = vpop.f32.mrb[0].mxu0
        %v2002 = vadd.f32 %v1152, %v2001
        %v2003 = vpop.f32.mrb[0].mxu0
        %v2004 = vpop.f32.mrb[0].mxu0
        %v2005 = vpop.f32.mrb[0].mxu0
        %2006 = vdwg.mxu0
        %v2007 = vsel %vm1229, %v1994, -inf
        %2008 = vmax.xlane.f32.xlu0 %v2007
        %v2009 = vpop.xlane.xlu0 %2008
        %v2010 = vsel %vm1229, %v1997, -inf
        %2011 = vmax.xlane.f32.xlu0 %v2010
        %v2012 = vpop.xlane.xlu0 %2011
        %v2013 = vsel %vm1229, %v2002, -inf
        %2014 = vmax.xlane.f32.xlu0 %v2013
        %v2015 = vpop.xlane.xlu0 %2014
        %v2016 = vsub.f32 %v1994, %v2009
        %v2017 = vsub.f32 %v1997, %v2012
        %v2018 = vsub.f32 %v2002, %v2015
        %v2019 = vmul.f32 %v2016, 1.442695
        %v2020 = vpow.pop %v2019
        %v2021 = vmul.f32 %v2017, 1.442695
        %v2022 = vpow.pop %v2021
        %v2023 = vmul.f32 %v2018, 1.442695
        %v2024 = vpow.pop %v2023
        %v2025 = vsel %vm1229, %v2020, 0.0
        %2026 = vadd.xlane.f32.xlu0 %v2025
        %v2027 = vpop.xlane.xlu0 %2026
        %v2028 = vsel %vm1229, %v2022, 0.0
        %2029 = vadd.xlane.f32.xlu0 %v2028
        %v2030 = vpop.xlane.xlu0 %2029
        %v2031 = vsel %vm1229, %v2024, 0.0
        %2032 = vadd.xlane.f32.xlu0 %v2031
        %v2033 = vpop.xlane.xlu0 %2032
        %v2034 = vrcp.pop %v2027
        %v2035 = vrcp.pop %v2030
        %v2036 = vrcp.pop %v2033
        %v2037 = vmul.f32 %v2020, %v2034
        %v2038 = vmul.f32 %v2022, %v2035
        %v2039 = vmul.f32 %v2024, %v2036
        %v2040 = vpack.c.bf16 %v2038, %v2037
        %v2041 = vpack.c.bf16 %v2039, %v2039
        %v2043 = vsel %vm1229, %v2040, 0
        %v2046 = vsel %vm1229, %v2041, 0
        %v2049 = vsel %vm1271, %v1946, 0
        %2051 = vmatprep.subr.bf16.mxu0 0
        %2052 = vmatpush1.bf16.msra.mxu0 %v1945
        %2053 = vmatprep.subr.bf16.mxu0 0
        %2054 = vmatpush1.bf16.msra.mxu0 %v2049
        %2055 = vmatprep.subr.bf16.mxu0 0
        %2056 = vmatpush1.bf16.msra.mxu0 0
        %2057 = vmatprep.subr.bf16.mxu0 0
        %2058 = vmatpush1.bf16.msra.mxu0 0
        %2059 = vmatprep.subr.bf16.mxu0 0
        %2060 = vmatpush1.bf16.msra.mxu0 0
        %2061 = vmatprep.subr.bf16.mxu0 0
        %2062 = vmatpush1.bf16.msra.mxu0 0
        %2063 = vmatprep.subr.bf16.mxu0 0
        %2064 = vmatpush1.bf16.msra.mxu0 0
        %2065 = vmatprep.subr.bf16.mxu0 0
        %2066 = vmatpush1.bf16.msra.mxu0 0
        %2067 = vmatprep.subr.bf16.mxu0 0
        %2068 = vmatpush1.bf16.msra.mxu0 0
        %2069 = vmatprep.subr.bf16.mxu0 0
        %2070 = vmatpush1.bf16.msra.mxu0 0
        %2071 = vmatprep.subr.bf16.mxu0 0
        %2072 = vmatpush1.bf16.msra.mxu0 0
        %2073 = vmatprep.subr.bf16.mxu0 0
        %2074 = vmatpush1.bf16.msra.mxu0 0
        %2075 = vmatprep.subr.bf16.mxu0 0
        %2076 = vmatpush1.bf16.msra.mxu0 0
        %2077 = vmatprep.subr.bf16.mxu0 0
        %2078 = vmatpush1.bf16.msra.mxu0 0
        %2079 = vmatprep.subr.bf16.mxu0 0
        %2080 = vmatpush1.bf16.msra.mxu0 0
        %2081 = vmatprep.subr.bf16.mxu0 0
        %2082 = vmatpush1.bf16.msra.mxu0 0
        %2083 = vmatprep.mubr.bf16.mxu0 0
        %2084 = vmatmul.mubr.bf16.gmra.mrb[0].mxu0 %v2043
        %v2085 = vpop.f32.mrb[0].mxu0
        %v2086 = vadd.f32 0.0, %v2085
        %v2087 = vpop.f32.mrb[0].mxu0
        %v2088 = vpop.f32.mrb[0].mxu0
        %v2089 = vadd.f32 0.0, %v2088
        %v2090 = vpop.f32.mrb[0].mxu0
        %2091 = vmatprep.mubr.bf16.mxu0 0
        %2092 = vmatmul.mubr.bf16.gmra.mrb[0].mxu0 %v2046
        %v2093 = vpop.f32.mrb[0].mxu0
        %v2094 = vadd.f32 0.0, %v2093
        %v2095 = vpop.f32.mrb[0].mxu0
        %v2096 = vpop.f32.mrb[0].mxu0
        %v2097 = vpop.f32.mrb[0].mxu0
        %2098 = vdwg.mxu0
        %2099 = vst.msk [vmem:[#allocation4 + $0x18] sm:$0xff] %vm1168, %v2086
        %2100 = vst.msk [vmem:[#allocation4 + $0x20] sm:$0xff] %vm1168, %v2089
        %2101 = vst.msk [vmem:[#allocation4 + $0x28] sm:$0xff] %vm1168, %v2094
        %v2102 = vld [vmem:[#allocation3 + $0x48] sm:$0xff]
        %v2103 = vld [vmem:[#allocation3 + $0x60] sm:$0xff]
        %v2104 = vld [vmem:[#allocation3 + $0x78] sm:$0xff]
        %v2105 = vpack.c.bf16 %v2103, %v2102
        %v2106 = vpack.c.bf16 %v2104, %v2104
        %v2107 = vld [vmem:[#allocation3 + $0x50] sm:$0xff]
        %v2108 = vld [vmem:[#allocation3 + $0x68] sm:$0xff]
        %v2109 = vld [vmem:[#allocation3 + $0x80] sm:$0xff]
        %v2110 = vpack.c.bf16 %v2108, %v2107
        %v2111 = vpack.c.bf16 %v2109, %v2109
        %v2112 = vld [vmem:[#allocation3 + $0x58] sm:$0xff]
        %v2113 = vld [vmem:[#allocation3 + $0x70] sm:$0xff]
        %v2114 = vld [vmem:[#allocation3 + $0x88] sm:$0xff]
        %v2115 = vpack.c.bf16 %v2113, %v2112
        %v2116 = vpack.c.bf16 %v2114, %v2114
        %2119 = vrot.lane.b32.xlu0 %v2105, 96
        %v2120 = vpop.permute.xlu0 %2119
        %2121 = vrot.lane.b32.xlu0 %v2106, 96
        %v2122 = vpop.permute.xlu0 %2121
        %2125 = vrot.lane.b32.xlu0 %v2110, 96
        %v2126 = vpop.permute.xlu0 %2125
        %2127 = vrot.lane.b32.xlu0 %v2111, 96
        %v2128 = vpop.permute.xlu0 %2127
        %v2130 = vsel %vm1168, %v2120, 0
        %v2133 = vsel %vm1168, %v2122, 0
        %v2136 = vsel %vm1168, %v2126, 0
        %v2139 = vsel %vm1168, %v2128, 0
        %2141 = vmatprep.subr.bf16.mxu0 0
        %2142 = vmatpush1.bf16.xpose.msra.mxu0 %v2136
        %2143 = vmatprep.subr.bf16.mxu0 0
        %2144 = vmatpush1.bf16.xpose.msra.mxu0 %v2139
        %2145 = vmatprep.subr.bf16.mxu0 0
        %2146 = vmatpush1.bf16.xpose.msra.mxu0 0
        %2147 = vmatprep.subr.bf16.mxu0 0
        %2148 = vmatpush1.bf16.xpose.msra.mxu0 0
        %2149 = vmatprep.subr.bf16.mxu0 0
        %2150 = vmatpush1.bf16.xpose.msra.mxu0 0
        %2151 = vmatprep.subr.bf16.mxu0 0
        %2152 = vmatpush1.bf16.xpose.msra.mxu0 0
        %2153 = vmatprep.subr.bf16.mxu0 0
        %2154 = vmatpush1.bf16.xpose.msra.mxu0 0
        %2155 = vmatprep.subr.bf16.mxu0 0
        %2156 = vmatpush1.bf16.xpose.msra.mxu0 0
        %2157 = vmatprep.subr.bf16.mxu0 0
        %2158 = vmatpush1.bf16.xpose.msra.mxu0 0
        %2159 = vmatprep.subr.bf16.mxu0 0
        %2160 = vmatpush1.bf16.xpose.msra.mxu0 0
        %2161 = vmatprep.subr.bf16.mxu0 0
        %2162 = vmatpush1.bf16.xpose.msra.mxu0 0
        %2163 = vmatprep.subr.bf16.mxu0 0
        %2164 = vmatpush1.bf16.xpose.msra.mxu0 0
        %2165 = vmatprep.subr.bf16.mxu0 0
        %2166 = vmatpush1.bf16.xpose.msra.mxu0 0
        %2167 = vmatprep.subr.bf16.mxu0 0
        %2168 = vmatpush1.bf16.xpose.msra.mxu0 0
        %2169 = vmatprep.subr.bf16.mxu0 0
        %2170 = vmatpush1.bf16.xpose.msra.mxu0 0
        %2171 = vmatprep.subr.bf16.mxu0 0
        %2172 = vmatpush1.bf16.xpose.msra.mxu0 0
        %2173 = vmatprep.mubr.bf16.mxu0 0
        %2174 = vmatmul.mubr.bf16.gmra.mrb[0].mxu0 %v2130
        %v2175 = vpop.f32.mrb[0].mxu0
        %v2176 = vadd.f32 %v1152, %v2175
        %v2177 = vpop.f32.mrb[0].mxu0
        %v2178 = vpop.f32.mrb[0].mxu0
        %v2179 = vadd.f32 %v1152, %v2178
        %v2180 = vpop.f32.mrb[0].mxu0
        %2181 = vmatprep.mubr.bf16.mxu0 0
        %2182 = vmatmul.mubr.bf16.gmra.mrb[0].mxu0 %v2133
        %v2183 = vpop.f32.mrb[0].mxu0
        %v2184 = vadd.f32 %v1152, %v2183
        %v2185 = vpop.f32.mrb[0].mxu0
        %v2186 = vpop.f32.mrb[0].mxu0
        %v2187 = vpop.f32.mrb[0].mxu0
        %2188 = vdwg.mxu0
        %v2189 = vsel %vm1229, %v2176, -inf
        %2190 = vmax.xlane.f32.xlu0 %v2189
        %v2191 = vpop.xlane.xlu0 %2190
        %v2192 = vsel %vm1229, %v2179, -inf
        %2193 = vmax.xlane.f32.xlu0 %v2192
        %v2194 = vpop.xlane.xlu0 %2193
        %v2195 = vsel %vm1229, %v2184, -inf
        %2196 = vmax.xlane.f32.xlu0 %v2195
        %v2197 = vpop.xlane.xlu0 %2196
        %v2198 = vsub.f32 %v2176, %v2191
        %v2199 = vsub.f32 %v2179, %v2194
        %v2200 = vsub.f32 %v2184, %v2197
        %v2201 = vmul.f32 %v2198, 1.442695
        %v2202 = vpow.pop %v2201
        %v2203 = vmul.f32 %v2199, 1.442695
        %v2204 = vpow.pop %v2203
        %v2205 = vmul.f32 %v2200, 1.442695
        %v2206 = vpow.pop %v2205
        %v2207 = vsel %vm1229, %v2202, 0.0
        %2208 = vadd.xlane.f32.xlu0 %v2207
        %v2209 = vpop.xlane.xlu0 %2208
        %v2210 = vsel %vm1229, %v2204, 0.0
        %2211 = vadd.xlane.f32.xlu0 %v2210
        %v2212 = vpop.xlane.xlu0 %2211
        %v2213 = vsel %vm1229, %v2206, 0.0
        %2214 = vadd.xlane.f32.xlu0 %v2213
        %v2215 = vpop.xlane.xlu0 %2214
        %v2216 = vrcp.pop %v2209
        %v2217 = vrcp.pop %v2212
        %v2218 = vrcp.pop %v2215
        %v2219 = vmul.f32 %v2202, %v2216
        %v2220 = vmul.f32 %v2204, %v2217
        %v2221 = vmul.f32 %v2206, %v2218
        %v2222 = vpack.c.bf16 %v2220, %v2219
        %v2223 = vpack.c.bf16 %v2221, %v2221
        %2226 = vrot.lane.b32.xlu0 %v2115, 96
        %v2227 = vpop.permute.xlu0 %2226
        %2228 = vrot.lane.b32.xlu0 %v2116, 96
        %v2229 = vpop.permute.xlu0 %2228
        %v2232 = vsel %vm1229, %v2222, 0
        %v2235 = vsel %vm1229, %v2223, 0
        %v2238 = vsel %vm1271, %v2229, 0
        %2240 = vmatprep.subr.bf16.mxu0 0
        %2241 = vmatpush1.bf16.msra.mxu0 %v2227
        %2242 = vmatprep.subr.bf16.mxu0 0
        %2243 = vmatpush1.bf16.msra.mxu0 %v2238
        %2244 = vmatprep.subr.bf16.mxu0 0
        %2245 = vmatpush1.bf16.msra.mxu0 0
        %2246 = vmatprep.subr.bf16.mxu0 0
        %2247 = vmatpush1.bf16.msra.mxu0 0
        %2248 = vmatprep.subr.bf16.mxu0 0
        %2249 = vmatpush1.bf16.msra.mxu0 0
        %2250 = vmatprep.subr.bf16.mxu0 0
        %2251 = vmatpush1.bf16.msra.mxu0 0
        %2252 = vmatprep.subr.bf16.mxu0 0
        %2253 = vmatpush1.bf16.msra.mxu0 0
        %2254 = vmatprep.subr.bf16.mxu0 0
        %2255 = vmatpush1.bf16.msra.mxu0 0
        %2256 = vmatprep.subr.bf16.mxu0 0
        %2257 = vmatpush1.bf16.msra.mxu0 0
        %2258 = vmatprep.subr.bf16.mxu0 0
        %2259 = vmatpush1.bf16.msra.mxu0 0
        %2260 = vmatprep.subr.bf16.mxu0 0
        %2261 = vmatpush1.bf16.msra.mxu0 0
        %2262 = vmatprep.subr.bf16.mxu0 0
        %2263 = vmatpush1.bf16.msra.mxu0 0
        %2264 = vmatprep.subr.bf16.mxu0 0
        %2265 = vmatpush1.bf16.msra.mxu0 0
        %2266 = vmatprep.subr.bf16.mxu0 0
        %2267 = vmatpush1.bf16.msra.mxu0 0
        %2268 = vmatprep.subr.bf16.mxu0 0
        %2269 = vmatpush1.bf16.msra.mxu0 0
        %2270 = vmatprep.subr.bf16.mxu0 0
        %2271 = vmatpush1.bf16.msra.mxu0 0
        %2272 = vmatprep.mubr.bf16.mxu0 0
        %2273 = vmatmul.mubr.bf16.gmra.mrb[0].mxu0 %v2232
        %v2274 = vpop.f32.mrb[0].mxu0
        %v2275 = vadd.f32 0.0, %v2274
        %v2276 = vpop.f32.mrb[0].mxu0
        %v2277 = vpop.f32.mrb[0].mxu0
        %v2278 = vadd.f32 0.0, %v2277
        %v2279 = vpop.f32.mrb[0].mxu0
        %2280 = vmatprep.mubr.bf16.mxu0 0
        %2281 = vmatmul.mubr.bf16.gmra.mrb[0].mxu0 %v2235
        %v2282 = vpop.f32.mrb[0].mxu0
        %v2283 = vadd.f32 0.0, %v2282
        %v2284 = vpop.f32.mrb[0].mxu0
        %v2285 = vpop.f32.mrb[0].mxu0
        %v2286 = vpop.f32.mrb[0].mxu0
        %2287 = vdwg.mxu0
        %2291 = vrot.lane.b32.xlu0 %v2275, 32
        %v2292 = vpop.permute.xlu0 %2291
        %2293 = vrot.lane.b32.xlu0 %v2278, 32
        %v2294 = vpop.permute.xlu0 %2293
        %2295 = vrot.lane.b32.xlu0 %v2283, 32
        %v2296 = vpop.permute.xlu0 %2295
        %2300 = vst.msk [vmem:[#allocation4 + $0x18] sm:$0xff] %vm1524, %v2292
        %2301 = vst.msk [vmem:[#allocation4 + $0x20] sm:$0xff] %vm1524, %v2294
        %2302 = vst.msk [vmem:[#allocation4 + $0x28] sm:$0xff] %vm1524, %v2296
        %v2303 = vld [vmem:[#allocation3 + $0x48] sm:$0xff]
        %v2304 = vld [vmem:[#allocation3 + $0x60] sm:$0xff]
        %v2305 = vld [vmem:[#allocation3 + $0x78] sm:$0xff]
        %v2306 = vpack.c.bf16 %v2304, %v2303
        %v2307 = vpack.c.bf16 %v2305, %v2305
        %v2308 = vld [vmem:[#allocation3 + $0x50] sm:$0xff]
        %v2309 = vld [vmem:[#allocation3 + $0x68] sm:$0xff]
        %v2310 = vld [vmem:[#allocation3 + $0x80] sm:$0xff]
        %v2311 = vpack.c.bf16 %v2309, %v2308
        %v2312 = vpack.c.bf16 %v2310, %v2310
        %v2313 = vld [vmem:[#allocation3 + $0x58] sm:$0xff]
        %v2314 = vld [vmem:[#allocation3 + $0x70] sm:$0xff]
        %v2315 = vld [vmem:[#allocation3 + $0x88] sm:$0xff]
        %v2316 = vpack.c.bf16 %v2314, %v2313
        %v2317 = vpack.c.bf16 %v2315, %v2315
        %2320 = vrot.lane.b32.xlu0 %v2306, 64
        %v2321 = vpop.permute.xlu0 %2320
        %2322 = vrot.lane.b32.xlu0 %v2307, 64
        %v2323 = vpop.permute.xlu0 %2322
        %2326 = vrot.lane.b32.xlu0 %v2311, 64
        %v2327 = vpop.permute.xlu0 %2326
        %2328 = vrot.lane.b32.xlu0 %v2312, 64
        %v2329 = vpop.permute.xlu0 %2328
        %v2331 = vsel %vm1168, %v2321, 0
        %v2334 = vsel %vm1168, %v2323, 0
        %v2337 = vsel %vm1168, %v2327, 0
        %v2340 = vsel %vm1168, %v2329, 0
        %2342 = vmatprep.subr.bf16.mxu0 0
        %2343 = vmatpush1.bf16.xpose.msra.mxu0 %v2337
        %2344 = vmatprep.subr.bf16.mxu0 0
        %2345 = vmatpush1.bf16.xpose.msra.mxu0 %v2340
        %2346 = vmatprep.subr.bf16.mxu0 0
        %2347 = vmatpush1.bf16.xpose.msra.mxu0 0
        %2348 = vmatprep.subr.bf16.mxu0 0
        %2349 = vmatpush1.bf16.xpose.msra.mxu0 0
        %2350 = vmatprep.subr.bf16.mxu0 0
        %2351 = vmatpush1.bf16.xpose.msra.mxu0 0
        %2352 = vmatprep.subr.bf16.mxu0 0
        %2353 = vmatpush1.bf16.xpose.msra.mxu0 0
        %2354 = vmatprep.subr.bf16.mxu0 0
        %2355 = vmatpush1.bf16.xpose.msra.mxu0 0
        %2356 = vmatprep.subr.bf16.mxu0 0
        %2357 = vmatpush1.bf16.xpose.msra.mxu0 0
        %2358 = vmatprep.subr.bf16.mxu0 0
        %2359 = vmatpush1.bf16.xpose.msra.mxu0 0
        %2360 = vmatprep.subr.bf16.mxu0 0
        %2361 = vmatpush1.bf16.xpose.msra.mxu0 0
        %2362 = vmatprep.subr.bf16.mxu0 0
        %2363 = vmatpush1.bf16.xpose.msra.mxu0 0
        %2364 = vmatprep.subr.bf16.mxu0 0
        %2365 = vmatpush1.bf16.xpose.msra.mxu0 0
        %2366 = vmatprep.subr.bf16.mxu0 0
        %2367 = vmatpush1.bf16.xpose.msra.mxu0 0
        %2368 = vmatprep.subr.bf16.mxu0 0
        %2369 = vmatpush1.bf16.xpose.msra.mxu0 0
        %2370 = vmatprep.subr.bf16.mxu0 0
        %2371 = vmatpush1.bf16.xpose.msra.mxu0 0
        %2372 = vmatprep.subr.bf16.mxu0 0
        %2373 = vmatpush1.bf16.xpose.msra.mxu0 0
        %2374 = vmatprep.mubr.bf16.mxu0 0
        %2375 = vmatmul.mubr.bf16.gmra.mrb[0].mxu0 %v2331
        %v2376 = vpop.f32.mrb[0].mxu0
        %v2377 = vadd.f32 %v1152, %v2376
        %v2378 = vpop.f32.mrb[0].mxu0
        %v2379 = vpop.f32.mrb[0].mxu0
        %v2380 = vadd.f32 %v1152, %v2379
        %v2381 = vpop.f32.mrb[0].mxu0
        %2382 = vmatprep.mubr.bf16.mxu0 0
        %2383 = vmatmul.mubr.bf16.gmra.mrb[0].mxu0 %v2334
        %v2384 = vpop.f32.mrb[0].mxu0
        %v2385 = vadd.f32 %v1152, %v2384
        %v2386 = vpop.f32.mrb[0].mxu0
        %v2387 = vpop.f32.mrb[0].mxu0
        %v2388 = vpop.f32.mrb[0].mxu0
        %2389 = vdwg.mxu0
        %v2390 = vsel %vm1229, %v2377, -inf
        %2391 = vmax.xlane.f32.xlu0 %v2390
        %v2392 = vpop.xlane.xlu0 %2391
        %v2393 = vsel %vm1229, %v2380, -inf
        %2394 = vmax.xlane.f32.xlu0 %v2393
        %v2395 = vpop.xlane.xlu0 %2394
        %v2396 = vsel %vm1229, %v2385, -inf
        %2397 = vmax.xlane.f32.xlu0 %v2396
        %v2398 = vpop.xlane.xlu0 %2397
        %v2399 = vsub.f32 %v2377, %v2392
        %v2400 = vsub.f32 %v2380, %v2395
        %v2401 = vsub.f32 %v2385, %v2398
        %v2402 = vmul.f32 %v2399, 1.442695
        %v2403 = vpow.pop %v2402
        %v2404 = vmul.f32 %v2400, 1.442695
        %v2405 = vpow.pop %v2404
        %v2406 = vmul.f32 %v2401, 1.442695
        %v2407 = vpow.pop %v2406
        %v2408 = vsel %vm1229, %v2403, 0.0
        %2409 = vadd.xlane.f32.xlu0 %v2408
        %v2410 = vpop.xlane.xlu0 %2409
        %v2411 = vsel %vm1229, %v2405, 0.0
        %2412 = vadd.xlane.f32.xlu0 %v2411
        %v2413 = vpop.xlane.xlu0 %2412
        %v2414 = vsel %vm1229, %v2407, 0.0
        %2415 = vadd.xlane.f32.xlu0 %v2414
        %v2416 = vpop.xlane.xlu0 %2415
        %v2417 = vrcp.pop %v2410
        %v2418 = vrcp.pop %v2413
        %v2419 = vrcp.pop %v2416
        %v2420 = vmul.f32 %v2403, %v2417
        %v2421 = vmul.f32 %v2405, %v2418
        %v2422 = vmul.f32 %v2407, %v2419
        %v2423 = vpack.c.bf16 %v2421, %v2420
        %v2424 = vpack.c.bf16 %v2422, %v2422
        %2427 = vrot.lane.b32.xlu0 %v2316, 64
        %v2428 = vpop.permute.xlu0 %2427
        %2429 = vrot.lane.b32.xlu0 %v2317, 64
        %v2430 = vpop.permute.xlu0 %2429
        %v2433 = vsel %vm1229, %v2423, 0
        %v2436 = vsel %vm1229, %v2424, 0
        %v2439 = vsel %vm1271, %v2430, 0
        %2441 = vmatprep.subr.bf16.mxu0 0
        %2442 = vmatpush1.bf16.msra.mxu0 %v2428
        %2443 = vmatprep.subr.bf16.mxu0 0
        %2444 = vmatpush1.bf16.msra.mxu0 %v2439
        %2445 = vmatprep.subr.bf16.mxu0 0
        %2446 = vmatpush1.bf16.msra.mxu0 0
        %2447 = vmatprep.subr.bf16.mxu0 0
        %2448 = vmatpush1.bf16.msra.mxu0 0
        %2449 = vmatprep.subr.bf16.mxu0 0
        %2450 = vmatpush1.bf16.msra.mxu0 0
        %2451 = vmatprep.subr.bf16.mxu0 0
        %2452 = vmatpush1.bf16.msra.mxu0 0
        %2453 = vmatprep.subr.bf16.mxu0 0
        %2454 = vmatpush1.bf16.msra.mxu0 0
        %2455 = vmatprep.subr.bf16.mxu0 0
        %2456 = vmatpush1.bf16.msra.mxu0 0
        %2457 = vmatprep.subr.bf16.mxu0 0
        %2458 = vmatpush1.bf16.msra.mxu0 0
        %2459 = vmatprep.subr.bf16.mxu0 0
        %2460 = vmatpush1.bf16.msra.mxu0 0
        %2461 = vmatprep.subr.bf16.mxu0 0
        %2462 = vmatpush1.bf16.msra.mxu0 0
        %2463 = vmatprep.subr.bf16.mxu0 0
        %2464 = vmatpush1.bf16.msra.mxu0 0
        %2465 = vmatprep.subr.bf16.mxu0 0
        %2466 = vmatpush1.bf16.msra.mxu0 0
        %2467 = vmatprep.subr.bf16.mxu0 0
        %2468 = vmatpush1.bf16.msra.mxu0 0
        %2469 = vmatprep.subr.bf16.mxu0 0
        %2470 = vmatpush1.bf16.msra.mxu0 0
        %2471 = vmatprep.subr.bf16.mxu0 0
        %2472 = vmatpush1.bf16.msra.mxu0 0
        %2473 = vmatprep.mubr.bf16.mxu0 0
        %2474 = vmatmul.mubr.bf16.gmra.mrb[0].mxu0 %v2433
        %v2475 = vpop.f32.mrb[0].mxu0
        %v2476 = vadd.f32 0.0, %v2475
        %v2477 = vpop.f32.mrb[0].mxu0
        %v2478 = vpop.f32.mrb[0].mxu0
        %v2479 = vadd.f32 0.0, %v2478
        %v2480 = vpop.f32.mrb[0].mxu0
        %2481 = vmatprep.mubr.bf16.mxu0 0
        %2482 = vmatmul.mubr.bf16.gmra.mrb[0].mxu0 %v2436
        %v2483 = vpop.f32.mrb[0].mxu0
        %v2484 = vadd.f32 0.0, %v2483
        %v2485 = vpop.f32.mrb[0].mxu0
        %v2486 = vpop.f32.mrb[0].mxu0
        %v2487 = vpop.f32.mrb[0].mxu0
        %2488 = vdwg.mxu0
        %2492 = vrot.lane.b32.xlu0 %v2476, 64
        %v2493 = vpop.permute.xlu0 %2492
        %2494 = vrot.lane.b32.xlu0 %v2479, 64
        %v2495 = vpop.permute.xlu0 %2494
        %2496 = vrot.lane.b32.xlu0 %v2484, 64
        %v2497 = vpop.permute.xlu0 %2496
        %2501 = vst.msk [vmem:[#allocation4 + $0x18] sm:$0xff] %vm1726, %v2493
        %2502 = vst.msk [vmem:[#allocation4 + $0x20] sm:$0xff] %vm1726, %v2495
        %2503 = vst.msk [vmem:[#allocation4 + $0x28] sm:$0xff] %vm1726, %v2497
        %v2504 = vld [vmem:[#allocation3 + $0x48] sm:$0xff]
        %v2505 = vld [vmem:[#allocation3 + $0x60] sm:$0xff]
        %v2506 = vld [vmem:[#allocation3 + $0x78] sm:$0xff]
        %v2507 = vpack.c.bf16 %v2505, %v2504
        %v2508 = vpack.c.bf16 %v2506, %v2506
        %v2509 = vld [vmem:[#allocation3 + $0x50] sm:$0xff]
        %v2510 = vld [vmem:[#allocation3 + $0x68] sm:$0xff]
        %v2511 = vld [vmem:[#allocation3 + $0x80] sm:$0xff]
        %v2512 = vpack.c.bf16 %v2510, %v2509
        %v2513 = vpack.c.bf16 %v2511, %v2511
        %v2514 = vld [vmem:[#allocation3 + $0x58] sm:$0xff]
        %v2515 = vld [vmem:[#allocation3 + $0x70] sm:$0xff]
        %v2516 = vld [vmem:[#allocation3 + $0x88] sm:$0xff]
        %v2517 = vpack.c.bf16 %v2515, %v2514
        %v2518 = vpack.c.bf16 %v2516, %v2516
        %2521 = vrot.lane.b32.xlu0 %v2507, 32
        %v2522 = vpop.permute.xlu0 %2521
        %2523 = vrot.lane.b32.xlu0 %v2508, 32
        %v2524 = vpop.permute.xlu0 %2523
        %2527 = vrot.lane.b32.xlu0 %v2512, 32
        %v2528 = vpop.permute.xlu0 %2527
        %2529 = vrot.lane.b32.xlu0 %v2513, 32
        %v2530 = vpop.permute.xlu0 %2529
        %v2532 = vsel %vm1168, %v2522, 0
        %v2535 = vsel %vm1168, %v2524, 0
        %v2538 = vsel %vm1168, %v2528, 0
        %v2541 = vsel %vm1168, %v2530, 0
        %2543 = vmatprep.subr.bf16.mxu0 0
        %2544 = vmatpush1.bf16.xpose.msra.mxu0 %v2538
        %2545 = vmatprep.subr.bf16.mxu0 0
        %2546 = vmatpush1.bf16.xpose.msra.mxu0 %v2541
        %2547 = vmatprep.subr.bf16.mxu0 0
        %2548 = vmatpush1.bf16.xpose.msra.mxu0 0
        %2549 = vmatprep.subr.bf16.mxu0 0
        %2550 = vmatpush1.bf16.xpose.msra.mxu0 0
        %2551 = vmatprep.subr.bf16.mxu0 0
        %2552 = vmatpush1.bf16.xpose.msra.mxu0 0
        %2553 = vmatprep.subr.bf16.mxu0 0
        %2554 = vmatpush1.bf16.xpose.msra.mxu0 0
        %2555 = vmatprep.subr.bf16.mxu0 0
        %2556 = vmatpush1.bf16.xpose.msra.mxu0 0
        %2557 = vmatprep.subr.bf16.mxu0 0
        %2558 = vmatpush1.bf16.xpose.msra.mxu0 0
        %2559 = vmatprep.subr.bf16.mxu0 0
        %2560 = vmatpush1.bf16.xpose.msra.mxu0 0
        %2561 = vmatprep.subr.bf16.mxu0 0
        %2562 = vmatpush1.bf16.xpose.msra.mxu0 0
        %2563 = vmatprep.subr.bf16.mxu0 0
        %2564 = vmatpush1.bf16.xpose.msra.mxu0 0
        %2565 = vmatprep.subr.bf16.mxu0 0
        %2566 = vmatpush1.bf16.xpose.msra.mxu0 0
        %2567 = vmatprep.subr.bf16.mxu0 0
        %2568 = vmatpush1.bf16.xpose.msra.mxu0 0
        %2569 = vmatprep.subr.bf16.mxu0 0
        %2570 = vmatpush1.bf16.xpose.msra.mxu0 0
        %2571 = vmatprep.subr.bf16.mxu0 0
        %2572 = vmatpush1.bf16.xpose.msra.mxu0 0
        %2573 = vmatprep.subr.bf16.mxu0 0
        %2574 = vmatpush1.bf16.xpose.msra.mxu0 0
        %2575 = vmatprep.mubr.bf16.mxu0 0
        %2576 = vmatmul.mubr.bf16.gmra.mrb[0].mxu0 %v2532
        %v2577 = vpop.f32.mrb[0].mxu0
        %v2578 = vadd.f32 %v1152, %v2577
        %v2579 = vpop.f32.mrb[0].mxu0
        %v2580 = vpop.f32.mrb[0].mxu0
        %v2581 = vadd.f32 %v1152, %v2580
        %v2582 = vpop.f32.mrb[0].mxu0
        %2583 = vmatprep.mubr.bf16.mxu0 0
        %2584 = vmatmul.mubr.bf16.gmra.mrb[0].mxu0 %v2535
        %v2585 = vpop.f32.mrb[0].mxu0
        %v2586 = vadd.f32 %v1152, %v2585
        %v2587 = vpop.f32.mrb[0].mxu0
        %v2588 = vpop.f32.mrb[0].mxu0
        %v2589 = vpop.f32.mrb[0].mxu0
        %2590 = vdwg.mxu0
        %v2591 = vsel %vm1229, %v2578, -inf
        %2592 = vmax.xlane.f32.xlu0 %v2591
        %v2593 = vpop.xlane.xlu0 %2592
        %v2594 = vsel %vm1229, %v2581, -inf
        %2595 = vmax.xlane.f32.xlu0 %v2594
        %v2596 = vpop.xlane.xlu0 %2595
        %v2597 = vsel %vm1229, %v2586, -inf
        %2598 = vmax.xlane.f32.xlu0 %v2597
        %v2599 = vpop.xlane.xlu0 %2598
        %v2600 = vsub.f32 %v2578, %v2593
        %v2601 = vsub.f32 %v2581, %v2596
        %v2602 = vsub.f32 %v2586, %v2599
        %v2603 = vmul.f32 %v2600, 1.442695
        %v2604 = vpow.pop %v2603
        %v2605 = vmul.f32 %v2601, 1.442695
        %v2606 = vpow.pop %v2605
        %v2607 = vmul.f32 %v2602, 1.442695
        %v2608 = vpow.pop %v2607
        %v2609 = vsel %vm1229, %v2604, 0.0
        %2610 = vadd.xlane.f32.xlu0 %v2609
        %v2611 = vpop.xlane.xlu0 %2610
        %v2612 = vsel %vm1229, %v2606, 0.0
        %2613 = vadd.xlane.f32.xlu0 %v2612
        %v2614 = vpop.xlane.xlu0 %2613
        %v2615 = vsel %vm1229, %v2608, 0.0
        %2616 = vadd.xlane.f32.xlu0 %v2615
        %v2617 = vpop.xlane.xlu0 %2616
        %v2618 = vrcp.pop %v2611
        %v2619 = vrcp.pop %v2614
        %v2620 = vrcp.pop %v2617
        %v2621 = vmul.f32 %v2604, %v2618
        %v2622 = vmul.f32 %v2606, %v2619
        %v2623 = vmul.f32 %v2608, %v2620
        %v2624 = vpack.c.bf16 %v2622, %v2621
        %v2625 = vpack.c.bf16 %v2623, %v2623
        %2628 = vrot.lane.b32.xlu0 %v2517, 32
        %v2629 = vpop.permute.xlu0 %2628
        %2630 = vrot.lane.b32.xlu0 %v2518, 32
        %v2631 = vpop.permute.xlu0 %2630
        %v2634 = vsel %vm1229, %v2624, 0
        %v2637 = vsel %vm1229, %v2625, 0
        %v2640 = vsel %vm1271, %v2631, 0
        %2642 = vmatprep.subr.bf16.mxu0 0
        %2643 = vmatpush1.bf16.msra.mxu0 %v2629
        %2644 = vmatprep.subr.bf16.mxu0 0
        %2645 = vmatpush1.bf16.msra.mxu0 %v2640
        %2646 = vmatprep.subr.bf16.mxu0 0
        %2647 = vmatpush1.bf16.msra.mxu0 0
        %2648 = vmatprep.subr.bf16.mxu0 0
        %2649 = vmatpush1.bf16.msra.mxu0 0
        %2650 = vmatprep.subr.bf16.mxu0 0
        %2651 = vmatpush1.bf16.msra.mxu0 0
        %2652 = vmatprep.subr.bf16.mxu0 0
        %2653 = vmatpush1.bf16.msra.mxu0 0
        %2654 = vmatprep.subr.bf16.mxu0 0
        %2655 = vmatpush1.bf16.msra.mxu0 0
        %2656 = vmatprep.subr.bf16.mxu0 0
        %2657 = vmatpush1.bf16.msra.mxu0 0
        %2658 = vmatprep.subr.bf16.mxu0 0
        %2659 = vmatpush1.bf16.msra.mxu0 0
        %2660 = vmatprep.subr.bf16.mxu0 0
        %2661 = vmatpush1.bf16.msra.mxu0 0
        %2662 = vmatprep.subr.bf16.mxu0 0
        %2663 = vmatpush1.bf16.msra.mxu0 0
        %2664 = vmatprep.subr.bf16.mxu0 0
        %2665 = vmatpush1.bf16.msra.mxu0 0
        %2666 = vmatprep.subr.bf16.mxu0 0
        %2667 = vmatpush1.bf16.msra.mxu0 0
        %2668 = vmatprep.subr.bf16.mxu0 0
        %2669 = vmatpush1.bf16.msra.mxu0 0
        %2670 = vmatprep.subr.bf16.mxu0 0
        %2671 = vmatpush1.bf16.msra.mxu0 0
        %2672 = vmatprep.subr.bf16.mxu0 0
        %2673 = vmatpush1.bf16.msra.mxu0 0
        %2674 = vmatprep.mubr.bf16.mxu0 0
        %2675 = vmatmul.mubr.bf16.gmra.mrb[0].mxu0 %v2634
        %v2676 = vpop.f32.mrb[0].mxu0
        %v2677 = vadd.f32 0.0, %v2676
        %v2678 = vpop.f32.mrb[0].mxu0
        %v2679 = vpop.f32.mrb[0].mxu0
        %v2680 = vadd.f32 0.0, %v2679
        %v2681 = vpop.f32.mrb[0].mxu0
        %2682 = vmatprep.mubr.bf16.mxu0 0
        %2683 = vmatmul.mubr.bf16.gmra.mrb[0].mxu0 %v2637
        %v2684 = vpop.f32.mrb[0].mxu0
        %v2685 = vadd.f32 0.0, %v2684
        %v2686 = vpop.f32.mrb[0].mxu0
        %v2687 = vpop.f32.mrb[0].mxu0
        %v2688 = vpop.f32.mrb[0].mxu0
        %2689 = vdwg.mxu0
        %2693 = vrot.lane.b32.xlu0 %v2677, 96
        %v2694 = vpop.permute.xlu0 %2693
        %2695 = vrot.lane.b32.xlu0 %v2680, 96
        %v2696 = vpop.permute.xlu0 %2695
        %2697 = vrot.lane.b32.xlu0 %v2685, 96
        %v2698 = vpop.permute.xlu0 %2697
        %2702 = vst.msk [vmem:[#allocation4 + $0x18] sm:$0xff] %vm1928, %v2694
        %2703 = vst.msk [vmem:[#allocation4 + $0x20] sm:$0xff] %vm1928, %v2696
        %2704 = vst.msk [vmem:[#allocation4 + $0x28] sm:$0xff] %vm1928, %v2698
        %v2705 = vld [vmem:[#allocation4] sm:$0xff]
        %v2706 = vld [vmem:[#allocation4 + $0x8] sm:$0xff]
        %v2707 = vld [vmem:[#allocation4 + $0x10] sm:$0xff]
        %v2708 = vld [vmem:[#allocation4 + $0x18] sm:$0xff]
        %v2709 = vld [vmem:[#allocation4 + $0x20] sm:$0xff]
        %v2710 = vld [vmem:[#allocation4 + $0x28] sm:$0xff]
        %v2711 = vpack.c.bf16 %v2706, %v2705
        %v2712 = vpack.c.bf16 %v2708, %v2707
        %v2713 = vpack.c.bf16 %v2710, %v2709
        %v2714 = vld [vmem:[%s592] sm:$0xf]
        %v2715 = vld [vmem:[%s592 + $0x4] sm:$0xf]
        %v2716 = vld [vmem:[%s592 + $0x8] sm:$0xf]
        %v2717 = vld [vmem:[%s592 + $0xc] sm:$0xf]
        %v2718 = vld [vmem:[%s592 + $0x10] sm:$0xf]
        %v2719 = vld [vmem:[%s592 + $0x14] sm:$0xf]
        %v2720 = vld [vmem:[%s592 + $0x18] sm:$0xf]
        %v2721 = vld [vmem:[%s592 + $0x1c] sm:$0xf]
        %v2722 = vld [vmem:[%s592 + $0x20] sm:$0xf]
        %v2723 = vld [vmem:[%s592 + $0x24] sm:$0xf]
        %v2724 = vld [vmem:[%s592 + $0x28] sm:$0xf]
        %v2725 = vld [vmem:[%s592 + $0x2c] sm:$0xf]
        %v2726 = vld [vmem:[%s592 + $0x30] sm:$0xf]
        %v2727 = vld [vmem:[%s592 + $0x34] sm:$0xf]
        %v2728 = vld [vmem:[%s592 + $0x38] sm:$0xf]
        %v2729 = vld [vmem:[%s592 + $0x3c] sm:$0xf]
        %v2730 = vld [vmem:[%s696] sm:$0x1]
        %v2732 = vlaneseq
        %v2733 = vshrl.u32 %v2732, 7
        %v2734 = vsub.s32 0, %v2733
        %v2735 = vrot.slane %v2730, %v2734
        %v2753 = vunpack.c.l.b16 %v2714
        %v2754 = vunpack.c.l.b16 %v2715
        %v2755 = vunpack.c.l.b16 %v2716
        %v2756 = vunpack.c.l.b16 %v2717
        %v2757 = vunpack.c.l.b16 %v2718
        %v2758 = vunpack.c.l.b16 %v2719
        %v2759 = vunpack.c.l.b16 %v2720
        %v2760 = vunpack.c.l.b16 %v2721
        %v2761 = vunpack.c.l.b16 %v2722
        %v2762 = vunpack.c.l.b16 %v2723
        %v2763 = vunpack.c.l.b16 %v2724
        %v2764 = vunpack.c.l.b16 %v2725
        %v2765 = vunpack.c.l.b16 %v2726
        %v2766 = vunpack.c.l.b16 %v2727
        %v2767 = vunpack.c.l.b16 %v2728
        %v2768 = vunpack.c.l.b16 %v2729
        %v2769 = vpack.c.b16 %v2754, %v2753
        %v2770 = vpack.c.b16 %v2756, %v2755
        %v2771 = vpack.c.b16 %v2758, %v2757
        %v2772 = vpack.c.b16 %v2760, %v2759
        %v2773 = vpack.c.b16 %v2762, %v2761
        %v2774 = vpack.c.b16 %v2764, %v2763
        %v2775 = vpack.c.b16 %v2766, %v2765
        %v2776 = vpack.c.b16 %v2768, %v2767
        %2785 = vmatprep.subr.bf16.mxu0 0
        %2786 = vmatpush1.bf16.msra.mxu0 %v2769
        %2787 = vmatprep.subr.bf16.mxu0 0
        %2788 = vmatpush1.bf16.msra.mxu0 %v2770
        %2789 = vmatprep.subr.bf16.mxu0 0
        %2790 = vmatpush1.bf16.msra.mxu0 %v2771
        %2791 = vmatprep.subr.bf16.mxu0 0
        %2792 = vmatpush1.bf16.msra.mxu0 %v2772
        %2793 = vmatprep.subr.bf16.mxu0 0
        %2794 = vmatpush1.bf16.msra.mxu0 %v2773
        %2795 = vmatprep.subr.bf16.mxu0 0
        %2796 = vmatpush1.bf16.msra.mxu0 %v2774
        %2797 = vmatprep.subr.bf16.mxu0 0
        %2798 = vmatpush1.bf16.msra.mxu0 %v2775
        %2799 = vmatprep.subr.bf16.mxu0 0
        %2800 = vmatpush1.bf16.msra.mxu0 %v2776
        %2801 = vmatprep.subr.bf16.mxu0 0
        %2802 = vmatpush1.bf16.msra.mxu0 0
        %2803 = vmatprep.subr.bf16.mxu0 0
        %2804 = vmatpush1.bf16.msra.mxu0 0
        %2805 = vmatprep.subr.bf16.mxu0 0
        %2806 = vmatpush1.bf16.msra.mxu0 0
        %2807 = vmatprep.subr.bf16.mxu0 0
        %2808 = vmatpush1.bf16.msra.mxu0 0
        %2809 = vmatprep.subr.bf16.mxu0 0
        %2810 = vmatpush1.bf16.msra.mxu0 0
        %2811 = vmatprep.subr.bf16.mxu0 0
        %2812 = vmatpush1.bf16.msra.mxu0 0
        %2813 = vmatprep.subr.bf16.mxu0 0
        %2814 = vmatpush1.bf16.msra.mxu0 0
        %2815 = vmatprep.subr.bf16.mxu0 0
        %2816 = vmatpush1.bf16.msra.mxu0 0
        %2817 = vmatprep.mubr.bf16.mxu0 0
        %2818 = vmatmul.mubr.bf16.gmra.mrb[0].mxu0 %v2711
        %v2819 = vpop.f32.mrb[0].mxu0
        %v2820 = vadd.f32 %v2735, %v2819
        %v2821 = vpop.f32.mrb[0].mxu0
        %v2822 = vpop.f32.mrb[0].mxu0
        %v2823 = vadd.f32 %v2735, %v2822
        %v2824 = vpop.f32.mrb[0].mxu0
        %2825 = vmatprep.mubr.bf16.mxu0 0
        %2826 = vmatmul.mubr.bf16.gmra.mrb[0].mxu0 %v2712
        %v2827 = vpop.f32.mrb[0].mxu0
        %v2828 = vadd.f32 %v2735, %v2827
        %v2829 = vpop.f32.mrb[0].mxu0
        %v2830 = vpop.f32.mrb[0].mxu0
        %v2831 = vadd.f32 %v2735, %v2830
        %v2832 = vpop.f32.mrb[0].mxu0
        %2833 = vmatprep.mubr.bf16.mxu0 0
        %2834 = vmatmul.mubr.bf16.gmra.mrb[0].mxu0 %v2713
        %v2835 = vpop.f32.mrb[0].mxu0
        %v2836 = vadd.f32 %v2735, %v2835
        %v2837 = vpop.f32.mrb[0].mxu0
        %v2838 = vpop.f32.mrb[0].mxu0
        %v2839 = vadd.f32 %v2735, %v2838
        %v2840 = vpop.f32.mrb[0].mxu0
        %2841 = vdwg.mxu0
        %v2842 = vadd.f32 %v732, %v2820
        %v2843 = vadd.f32 %v733, %v2823
        %v2844 = vadd.f32 %v734, %v2828
        %v2845 = vadd.f32 %v735, %v2831
        %v2846 = vadd.f32 %v736, %v2836
        %v2847 = vadd.f32 %v737, %v2839
        %v2848 = vld [vmem:[%s699] sm:$0x1]
        %v2849 = vld [vmem:[%s702] sm:$0x1]
        %2850 = vadd.xlane.f32.xlu0 %v2842
        %v2851 = vpop.xlane.xlu0 %2850
        %2852 = vadd.xlane.f32.xlu0 %v2843
        %v2853 = vpop.xlane.xlu0 %2852
        %2854 = vadd.xlane.f32.xlu0 %v2844
        %v2855 = vpop.xlane.xlu0 %2854
        %2856 = vadd.xlane.f32.xlu0 %v2845
        %v2857 = vpop.xlane.xlu0 %2856
        %2858 = vadd.xlane.f32.xlu0 %v2846
        %v2859 = vpop.xlane.xlu0 %2858
        %2860 = vadd.xlane.f32.xlu0 %v2847
        %v2861 = vpop.xlane.xlu0 %2860
        %v2862 = vmul.f32 %v2851, %v752
        %v2863 = vmul.f32 %v2853, %v752
        %v2864 = vmul.f32 %v2855, %v752
        %v2865 = vmul.f32 %v2857, %v752
        %v2866 = vmul.f32 %v2859, %v752
        %v2867 = vmul.f32 %v2861, %v752
        %v2868 = vsub.f32 %v2842, %v2862
        %v2869 = vsub.f32 %v2843, %v2863
        %v2870 = vsub.f32 %v2844, %v2864
        %v2871 = vsub.f32 %v2845, %v2865
        %v2872 = vsub.f32 %v2846, %v2866
        %v2873 = vsub.f32 %v2847, %v2867
        %v2874 = vmul.f32 %v2868, %v2868
        %v2875 = vmul.f32 %v2869, %v2869
        %v2876 = vmul.f32 %v2870, %v2870
        %v2877 = vmul.f32 %v2871, %v2871
        %v2878 = vmul.f32 %v2872, %v2872
        %v2879 = vmul.f32 %v2873, %v2873
        %2880 = vadd.xlane.f32.xlu0 %v2874
        %v2881 = vpop.xlane.xlu0 %2880
        %2882 = vadd.xlane.f32.xlu0 %v2875
        %v2883 = vpop.xlane.xlu0 %2882
        %2884 = vadd.xlane.f32.xlu0 %v2876
        %v2885 = vpop.xlane.xlu0 %2884
        %2886 = vadd.xlane.f32.xlu0 %v2877
        %v2887 = vpop.xlane.xlu0 %2886
        %2888 = vadd.xlane.f32.xlu0 %v2878
        %v2889 = vpop.xlane.xlu0 %2888
        %2890 = vadd.xlane.f32.xlu0 %v2879
        %v2891 = vpop.xlane.xlu0 %2890
        %v2892 = vmul.f32 %v2881, %v752
        %v2893 = vmul.f32 %v2883, %v752
        %v2894 = vmul.f32 %v2885, %v752
        %v2895 = vmul.f32 %v2887, %v752
        %v2896 = vmul.f32 %v2889, %v752
        %v2897 = vmul.f32 %v2891, %v752
        %v2898 = vadd.f32 %v2892, 1e-06
        %v2899 = vadd.f32 %v2893, 1e-06
        %v2900 = vadd.f32 %v2894, 1e-06
        %v2901 = vadd.f32 %v2895, 1e-06
        %v2902 = vadd.f32 %v2896, 1e-06
        %v2903 = vadd.f32 %v2897, 1e-06
        %v2904 = vrsqrt.pop %v2898
        %v2905 = vrsqrt.pop %v2899
        %v2906 = vrsqrt.pop %v2900
        %v2907 = vrsqrt.pop %v2901
        %v2908 = vrsqrt.pop %v2902
        %v2909 = vrsqrt.pop %v2903
        %v2910 = vmul.f32 %v2868, %v2904
        %v2911 = vmul.f32 %v2869, %v2905
        %v2912 = vmul.f32 %v2870, %v2906
        %v2913 = vmul.f32 %v2871, %v2907
        %v2914 = vmul.f32 %v2872, %v2908
        %v2915 = vmul.f32 %v2873, %v2909
        %v2917 = vlaneseq
        %v2918 = vshrl.u32 %v2917, 7
        %v2919 = vsub.s32 0, %v2918
        %v2920 = vrot.slane %v2848, %v2919
        %v2922 = vmul.f32 %v2910, %v2920
        %v2923 = vmul.f32 %v2911, %v2920
        %v2924 = vmul.f32 %v2912, %v2920
        %v2925 = vmul.f32 %v2913, %v2920
        %v2926 = vmul.f32 %v2914, %v2920
        %v2927 = vmul.f32 %v2915, %v2920
        %v2929 = vlaneseq
        %v2930 = vshrl.u32 %v2929, 7
        %v2931 = vsub.s32 0, %v2930
        %v2932 = vrot.slane %v2849, %v2931
        %v2934 = vadd.f32 %v2922, %v2932
        %v2935 = vadd.f32 %v2923, %v2932
        %v2936 = vadd.f32 %v2924, %v2932
        %v2937 = vadd.f32 %v2925, %v2932
        %v2938 = vadd.f32 %v2926, %v2932
        %v2939 = vadd.f32 %v2927, %v2932
        %v2940 = vpack.c.bf16 %v2935, %v2934
        %v2941 = vpack.c.bf16 %v2937, %v2936
        %v2942 = vpack.c.bf16 %v2939, %v2938
        %v2943 = vld [vmem:[%s707] sm:$0xff]
        %v2944 = vld [vmem:[%s707 + $0x8] sm:$0xff]
        %v2945 = vld [vmem:[%s707 + $0x10] sm:$0xff]
        %v2946 = vld [vmem:[%s707 + $0x18] sm:$0xff]
        %v2947 = vld [vmem:[%s707 + $0x20] sm:$0xff]
        %v2948 = vld [vmem:[%s707 + $0x28] sm:$0xff]
        %v2949 = vld [vmem:[%s707 + $0x30] sm:$0xff]
        %v2950 = vld [vmem:[%s707 + $0x38] sm:$0xff]
        %v2951 = vld [vmem:[%s707 + $0x40] sm:$0xff]
        %v2952 = vld [vmem:[%s707 + $0x48] sm:$0xff]
        %v2953 = vld [vmem:[%s707 + $0x50] sm:$0xff]
        %v2954 = vld [vmem:[%s707 + $0x58] sm:$0xff]
        %v2955 = vld [vmem:[%s707 + $0x60] sm:$0xff]
        %v2956 = vld [vmem:[%s707 + $0x68] sm:$0xff]
        %v2957 = vld [vmem:[%s707 + $0x70] sm:$0xff]
        %v2958 = vld [vmem:[%s707 + $0x78] sm:$0xff]
        %v2959 = vld [vmem:[%s707 + $0x80] sm:$0xff]
        %v2960 = vld [vmem:[%s707 + $0x88] sm:$0xff]
        %v2961 = vld [vmem:[%s707 + $0x90] sm:$0xff]
        %v2962 = vld [vmem:[%s707 + $0x98] sm:$0xff]
        %v2963 = vld [vmem:[%s707 + $0xa0] sm:$0xff]
        %v2964 = vld [vmem:[%s707 + $0xa8] sm:$0xff]
        %v2965 = vld [vmem:[%s707 + $0xb0] sm:$0xff]
        %v2966 = vld [vmem:[%s707 + $0xb8] sm:$0xff]
        %v2967 = vld [vmem:[%s707 + $0xc0] sm:$0xff]
        %v2968 = vld [vmem:[%s707 + $0xc8] sm:$0xff]
        %v2969 = vld [vmem:[%s707 + $0xd0] sm:$0xff]
        %v2970 = vld [vmem:[%s707 + $0xd8] sm:$0xff]
        %v2971 = vld [vmem:[%s707 + $0xe0] sm:$0xff]
        %v2972 = vld [vmem:[%s707 + $0xe8] sm:$0xff]
        %v2973 = vld [vmem:[%s707 + $0xf0] sm:$0xff]
        %v2974 = vld [vmem:[%s707 + $0xf8] sm:$0xff]
        %v2975 = vld [vmem:[%s711] sm:$0xf]
        %v2977 = vlaneseq
        %v2978 = vshrl.u32 %v2977, 7
        %v2979 = vsub.s32 0, %v2978
        %v2980 = vrot.slane %v2975, %v2979
        %v2981 = vlaneseq
        %v2982 = vshrl.u32 %v2981, 7
        %v2983 = vsub.s32 1, %v2982
        %v2984 = vrot.slane %v2975, %v2983
        %v2985 = vlaneseq
        %v2986 = vshrl.u32 %v2985, 7
        %v2987 = vsub.s32 2, %v2986
        %v2988 = vrot.slane %v2975, %v2987
        %v2989 = vlaneseq
        %v2990 = vshrl.u32 %v2989, 7
        %v2991 = vsub.s32 3, %v2990
        %v2992 = vrot.slane %v2975, %v2991
        %v3029 = vunpack.c.l.b16 %v2943
        %v3030 = vunpack.c.h.b16 %v2943
        %v3031 = vunpack.c.l.b16 %v2944
        %v3032 = vunpack.c.h.b16 %v2944
        %v3033 = vunpack.c.l.b16 %v2945
        %v3034 = vunpack.c.h.b16 %v2945
        %v3035 = vunpack.c.l.b16 %v2946
        %v3036 = vunpack.c.h.b16 %v2946
        %v3037 = vunpack.c.l.b16 %v2947
        %v3038 = vunpack.c.h.b16 %v2947
        %v3039 = vunpack.c.l.b16 %v2948
        %v3040 = vunpack.c.h.b16 %v2948
        %v3041 = vunpack.c.l.b16 %v2949
        %v3042 = vunpack.c.h.b16 %v2949
        %v3043 = vunpack.c.l.b16 %v2950
        %v3044 = vunpack.c.h.b16 %v2950
        %v3045 = vunpack.c.l.b16 %v2951
        %v3046 = vunpack.c.h.b16 %v2951
        %v3047 = vunpack.c.l.b16 %v2952
        %v3048 = vunpack.c.h.b16 %v2952
        %v3049 = vunpack.c.l.b16 %v2953
        %v3050 = vunpack.c.h.b16 %v2953
        %v3051 = vunpack.c.l.b16 %v2954
        %v3052 = vunpack.c.h.b16 %v2954
        %v3053 = vunpack.c.l.b16 %v2955
        %v3054 = vunpack.c.h.b16 %v2955
        %v3055 = vunpack.c.l.b16 %v2956
        %v3056 = vunpack.c.h.b16 %v2956
        %v3057 = vunpack.c.l.b16 %v2957
        %v3058 = vunpack.c.h.b16 %v2957
        %v3059 = vunpack.c.l.b16 %v2958
        %v3060 = vunpack.c.h.b16 %v2958
        %v3061 = vunpack.c.l.b16 %v2959
        %v3062 = vunpack.c.h.b16 %v2959
        %v3063 = vunpack.c.l.b16 %v2960
        %v3064 = vunpack.c.h.b16 %v2960
        %v3065 = vunpack.c.l.b16 %v2961
        %v3066 = vunpack.c.h.b16 %v2961
        %v3067 = vunpack.c.l.b16 %v2962
        %v3068 = vunpack.c.h.b16 %v2962
        %v3069 = vunpack.c.l.b16 %v2963
        %v3070 = vunpack.c.h.b16 %v2963
        %v3071 = vunpack.c.l.b16 %v2964
        %v3072 = vunpack.c.h.b16 %v2964
        %v3073 = vunpack.c.l.b16 %v2965
        %v3074 = vunpack.c.h.b16 %v2965
        %v3075 = vunpack.c.l.b16 %v2966
        %v3076 = vunpack.c.h.b16 %v2966
        %v3077 = vunpack.c.l.b16 %v2967
        %v3078 = vunpack.c.h.b16 %v2967
        %v3079 = vunpack.c.l.b16 %v2968
        %v3080 = vunpack.c.h.b16 %v2968
        %v3081 = vunpack.c.l.b16 %v2969
        %v3082 = vunpack.c.h.b16 %v2969
        %v3083 = vunpack.c.l.b16 %v2970
        %v3084 = vunpack.c.h.b16 %v2970
        %v3085 = vunpack.c.l.b16 %v2971
        %v3086 = vunpack.c.h.b16 %v2971
        %v3087 = vunpack.c.l.b16 %v2972
        %v3088 = vunpack.c.h.b16 %v2972
        %v3089 = vunpack.c.l.b16 %v2973
        %v3090 = vunpack.c.h.b16 %v2973
        %v3091 = vunpack.c.l.b16 %v2974
        %v3092 = vunpack.c.h.b16 %v2974
        %v3093 = vpack.c.b16 %v3033, %v3029
        %v3094 = vpack.c.b16 %v3034, %v3030
        %v3095 = vpack.c.b16 %v3035, %v3031
        %v3096 = vpack.c.b16 %v3036, %v3032
        %v3097 = vpack.c.b16 %v3041, %v3037
        %v3098 = vpack.c.b16 %v3042, %v3038
        %v3099 = vpack.c.b16 %v3043, %v3039
        %v3100 = vpack.c.b16 %v3044, %v3040
        %v3101 = vpack.c.b16 %v3049, %v3045
        %v3102 = vpack.c.b16 %v3050, %v3046
        %v3103 = vpack.c.b16 %v3051, %v3047
        %v3104 = vpack.c.b16 %v3052, %v3048
        %v3105 = vpack.c.b16 %v3057, %v3053
        %v3106 = vpack.c.b16 %v3058, %v3054
        %v3107 = vpack.c.b16 %v3059, %v3055
        %v3108 = vpack.c.b16 %v3060, %v3056
        %v3109 = vpack.c.b16 %v3065, %v3061
        %v3110 = vpack.c.b16 %v3066, %v3062
        %v3111 = vpack.c.b16 %v3067, %v3063
        %v3112 = vpack.c.b16 %v3068, %v3064
        %v3113 = vpack.c.b16 %v3073, %v3069
        %v3114 = vpack.c.b16 %v3074, %v3070
        %v3115 = vpack.c.b16 %v3075, %v3071
        %v3116 = vpack.c.b16 %v3076, %v3072
        %v3117 = vpack.c.b16 %v3081, %v3077
        %v3118 = vpack.c.b16 %v3082, %v3078
        %v3119 = vpack.c.b16 %v3083, %v3079
        %v3120 = vpack.c.b16 %v3084, %v3080
        %v3121 = vpack.c.b16 %v3089, %v3085
        %v3122 = vpack.c.b16 %v3090, %v3086
        %v3123 = vpack.c.b16 %v3091, %v3087
        %v3124 = vpack.c.b16 %v3092, %v3088
        %3157 = vmatprep.subr.bf16.mxu0 %v3094
        %3158 = vmatpush1.bf16.msra.mxu0 %v3093
        %3159 = vmatprep.subr.bf16.mxu0 %v3098
        %3160 = vmatpush1.bf16.msra.mxu0 %v3097
        %3161 = vmatprep.subr.bf16.mxu0 %v3102
        %3162 = vmatpush1.bf16.msra.mxu0 %v3101
        %3163 = vmatprep.subr.bf16.mxu0 %v3106
        %3164 = vmatpush1.bf16.msra.mxu0 %v3105
        %3165 = vmatprep.subr.bf16.mxu0 %v3110
        %3166 = vmatpush1.bf16.msra.mxu0 %v3109
        %3167 = vmatprep.subr.bf16.mxu0 %v3114
        %3168 = vmatpush1.bf16.msra.mxu0 %v3113
        %3169 = vmatprep.subr.bf16.mxu0 %v3118
        %3170 = vmatpush1.bf16.msra.mxu0 %v3117
        %3171 = vmatprep.subr.bf16.mxu0 %v3122
        %3172 = vmatpush1.bf16.msra.mxu0 %v3121
        %3173 = vmatprep.subr.bf16.mxu0 0
        %3174 = vmatpush1.bf16.msra.mxu0 0
        %3175 = vmatprep.subr.bf16.mxu0 0
        %3176 = vmatpush1.bf16.msra.mxu0 0
        %3177 = vmatprep.subr.bf16.mxu0 0
        %3178 = vmatpush1.bf16.msra.mxu0 0
        %3179 = vmatprep.subr.bf16.mxu0 0
        %3180 = vmatpush1.bf16.msra.mxu0 0
        %3181 = vmatprep.subr.bf16.mxu0 0
        %3182 = vmatpush1.bf16.msra.mxu0 0
        %3183 = vmatprep.subr.bf16.mxu0 0
        %3184 = vmatpush1.bf16.msra.mxu0 0
        %3185 = vmatprep.subr.bf16.mxu0 0
        %3186 = vmatpush1.bf16.msra.mxu0 0
        %3187 = vmatprep.subr.bf16.mxu0 0
        %3188 = vmatpush1.bf16.msra.mxu0 0
        %3189 = vmatprep.mubr.bf16.mxu0 0
        %3190 = vmatmul.mubr.bf16.gmra.mrb[0].mxu0 %v2940
        %v3191 = vpop.f32.mrb[0].mxu0
        %v3192 = vadd.f32 %v2980, %v3191
        %v3193 = vpop.f32.mrb[0].mxu0
        %v3194 = vadd.f32 %v2984, %v3193
        %v3195 = vpop.f32.mrb[0].mxu0
        %v3196 = vadd.f32 %v2980, %v3195
        %v3197 = vpop.f32.mrb[0].mxu0
        %v3198 = vadd.f32 %v2984, %v3197
        %3199 = vmatprep.mubr.bf16.mxu0 0
        %3200 = vmatmul.mubr.bf16.gmra.mrb[0].mxu0 %v2941
        %v3201 = vpop.f32.mrb[0].mxu0
        %v3202 = vadd.f32 %v2980, %v3201
        %v3203 = vpop.f32.mrb[0].mxu0
        %v3204 = vadd.f32 %v2984, %v3203
        %v3205 = vpop.f32.mrb[0].mxu0
        %v3206 = vadd.f32 %v2980, %v3205
        %v3207 = vpop.f32.mrb[0].mxu0
        %v3208 = vadd.f32 %v2984, %v3207
        %3209 = vmatprep.mubr.bf16.mxu0 0
        %3210 = vmatmul.mubr.bf16.gmra.mrb[0].mxu0 %v2942
        %v3211 = vpop.f32.mrb[0].mxu0
        %v3212 = vadd.f32 %v2980, %v3211
        %v3213 = vpop.f32.mrb[0].mxu0
        %v3214 = vadd.f32 %v2984, %v3213
        %v3215 = vpop.f32.mrb[0].mxu0
        %v3216 = vadd.f32 %v2980, %v3215
        %v3217 = vpop.f32.mrb[0].mxu0
        %v3218 = vadd.f32 %v2984, %v3217
        %3219 = vdwg.mxu0
        %3220 = vmatprep.subr.bf16.mxu0 %v3096
        %3221 = vmatpush1.bf16.msra.mxu0 %v3095
        %3222 = vmatprep.subr.bf16.mxu0 %v3100
        %3223 = vmatpush1.bf16.msra.mxu0 %v3099
        %3224 = vmatprep.subr.bf16.mxu0 %v3104
        %3225 = vmatpush1.bf16.msra.mxu0 %v3103
        %3226 = vmatprep.subr.bf16.mxu0 %v3108
        %3227 = vmatpush1.bf16.msra.mxu0 %v3107
        %3228 = vmatprep.subr.bf16.mxu0 %v3112
        %3229 = vmatpush1.bf16.msra.mxu0 %v3111
        %3230 = vmatprep.subr.bf16.mxu0 %v3116
        %3231 = vmatpush1.bf16.msra.mxu0 %v3115
        %3232 = vmatprep.subr.bf16.mxu0 %v3120
        %3233 = vmatpush1.bf16.msra.mxu0 %v3119
        %3234 = vmatprep.subr.bf16.mxu0 %v3124
        %3235 = vmatpush1.bf16.msra.mxu0 %v3123
        %3236 = vmatprep.subr.bf16.mxu0 0
        %3237 = vmatpush1.bf16.msra.mxu0 0
        %3238 = vmatprep.subr.bf16.mxu0 0
        %3239 = vmatpush1.bf16.msra.mxu0 0
        %3240 = vmatprep.subr.bf16.mxu0 0
        %3241 = vmatpush1.bf16.msra.mxu0 0
        %3242 = vmatprep.subr.bf16.mxu0 0
        %3243 = vmatpush1.bf16.msra.mxu0 0
        %3244 = vmatprep.subr.bf16.mxu0 0
        %3245 = vmatpush1.bf16.msra.mxu0 0
        %3246 = vmatprep.subr.bf16.mxu0 0
        %3247 = vmatpush1.bf16.msra.mxu0 0
        %3248 = vmatprep.subr.bf16.mxu0 0
        %3249 = vmatpush1.bf16.msra.mxu0 0
        %3250 = vmatprep.subr.bf16.mxu0 0
        %3251 = vmatpush1.bf16.msra.mxu0 0
        %3252 = vmatprep.mubr.bf16.mxu0 0
        %3253 = vmatmul.mubr.bf16.gmra.mrb[0].mxu0 %v2940
        %v3254 = vpop.f32.mrb[0].mxu0
        %v3255 = vadd.f32 %v2988, %v3254
        %v3256 = vpop.f32.mrb[0].mxu0
        %v3257 = vadd.f32 %v2992, %v3256
        %v3258 = vpop.f32.mrb[0].mxu0
        %v3259 = vadd.f32 %v2988, %v3258
        %v3260 = vpop.f32.mrb[0].mxu0
        %v3261 = vadd.f32 %v2992, %v3260
        %3262 = vmatprep.mubr.bf16.mxu0 0
        %3263 = vmatmul.mubr.bf16.gmra.mrb[0].mxu0 %v2941
        %v3264 = vpop.f32.mrb[0].mxu0
        %v3265 = vadd.f32 %v2988, %v3264
        %v3266 = vpop.f32.mrb[0].mxu0
        %v3267 = vadd.f32 %v2992, %v3266
        %v3268 = vpop.f32.mrb[0].mxu0
        %v3269 = vadd.f32 %v2988, %v3268
        %v3270 = vpop.f32.mrb[0].mxu0
        %v3271 = vadd.f32 %v2992, %v3270
        %3272 = vmatprep.mubr.bf16.mxu0 0
        %3273 = vmatmul.mubr.bf16.gmra.mrb[0].mxu0 %v2942
        %v3274 = vpop.f32.mrb[0].mxu0
        %v3275 = vadd.f32 %v2988, %v3274
        %v3276 = vpop.f32.mrb[0].mxu0
        %v3277 = vadd.f32 %v2992, %v3276
        %v3278 = vpop.f32.mrb[0].mxu0
        %v3279 = vadd.f32 %v2988, %v3278
        %v3280 = vpop.f32.mrb[0].mxu0
        %v3281 = vadd.f32 %v2992, %v3280
        %3282 = vdwg.mxu0
        %v3283 = vmul.f32 %v3192, %v3192
        %v3284 = vmul.f32 %v3194, %v3194
        %v3285 = vmul.f32 %v3255, %v3255
        %v3286 = vmul.f32 %v3257, %v3257
        %v3287 = vmul.f32 %v3196, %v3196
        %v3288 = vmul.f32 %v3198, %v3198
        %v3289 = vmul.f32 %v3259, %v3259
        %v3290 = vmul.f32 %v3261, %v3261
        %v3291 = vmul.f32 %v3202, %v3202
        %v3292 = vmul.f32 %v3204, %v3204
        %v3293 = vmul.f32 %v3265, %v3265
        %v3294 = vmul.f32 %v3267, %v3267
        %v3295 = vmul.f32 %v3206, %v3206
        %v3296 = vmul.f32 %v3208, %v3208
        %v3297 = vmul.f32 %v3269, %v3269
        %v3298 = vmul.f32 %v3271, %v3271
        %v3299 = vmul.f32 %v3212, %v3212
        %v3300 = vmul.f32 %v3214, %v3214
        %v3301 = vmul.f32 %v3275, %v3275
        %v3302 = vmul.f32 %v3277, %v3277
        %v3303 = vmul.f32 %v3216, %v3216
        %v3304 = vmul.f32 %v3218, %v3218
        %v3305 = vmul.f32 %v3279, %v3279
        %v3306 = vmul.f32 %v3281, %v3281
        %v3307 = vmul.f32 %v3192, %v3283
        %v3308 = vmul.f32 %v3194, %v3284
        %v3309 = vmul.f32 %v3255, %v3285
        %v3310 = vmul.f32 %v3257, %v3286
        %v3311 = vmul.f32 %v3196, %v3287
        %v3312 = vmul.f32 %v3198, %v3288
        %v3313 = vmul.f32 %v3259, %v3289
        %v3314 = vmul.f32 %v3261, %v3290
        %v3315 = vmul.f32 %v3202, %v3291
        %v3316 = vmul.f32 %v3204, %v3292
        %v3317 = vmul.f32 %v3265, %v3293
        %v3318 = vmul.f32 %v3267, %v3294
        %v3319 = vmul.f32 %v3206, %v3295
        %v3320 = vmul.f32 %v3208, %v3296
        %v3321 = vmul.f32 %v3269, %v3297
        %v3322 = vmul.f32 %v3271, %v3298
        %v3323 = vmul.f32 %v3212, %v3299
        %v3324 = vmul.f32 %v3214, %v3300
        %v3325 = vmul.f32 %v3275, %v3301
        %v3326 = vmul.f32 %v3277, %v3302
        %v3327 = vmul.f32 %v3216, %v3303
        %v3328 = vmul.f32 %v3218, %v3304
        %v3329 = vmul.f32 %v3279, %v3305
        %v3330 = vmul.f32 %v3281, %v3306
        %v3331 = vmul.f32 %v3307, 0.044715
        %v3332 = vmul.f32 %v3308, 0.044715
        %v3333 = vmul.f32 %v3309, 0.044715
        %v3334 = vmul.f32 %v3310, 0.044715
        %v3335 = vmul.f32 %v3311, 0.044715
        %v3336 = vmul.f32 %v3312, 0.044715
        %v3337 = vmul.f32 %v3313, 0.044715
        %v3338 = vmul.f32 %v3314, 0.044715
        %v3339 = vmul.f32 %v3315, 0.044715
        %v3340 = vmul.f32 %v3316, 0.044715
        %v3341 = vmul.f32 %v3317, 0.044715
        %v3342 = vmul.f32 %v3318, 0.044715
        %v3343 = vmul.f32 %v3319, 0.044715
        %v3344 = vmul.f32 %v3320, 0.044715
        %v3345 = vmul.f32 %v3321, 0.044715
        %v3346 = vmul.f32 %v3322, 0.044715
        %v3347 = vmul.f32 %v3323, 0.044715
        %v3348 = vmul.f32 %v3324, 0.044715
        %v3349 = vmul.f32 %v3325, 0.044715
        %v3350 = vmul.f32 %v3326, 0.044715
        %v3351 = vmul.f32 %v3327, 0.044715
        %v3352 = vmul.f32 %v3328, 0.044715
        %v3353 = vmul.f32 %v3329, 0.044715
        %v3354 = vmul.f32 %v3330, 0.044715
        %v3355 = vadd.f32 %v3192, %v3331
        %v3356 = vadd.f32 %v3194, %v3332
        %v3357 = vadd.f32 %v3255, %v3333
        %v3358 = vadd.f32 %v3257, %v3334
        %v3359 = vadd.f32 %v3196, %v3335
        %v3360 = vadd.f32 %v3198, %v3336
        %v3361 = vadd.f32 %v3259, %v3337
        %v3362 = vadd.f32 %v3261, %v3338
        %v3363 = vadd.f32 %v3202, %v3339
        %v3364 = vadd.f32 %v3204, %v3340
        %v3365 = vadd.f32 %v3265, %v3341
        %v3366 = vadd.f32 %v3267, %v3342
        %v3367 = vadd.f32 %v3206, %v3343
        %v3368 = vadd.f32 %v3208, %v3344
        %v3369 = vadd.f32 %v3269, %v3345
        %v3370 = vadd.f32 %v3271, %v3346
        %v3371 = vadd.f32 %v3212, %v3347
        %v3372 = vadd.f32 %v3214, %v3348
        %v3373 = vadd.f32 %v3275, %v3349
        %v3374 = vadd.f32 %v3277, %v3350
        %v3375 = vadd.f32 %v3216, %v3351
        %v3376 = vadd.f32 %v3218, %v3352
        %v3377 = vadd.f32 %v3279, %v3353
        %v3378 = vadd.f32 %v3281, %v3354
        %v3379 = vmul.f32 %v3355, 0.7978846
        %v3380 = vmul.f32 %v3356, 0.7978846
        %v3381 = vmul.f32 %v3357, 0.7978846
        %v3382 = vmul.f32 %v3358, 0.7978846
        %v3383 = vmul.f32 %v3359, 0.7978846
        %v3384 = vmul.f32 %v3360, 0.7978846
        %v3385 = vmul.f32 %v3361, 0.7978846
        %v3386 = vmul.f32 %v3362, 0.7978846
        %v3387 = vmul.f32 %v3363, 0.7978846
        %v3388 = vmul.f32 %v3364, 0.7978846
        %v3389 = vmul.f32 %v3365, 0.7978846
        %v3390 = vmul.f32 %v3366, 0.7978846
        %v3391 = vmul.f32 %v3367, 0.7978846
        %v3392 = vmul.f32 %v3368, 0.7978846
        %v3393 = vmul.f32 %v3369, 0.7978846
        %v3394 = vmul.f32 %v3370, 0.7978846
        %v3395 = vmul.f32 %v3371, 0.7978846
        %v3396 = vmul.f32 %v3372, 0.7978846
        %v3397 = vmul.f32 %v3373, 0.7978846
        %v3398 = vmul.f32 %v3374, 0.7978846
        %v3399 = vmul.f32 %v3375, 0.7978846
        %v3400 = vmul.f32 %v3376, 0.7978846
        %v3401 = vmul.f32 %v3377, 0.7978846
        %v3402 = vmul.f32 %v3378, 0.7978846
        %v3403 = vtanh.pop %v3379
        %v3404 = vtanh.pop %v3380
        %v3405 = vtanh.pop %v3381
        %v3406 = vtanh.pop %v3382
        %v3407 = vtanh.pop %v3383
        %v3408 = vtanh.pop %v3384
        %v3409 = vtanh.pop %v3385
        %v3410 = vtanh.pop %v3386
        %v3411 = vtanh.pop %v3387
        %v3412 = vtanh.pop %v3388
        %v3413 = vtanh.pop %v3389
        %v3414 = vtanh.pop %v3390
        %v3415 = vtanh.pop %v3391
        %v3416 = vtanh.pop %v3392
        %v3417 = vtanh.pop %v3393
        %v3418 = vtanh.pop %v3394
        %v3419 = vtanh.pop %v3395
        %v3420 = vtanh.pop %v3396
        %v3421 = vtanh.pop %v3397
        %v3422 = vtanh.pop %v3398
        %v3423 = vtanh.pop %v3399
        %v3424 = vtanh.pop %v3400
        %v3425 = vtanh.pop %v3401
        %v3426 = vtanh.pop %v3402
        %v3427 = vadd.f32 %v3403, 1.0
        %v3428 = vadd.f32 %v3404, 1.0
        %v3429 = vadd.f32 %v3405, 1.0
        %v3430 = vadd.f32 %v3406, 1.0
        %v3431 = vadd.f32 %v3407, 1.0
        %v3432 = vadd.f32 %v3408, 1.0
        %v3433 = vadd.f32 %v3409, 1.0
        %v3434 = vadd.f32 %v3410, 1.0
        %v3435 = vadd.f32 %v3411, 1.0
        %v3436 = vadd.f32 %v3412, 1.0
        %v3437 = vadd.f32 %v3413, 1.0
        %v3438 = vadd.f32 %v3414, 1.0
        %v3439 = vadd.f32 %v3415, 1.0
        %v3440 = vadd.f32 %v3416, 1.0
        %v3441 = vadd.f32 %v3417, 1.0
        %v3442 = vadd.f32 %v3418, 1.0
        %v3443 = vadd.f32 %v3419, 1.0
        %v3444 = vadd.f32 %v3420, 1.0
        %v3445 = vadd.f32 %v3421, 1.0
        %v3446 = vadd.f32 %v3422, 1.0
        %v3447 = vadd.f32 %v3423, 1.0
        %v3448 = vadd.f32 %v3424, 1.0
        %v3449 = vadd.f32 %v3425, 1.0
        %v3450 = vadd.f32 %v3426, 1.0
        %v3451 = vmul.f32 %v3427, 0.5
        %v3452 = vmul.f32 %v3428, 0.5
        %v3453 = vmul.f32 %v3429, 0.5
        %v3454 = vmul.f32 %v3430, 0.5
        %v3455 = vmul.f32 %v3431, 0.5
        %v3456 = vmul.f32 %v3432, 0.5
        %v3457 = vmul.f32 %v3433, 0.5
        %v3458 = vmul.f32 %v3434, 0.5
        %v3459 = vmul.f32 %v3435, 0.5
        %v3460 = vmul.f32 %v3436, 0.5
        %v3461 = vmul.f32 %v3437, 0.5
        %v3462 = vmul.f32 %v3438, 0.5
        %v3463 = vmul.f32 %v3439, 0.5
        %v3464 = vmul.f32 %v3440, 0.5
        %v3465 = vmul.f32 %v3441, 0.5
        %v3466 = vmul.f32 %v3442, 0.5
        %v3467 = vmul.f32 %v3443, 0.5
        %v3468 = vmul.f32 %v3444, 0.5
        %v3469 = vmul.f32 %v3445, 0.5
        %v3470 = vmul.f32 %v3446, 0.5
        %v3471 = vmul.f32 %v3447, 0.5
        %v3472 = vmul.f32 %v3448, 0.5
        %v3473 = vmul.f32 %v3449, 0.5
        %v3474 = vmul.f32 %v3450, 0.5
        %v3475 = vmul.f32 %v3192, %v3451
        %v3476 = vmul.f32 %v3194, %v3452
        %v3477 = vmul.f32 %v3255, %v3453
        %v3478 = vmul.f32 %v3257, %v3454
        %v3479 = vmul.f32 %v3196, %v3455
        %v3480 = vmul.f32 %v3198, %v3456
        %v3481 = vmul.f32 %v3259, %v3457
        %v3482 = vmul.f32 %v3261, %v3458
        %v3483 = vmul.f32 %v3202, %v3459
        %v3484 = vmul.f32 %v3204, %v3460
        %v3485 = vmul.f32 %v3265, %v3461
        %v3486 = vmul.f32 %v3267, %v3462
        %v3487 = vmul.f32 %v3206, %v3463
        %v3488 = vmul.f32 %v3208, %v3464
        %v3489 = vmul.f32 %v3269, %v3465
        %v3490 = vmul.f32 %v3271, %v3466
        %v3491 = vmul.f32 %v3212, %v3467
        %v3492 = vmul.f32 %v3214, %v3468
        %v3493 = vmul.f32 %v3275, %v3469
        %v3494 = vmul.f32 %v3277, %v3470
        %v3495 = vmul.f32 %v3216, %v3471
        %v3496 = vmul.f32 %v3218, %v3472
        %v3497 = vmul.f32 %v3279, %v3473
        %v3498 = vmul.f32 %v3281, %v3474
        %v3499 = vpack.c.bf16 %v3479, %v3475
        %v3500 = vpack.c.bf16 %v3480, %v3476
        %v3501 = vpack.c.bf16 %v3481, %v3477
        %v3502 = vpack.c.bf16 %v3482, %v3478
        %v3503 = vpack.c.bf16 %v3487, %v3483
        %v3504 = vpack.c.bf16 %v3488, %v3484
        %v3505 = vpack.c.bf16 %v3489, %v3485
        %v3506 = vpack.c.bf16 %v3490, %v3486
        %v3507 = vpack.c.bf16 %v3495, %v3491
        %v3508 = vpack.c.bf16 %v3496, %v3492
        %v3509 = vpack.c.bf16 %v3497, %v3493
        %v3510 = vpack.c.bf16 %v3498, %v3494
        %v3511 = vld [vmem:[%s601] sm:$0xf]
        %v3512 = vld [vmem:[%s601 + $0x4] sm:$0xf]
        %v3513 = vld [vmem:[%s601 + $0x8] sm:$0xf]
        %v3514 = vld [vmem:[%s601 + $0xc] sm:$0xf]
        %v3515 = vld [vmem:[%s601 + $0x10] sm:$0xf]
        %v3516 = vld [vmem:[%s601 + $0x14] sm:$0xf]
        %v3517 = vld [vmem:[%s601 + $0x18] sm:$0xf]
        %v3518 = vld [vmem:[%s601 + $0x1c] sm:$0xf]
        %v3519 = vld [vmem:[%s601 + $0x20] sm:$0xf]
        %v3520 = vld [vmem:[%s601 + $0x24] sm:$0xf]
        %v3521 = vld [vmem:[%s601 + $0x28] sm:$0xf]
        %v3522 = vld [vmem:[%s601 + $0x2c] sm:$0xf]
        %v3523 = vld [vmem:[%s601 + $0x30] sm:$0xf]
        %v3524 = vld [vmem:[%s601 + $0x34] sm:$0xf]
        %v3525 = vld [vmem:[%s601 + $0x38] sm:$0xf]
        %v3526 = vld [vmem:[%s601 + $0x3c] sm:$0xf]
        %v3527 = vld [vmem:[%s601 + $0x40] sm:$0xf]
        %v3528 = vld [vmem:[%s601 + $0x44] sm:$0xf]
        %v3529 = vld [vmem:[%s601 + $0x48] sm:$0xf]
        %v3530 = vld [vmem:[%s601 + $0x4c] sm:$0xf]
        %v3531 = vld [vmem:[%s601 + $0x50] sm:$0xf]
        %v3532 = vld [vmem:[%s601 + $0x54] sm:$0xf]
        %v3533 = vld [vmem:[%s601 + $0x58] sm:$0xf]
        %v3534 = vld [vmem:[%s601 + $0x5c] sm:$0xf]
        %v3535 = vld [vmem:[%s601 + $0x60] sm:$0xf]
        %v3536 = vld [vmem:[%s601 + $0x64] sm:$0xf]
        %v3537 = vld [vmem:[%s601 + $0x68] sm:$0xf]
        %v3538 = vld [vmem:[%s601 + $0x6c] sm:$0xf]
        %v3539 = vld [vmem:[%s601 + $0x70] sm:$0xf]
        %v3540 = vld [vmem:[%s601 + $0x74] sm:$0xf]
        %v3541 = vld [vmem:[%s601 + $0x78] sm:$0xf]
        %v3542 = vld [vmem:[%s601 + $0x7c] sm:$0xf]
        %v3543 = vld [vmem:[%s601 + $0x80] sm:$0xf]
        %v3544 = vld [vmem:[%s601 + $0x84] sm:$0xf]
        %v3545 = vld [vmem:[%s601 + $0x88] sm:$0xf]
        %v3546 = vld [vmem:[%s601 + $0x8c] sm:$0xf]
        %v3547 = vld [vmem:[%s601 + $0x90] sm:$0xf]
        %v3548 = vld [vmem:[%s601 + $0x94] sm:$0xf]
        %v3549 = vld [vmem:[%s601 + $0x98] sm:$0xf]
        %v3550 = vld [vmem:[%s601 + $0x9c] sm:$0xf]
        %v3551 = vld [vmem:[%s601 + $0xa0] sm:$0xf]
        %v3552 = vld [vmem:[%s601 + $0xa4] sm:$0xf]
        %v3553 = vld [vmem:[%s601 + $0xa8] sm:$0xf]
        %v3554 = vld [vmem:[%s601 + $0xac] sm:$0xf]
        %v3555 = vld [vmem:[%s601 + $0xb0] sm:$0xf]
        %v3556 = vld [vmem:[%s601 + $0xb4] sm:$0xf]
        %v3557 = vld [vmem:[%s601 + $0xb8] sm:$0xf]
        %v3558 = vld [vmem:[%s601 + $0xbc] sm:$0xf]
        %v3559 = vld [vmem:[%s601 + $0xc0] sm:$0xf]
        %v3560 = vld [vmem:[%s601 + $0xc4] sm:$0xf]
        %v3561 = vld [vmem:[%s601 + $0xc8] sm:$0xf]
        %v3562 = vld [vmem:[%s601 + $0xcc] sm:$0xf]
        %v3563 = vld [vmem:[%s601 + $0xd0] sm:$0xf]
        %v3564 = vld [vmem:[%s601 + $0xd4] sm:$0xf]
        %v3565 = vld [vmem:[%s601 + $0xd8] sm:$0xf]
        %v3566 = vld [vmem:[%s601 + $0xdc] sm:$0xf]
        %v3567 = vld [vmem:[%s601 + $0xe0] sm:$0xf]
        %v3568 = vld [vmem:[%s601 + $0xe4] sm:$0xf]
        %v3569 = vld [vmem:[%s601 + $0xe8] sm:$0xf]
        %v3570 = vld [vmem:[%s601 + $0xec] sm:$0xf]
        %v3571 = vld [vmem:[%s601 + $0xf0] sm:$0xf]
        %v3572 = vld [vmem:[%s601 + $0xf4] sm:$0xf]
        %v3573 = vld [vmem:[%s601 + $0xf8] sm:$0xf]
        %v3574 = vld [vmem:[%s601 + $0xfc] sm:$0xf]
        %v3575 = vld [vmem:[%s714] sm:$0x1]
        %v3577 = vlaneseq
        %v3578 = vshrl.u32 %v3577, 7
        %v3579 = vsub.s32 0, %v3578
        %v3580 = vrot.slane %v3575, %v3579
        %v3646 = vunpack.c.l.b16 %v3511
        %v3647 = vunpack.c.l.b16 %v3512
        %v3648 = vunpack.c.l.b16 %v3513
        %v3649 = vunpack.c.l.b16 %v3514
        %v3650 = vunpack.c.l.b16 %v3515
        %v3651 = vunpack.c.l.b16 %v3516
        %v3652 = vunpack.c.l.b16 %v3517
        %v3653 = vunpack.c.l.b16 %v3518
        %v3654 = vunpack.c.l.b16 %v3519
        %v3655 = vunpack.c.l.b16 %v3520
        %v3656 = vunpack.c.l.b16 %v3521
        %v3657 = vunpack.c.l.b16 %v3522
        %v3658 = vunpack.c.l.b16 %v3523
        %v3659 = vunpack.c.l.b16 %v3524
        %v3660 = vunpack.c.l.b16 %v3525
        %v3661 = vunpack.c.l.b16 %v3526
        %v3662 = vunpack.c.l.b16 %v3527
        %v3663 = vunpack.c.l.b16 %v3528
        %v3664 = vunpack.c.l.b16 %v3529
        %v3665 = vunpack.c.l.b16 %v3530
        %v3666 = vunpack.c.l.b16 %v3531
        %v3667 = vunpack.c.l.b16 %v3532
        %v3668 = vunpack.c.l.b16 %v3533
        %v3669 = vunpack.c.l.b16 %v3534
        %v3670 = vunpack.c.l.b16 %v3535
        %v3671 = vunpack.c.l.b16 %v3536
        %v3672 = vunpack.c.l.b16 %v3537
        %v3673 = vunpack.c.l.b16 %v3538
        %v3674 = vunpack.c.l.b16 %v3539
        %v3675 = vunpack.c.l.b16 %v3540
        %v3676 = vunpack.c.l.b16 %v3541
        %v3677 = vunpack.c.l.b16 %v3542
        %v3678 = vunpack.c.l.b16 %v3543
        %v3679 = vunpack.c.l.b16 %v3544
        %v3680 = vunpack.c.l.b16 %v3545
        %v3681 = vunpack.c.l.b16 %v3546
        %v3682 = vunpack.c.l.b16 %v3547
        %v3683 = vunpack.c.l.b16 %v3548
        %v3684 = vunpack.c.l.b16 %v3549
        %v3685 = vunpack.c.l.b16 %v3550
        %v3686 = vunpack.c.l.b16 %v3551
        %v3687 = vunpack.c.l.b16 %v3552
        %v3688 = vunpack.c.l.b16 %v3553
        %v3689 = vunpack.c.l.b16 %v3554
        %v3690 = vunpack.c.l.b16 %v3555
        %v3691 = vunpack.c.l.b16 %v3556
        %v3692 = vunpack.c.l.b16 %v3557
        %v3693 = vunpack.c.l.b16 %v3558
        %v3694 = vunpack.c.l.b16 %v3559
        %v3695 = vunpack.c.l.b16 %v3560
        %v3696 = vunpack.c.l.b16 %v3561
        %v3697 = vunpack.c.l.b16 %v3562
        %v3698 = vunpack.c.l.b16 %v3563
        %v3699 = vunpack.c.l.b16 %v3564
        %v3700 = vunpack.c.l.b16 %v3565
        %v3701 = vunpack.c.l.b16 %v3566
        %v3702 = vunpack.c.l.b16 %v3567
        %v3703 = vunpack.c.l.b16 %v3568
        %v3704 = vunpack.c.l.b16 %v3569
        %v3705 = vunpack.c.l.b16 %v3570
        %v3706 = vunpack.c.l.b16 %v3571
        %v3707 = vunpack.c.l.b16 %v3572
        %v3708 = vunpack.c.l.b16 %v3573
        %v3709 = vunpack.c.l.b16 %v3574
        %v3710 = vpack.c.b16 %v3647, %v3646
        %v3711 = vpack.c.b16 %v3649, %v3648
        %v3712 = vpack.c.b16 %v3651, %v3650
        %v3713 = vpack.c.b16 %v3653, %v3652
        %v3714 = vpack.c.b16 %v3655, %v3654
        %v3715 = vpack.c.b16 %v3657, %v3656
        %v3716 = vpack.c.b16 %v3659, %v3658
        %v3717 = vpack.c.b16 %v3661, %v3660
        %v3718 = vpack.c.b16 %v3663, %v3662
        %v3719 = vpack.c.b16 %v3665, %v3664
        %v3720 = vpack.c.b16 %v3667, %v3666
        %v3721 = vpack.c.b16 %v3669, %v3668
        %v3722 = vpack.c.b16 %v3671, %v3670
        %v3723 = vpack.c.b16 %v3673, %v3672
        %v3724 = vpack.c.b16 %v3675, %v3674
        %v3725 = vpack.c.b16 %v3677, %v3676
        %v3726 = vpack.c.b16 %v3679, %v3678
        %v3727 = vpack.c.b16 %v3681, %v3680
        %v3728 = vpack.c.b16 %v3683, %v3682
        %v3729 = vpack.c.b16 %v3685, %v3684
        %v3730 = vpack.c.b16 %v3687, %v3686
        %v3731 = vpack.c.b16 %v3689, %v3688
        %v3732 = vpack.c.b16 %v3691, %v3690
        %v3733 = vpack.c.b16 %v3693, %v3692
        %v3734 = vpack.c.b16 %v3695, %v3694
        %v3735 = vpack.c.b16 %v3697, %v3696
        %v3736 = vpack.c.b16 %v3699, %v3698
        %v3737 = vpack.c.b16 %v3701, %v3700
        %v3738 = vpack.c.b16 %v3703, %v3702
        %v3739 = vpack.c.b16 %v3705, %v3704
        %v3740 = vpack.c.b16 %v3707, %v3706
        %v3741 = vpack.c.b16 %v3709, %v3708
        %3774 = vmatprep.subr.bf16.mxu0 0
        %3775 = vmatpush1.bf16.msra.mxu0 %v3710
        %3776 = vmatprep.subr.bf16.mxu0 0
        %3777 = vmatpush1.bf16.msra.mxu0 %v3711
        %3778 = vmatprep.subr.bf16.mxu0 0
        %3779 = vmatpush1.bf16.msra.mxu0 %v3712
        %3780 = vmatprep.subr.bf16.mxu0 0
        %3781 = vmatpush1.bf16.msra.mxu0 %v3713
        %3782 = vmatprep.subr.bf16.mxu0 0
        %3783 = vmatpush1.bf16.msra.mxu0 %v3714
        %3784 = vmatprep.subr.bf16.mxu0 0
        %3785 = vmatpush1.bf16.msra.mxu0 %v3715
        %3786 = vmatprep.subr.bf16.mxu0 0
        %3787 = vmatpush1.bf16.msra.mxu0 %v3716
        %3788 = vmatprep.subr.bf16.mxu0 0
        %3789 = vmatpush1.bf16.msra.mxu0 %v3717
        %3790 = vmatprep.subr.bf16.mxu0 0
        %3791 = vmatpush1.bf16.msra.mxu0 %v3718
        %3792 = vmatprep.subr.bf16.mxu0 0
        %3793 = vmatpush1.bf16.msra.mxu0 %v3719
        %3794 = vmatprep.subr.bf16.mxu0 0
        %3795 = vmatpush1.bf16.msra.mxu0 %v3720
        %3796 = vmatprep.subr.bf16.mxu0 0
        %3797 = vmatpush1.bf16.msra.mxu0 %v3721
        %3798 = vmatprep.subr.bf16.mxu0 0
        %3799 = vmatpush1.bf16.msra.mxu0 %v3722
        %3800 = vmatprep.subr.bf16.mxu0 0
        %3801 = vmatpush1.bf16.msra.mxu0 %v3723
        %3802 = vmatprep.subr.bf16.mxu0 0
        %3803 = vmatpush1.bf16.msra.mxu0 %v3724
        %3804 = vmatprep.subr.bf16.mxu0 0
        %3805 = vmatpush1.bf16.msra.mxu0 %v3725
        %3806 = vmatprep.mubr.bf16.mxu0 %v3500
        %3807 = vmatmul.mubr.bf16.gmra.mrb[0].mxu0 %v3499
        %v3808 = vpop.f32.mrb[0].mxu0
        %v3809 = vadd.f32 %v3580, %v3808
        %v3810 = vpop.f32.mrb[0].mxu0
        %v3811 = vpop.f32.mrb[0].mxu0
        %v3812 = vadd.f32 %v3580, %v3811
        %v3813 = vpop.f32.mrb[0].mxu0
        %3814 = vmatprep.mubr.bf16.mxu0 %v3504
        %3815 = vmatmul.mubr.bf16.gmra.mrb[0].mxu0 %v3503
        %v3816 = vpop.f32.mrb[0].mxu0
        %v3817 = vadd.f32 %v3580, %v3816
        %v3818 = vpop.f32.mrb[0].mxu0
        %v3819 = vpop.f32.mrb[0].mxu0
        %v3820 = vadd.f32 %v3580, %v3819
        %v3821 = vpop.f32.mrb[0].mxu0
        %3822 = vmatprep.mubr.bf16.mxu0 %v3508
        %3823 = vmatmul.mubr.bf16.gmra.mrb[0].mxu0 %v3507
        %v3824 = vpop.f32.mrb[0].mxu0
        %v3825 = vadd.f32 %v3580, %v3824
        %v3826 = vpop.f32.mrb[0].mxu0
        %v3827 = vpop.f32.mrb[0].mxu0
        %v3828 = vadd.f32 %v3580, %v3827
        %v3829 = vpop.f32.mrb[0].mxu0
        %3830 = vdwg.mxu0
        %3831 = vmatprep.subr.bf16.mxu0 0
        %3832 = vmatpush1.bf16.msra.mxu0 %v3726
        %3833 = vmatprep.subr.bf16.mxu0 0
        %3834 = vmatpush1.bf16.msra.mxu0 %v3727
        %3835 = vmatprep.subr.bf16.mxu0 0
        %3836 = vmatpush1.bf16.msra.mxu0 %v3728
        %3837 = vmatprep.subr.bf16.mxu0 0
        %3838 = vmatpush1.bf16.msra.mxu0 %v3729
        %3839 = vmatprep.subr.bf16.mxu0 0
        %3840 = vmatpush1.bf16.msra.mxu0 %v3730
        %3841 = vmatprep.subr.bf16.mxu0 0
        %3842 = vmatpush1.bf16.msra.mxu0 %v3731
        %3843 = vmatprep.subr.bf16.mxu0 0
        %3844 = vmatpush1.bf16.msra.mxu0 %v3732
        %3845 = vmatprep.subr.bf16.mxu0 0
        %3846 = vmatpush1.bf16.msra.mxu0 %v3733
        %3847 = vmatprep.subr.bf16.mxu0 0
        %3848 = vmatpush1.bf16.msra.mxu0 %v3734
        %3849 = vmatprep.subr.bf16.mxu0 0
        %3850 = vmatpush1.bf16.msra.mxu0 %v3735
        %3851 = vmatprep.subr.bf16.mxu0 0
        %3852 = vmatpush1.bf16.msra.mxu0 %v3736
        %3853 = vmatprep.subr.bf16.mxu0 0
        %3854 = vmatpush1.bf16.msra.mxu0 %v3737
        %3855 = vmatprep.subr.bf16.mxu0 0
        %3856 = vmatpush1.bf16.msra.mxu0 %v3738
        %3857 = vmatprep.subr.bf16.mxu0 0
        %3858 = vmatpush1.bf16.msra.mxu0 %v3739
        %3859 = vmatprep.subr.bf16.mxu0 0
        %3860 = vmatpush1.bf16.msra.mxu0 %v3740
        %3861 = vmatprep.subr.bf16.mxu0 0
        %3862 = vmatpush1.bf16.msra.mxu0 %v3741
        %3863 = vmatprep.mubr.bf16.mxu0 %v3502
        %3864 = vmatmul.mubr.bf16.gmra.mrb[0].mxu0 %v3501
        %v3865 = vpop.f32.mrb[0].mxu0
        %v3866 = vadd.f32 %v3809, %v3865
        %v3867 = vpop.f32.mrb[0].mxu0
        %v3868 = vpop.f32.mrb[0].mxu0
        %v3869 = vadd.f32 %v3812, %v3868
        %v3870 = vpop.f32.mrb[0].mxu0
        %3871 = vmatprep.mubr.bf16.mxu0 %v3506
        %3872 = vmatmul.mubr.bf16.gmra.mrb[0].mxu0 %v3505
        %v3873 = vpop.f32.mrb[0].mxu0
        %v3874 = vadd.f32 %v3817, %v3873
        %v3875 = vpop.f32.mrb[0].mxu0
        %v3876 = vpop.f32.mrb[0].mxu0
        %v3877 = vadd.f32 %v3820, %v3876
        %v3878 = vpop.f32.mrb[0].mxu0
        %3879 = vmatprep.mubr.bf16.mxu0 %v3510
        %3880 = vmatmul.mubr.bf16.gmra.mrb[0].mxu0 %v3509
        %v3881 = vpop.f32.mrb[0].mxu0
        %v3882 = vadd.f32 %v3825, %v3881
        %v3883 = vpop.f32.mrb[0].mxu0
        %v3884 = vpop.f32.mrb[0].mxu0
        %v3885 = vadd.f32 %v3828, %v3884
        %v3886 = vpop.f32.mrb[0].mxu0
        %3887 = vdwg.mxu0
        %v3888 = vadd.f32 %v2842, %v3866
        %v3889 = vadd.f32 %v2843, %v3869
        %v3890 = vadd.f32 %v2844, %v3874
        %v3891 = vadd.f32 %v2845, %v3877
        %v3892 = vadd.f32 %v2846, %v3882
        %v3893 = vadd.f32 %v2847, %v3885
        %3894 = vst [vmem:[#allocation2] sm:$0xff] %v3888
        %3895 = vst [vmem:[#allocation2 + $0x8] sm:$0xff] %v3889
        %3896 = vst [vmem:[#allocation2 + $0x10] sm:$0xff] %v3890
        %3897 = vst [vmem:[#allocation2 + $0x18] sm:$0xff] %v3891
        %3898 = vst [vmem:[#allocation2 + $0x20] sm:$0xff] %v3892
        %3899 = vst [vmem:[#allocation2 + $0x28] sm:$0xff] %v3893
        %p3900 = scmp.eq.s32.totalorder %s32, 11
        // Predicated region
        $region97: #{forward_rgb_features.3} parent=79 // pred_check
          %p3901 = pneg %p3900
        $region98: #{forward_rgb_features.3} parent=79 // pred_check_branch
          %3903 = sbr.rel (%p3901) target = $region100
        $region99: #{forward_rgb_features.3} parent=79 // pred_region
          %v3904 = vld [vmem:[%s13] sm:$0x1]
          %v3905 = vld [vmem:[%s14] sm:$0x1]
          %3906 = vadd.xlane.f32.xlu0 %v3888
          %v3907 = vpop.xlane.xlu0 %3906
          %3908 = vadd.xlane.f32.xlu0 %v3889
          %v3909 = vpop.xlane.xlu0 %3908
          %3910 = vadd.xlane.f32.xlu0 %v3890
          %v3911 = vpop.xlane.xlu0 %3910
          %3912 = vadd.xlane.f32.xlu0 %v3891
          %v3913 = vpop.xlane.xlu0 %3912
          %3914 = vadd.xlane.f32.xlu0 %v3892
          %v3915 = vpop.xlane.xlu0 %3914
          %3916 = vadd.xlane.f32.xlu0 %v3893
          %v3917 = vpop.xlane.xlu0 %3916
          %v3918 = vmul.f32 %v3907, %v752
          %v3919 = vmul.f32 %v3909, %v752
          %v3920 = vmul.f32 %v3911, %v752
          %v3921 = vmul.f32 %v3913, %v752
          %v3922 = vmul.f32 %v3915, %v752
          %v3923 = vmul.f32 %v3917, %v752
          %v3924 = vsub.f32 %v3888, %v3918
          %v3925 = vsub.f32 %v3889, %v3919
          %v3926 = vsub.f32 %v3890, %v3920
          %v3927 = vsub.f32 %v3891, %v3921
          %v3928 = vsub.f32 %v3892, %v3922
          %v3929 = vsub.f32 %v3893, %v3923
          %v3930 = vmul.f32 %v3924, %v3924
          %v3931 = vmul.f32 %v3925, %v3925
          %v3932 = vmul.f32 %v3926, %v3926
          %v3933 = vmul.f32 %v3927, %v3927
          %v3934 = vmul.f32 %v3928, %v3928
          %v3935 = vmul.f32 %v3929, %v3929
          %3936 = vadd.xlane.f32.xlu0 %v3930
          %v3937 = vpop.xlane.xlu0 %3936
          %3938 = vadd.xlane.f32.xlu0 %v3931
          %v3939 = vpop.xlane.xlu0 %3938
          %3940 = vadd.xlane.f32.xlu0 %v3932
          %v3941 = vpop.xlane.xlu0 %3940
          %3942 = vadd.xlane.f32.xlu0 %v3933
          %v3943 = vpop.xlane.xlu0 %3942
          %3944 = vadd.xlane.f32.xlu0 %v3934
          %v3945 = vpop.xlane.xlu0 %3944
          %3946 = vadd.xlane.f32.xlu0 %v3935
          %v3947 = vpop.xlane.xlu0 %3946
          %v3948 = vmul.f32 %v3937, %v752
          %v3949 = vmul.f32 %v3939, %v752
          %v3950 = vmul.f32 %v3941, %v752
          %v3951 = vmul.f32 %v3943, %v752
          %v3952 = vmul.f32 %v3945, %v752
          %v3953 = vmul.f32 %v3947, %v752
          %v3954 = vadd.f32 %v3948, 1e-06
          %v3955 = vadd.f32 %v3949, 1e-06
          %v3956 = vadd.f32 %v3950, 1e-06
          %v3957 = vadd.f32 %v3951, 1e-06
          %v3958 = vadd.f32 %v3952, 1e-06
          %v3959 = vadd.f32 %v3953, 1e-06
          %v3960 = vrsqrt.pop %v3954
          %v3961 = vrsqrt.pop %v3955
          %v3962 = vrsqrt.pop %v3956
          %v3963 = vrsqrt.pop %v3957
          %v3964 = vrsqrt.pop %v3958
          %v3965 = vrsqrt.pop %v3959
          %v3966 = vmul.f32 %v3924, %v3960
          %v3967 = vmul.f32 %v3925, %v3961
          %v3968 = vmul.f32 %v3926, %v3962
          %v3969 = vmul.f32 %v3927, %v3963
          %v3970 = vmul.f32 %v3928, %v3964
          %v3971 = vmul.f32 %v3929, %v3965
          %v3973 = vlaneseq
          %v3974 = vshrl.u32 %v3973, 7
          %v3975 = vsub.s32 0, %v3974
          %v3976 = vrot.slane %v3904, %v3975
          %v3978 = vmul.f32 %v3966, %v3976
          %v3979 = vmul.f32 %v3967, %v3976
          %v3980 = vmul.f32 %v3968, %v3976
          %v3981 = vmul.f32 %v3969, %v3976
          %v3982 = vmul.f32 %v3970, %v3976
          %v3983 = vmul.f32 %v3971, %v3976
          %v3985 = vlaneseq
          %v3986 = vshrl.u32 %v3985, 7
          %v3987 = vsub.s32 0, %v3986
          %v3988 = vrot.slane %v3905, %v3987
          %v3990 = vadd.f32 %v3978, %v3988
          %v3991 = vadd.f32 %v3979, %v3988
          %v3992 = vadd.f32 %v3980, %v3988
          %v3993 = vadd.f32 %v3981, %v3988
          %v3994 = vadd.f32 %v3982, %v3988
          %v3995 = vadd.f32 %v3983, %v3988
          %3996 = vst [vmem:[%s15] sm:$0xff] %v3990
          %3997 = vst [vmem:[%s15 + $0x8] sm:$0xff] %v3991
          %3998 = vst [vmem:[%s15 + $0x10] sm:$0xff] %v3992
          %3999 = vst [vmem:[%s15 + $0x18] sm:$0xff] %v3993
          %4000 = vst [vmem:[%s15 + $0x20] sm:$0xff] %v3994
          %4001 = vst [vmem:[%s15 + $0x28] sm:$0xff] %v3995
        $region100: #{forward_rgb_features.3} parent=79 // pred_fallthru
          _
        // Predicated region
        $region101: #{forward_rgb_features.3} parent=79 // pred_check
          %p4002 = pneg %p420
        $region102: #{forward_rgb_features.3} parent=79 // pred_check_branch
          %4004 = sbr.rel (%p4002) target = $region104
        $region103: #{forward_rgb_features.3} parent=79 // pred_region
          _
        $region104: #{forward_rgb_features.3} parent=79 // pred_fallthru
          _
        // Predicated region
        $region105: #{forward_rgb_features.3} parent=79 // pred_check
          %p4005 = pneg %p420
        $region106: #{forward_rgb_features.3} parent=79 // pred_check_branch
          %4007 = sbr.rel (%p4005) target = $region108
        $region107: #{forward_rgb_features.3} parent=79 // pred_region
          _
        $region108: #{forward_rgb_features.3} parent=79 // pred_fallthru
          _
      $region80: #{forward_rgb_features.3} parent=5 // pred_fallthru
        _
      %p4008 = scmp.le.s32.totalorder 2, %s27
      // Predicated region
      $region109: #{forward_rgb_features.3} parent=5 // pred_check
        %p4009 = pneg %p4008
      $region110: #{forward_rgb_features.3} parent=5 // pred_check_branch
        %4011 = sbr.rel (%p4009) target = $region112
      $region111: #{forward_rgb_features.3} parent=5 // pred_region
        %s4012 = ssub.s32 %s27, 2
      $region112: #{forward_rgb_features.3} parent=5 // pred_fallthru
        _
    $region6: #{forward_rgb_features.3} parent=1 // loop_footer
      %s31 = sadd.s32 1, %s27
    $region7: #{forward_rgb_features.3} parent=1 // loop_footer_branch
      %26 = sbr.rel target = $region3
    $region8: #{forward_rgb_features.3} parent=1 // loop_exit
      _
    %4013 = vsyncpa [#allocation6], 1
    %s4014 = scalar_lea.sflag [#allocation6], 1
    %4015 = vsyncpa %s4014, 1
    %4016 = vsyncpa [#allocation8], 1
    %s4017 = scalar_lea.sflag [#allocation8], 1
    %4018 = vsyncpa %s4017, 1

</llo_original>
